<compile_context>
chip_gen: v7x
topology: tpu7x:2x2x1
jax: 0.10.0
libtpu: 0.0.40
codegen_flags: <defaults>
</compile_context>

<pallas_src>
import functools
import math

import jax
import jax.numpy as jnp
from jax.experimental import pallas as pl
from jax.experimental.pallas import tpu as pltpu


def _round_up(v, m):
    return ((v + m - 1) // m) * m


def mlp_kernel(x_ref,
               w1_ref, b1_ref,
               w2_ref, b2_ref,
               w3_ref, b3_ref,
               w4_ref, b4_ref,
               o_ref,
               *, act_dtype, gelu_exact):
    """4 matmuls + bias + GELU.  MXU operands bf16, accumulation f32, elementwise
    epilogue in `act_dtype` (bf16 on v6e/v7x, f32 on v5e)."""

    def lin(h_bf16, w_ref, b_ref):
        acc = jnp.dot(h_bf16, w_ref[...], preferred_element_type=jnp.float32)
        return acc + b_ref[...]                      # bias is f32, broadcast over rows

    def act(z_f32):
        if gelu_exact:
            # PyTorch nn.GELU() default (erf form); keep in f32 on the VPU.
            g = 0.5 * z_f32 * (1.0 + jax.lax.erf(z_f32 * jnp.float32(1.0 / math.sqrt(2.0))))
            return g.astype(jnp.bfloat16)
        # tanh approximation: transcendental goes to the EUP slot, few VALU ops remain.
        z = z_f32.astype(act_dtype)
        c0 = jnp.array(0.7978845608028654, act_dtype)   # sqrt(2/pi)
        c1 = jnp.array(0.044715, act_dtype)
        g = 0.5 * z * (1.0 + jnp.tanh(c0 * (z + c1 * z * z * z)))
        return g.astype(jnp.bfloat16)

    x = x_ref[...].astype(jnp.bfloat16)   # cast in-kernel; hidden under the matmuls
    h = act(lin(x, w1_ref, b1_ref))
    h = act(lin(h, w2_ref, b2_ref))
    h = act(lin(h, w3_ref, b3_ref))
    out = lin(h, w4_ref, b4_ref)
    o_ref[...] = out.astype(o_ref.dtype)  # bf16 store: lane-dense, half the write traffic


def _device_kind():
    try:
        return jax.devices()[0].device_kind.lower()
    except Exception:
        return ""


def _num_tensorcores():
    kind = _device_kind()
    # v7x (2 TC/chip) and v4/v5p megacore devices expose 2 TensorCores per device.
    if "7" in kind or "v4" in kind or "v5p" in kind:
        return 2
    return 1


def _bf16_epilogue_ok():
    kind = _device_kind()
    # v5e and older have no bf16 VPU/EUP -- keep the elementwise epilogue in f32 there.
    return not any(tag in kind for tag in ("v2", "v3", "v4", "v5"))


def mlp_classifier_forward(x, params, *, tile_b=None, gelu_exact=False):
    """x: [N, input_dim] float32.  Returns logits [N, 14] (float32)."""
    N, D = x.shape
    H = params["w1"].shape[1]
    C = params["w4"].shape[1]
    eps = jnp.float32(1e-5)

    # ---- Fold BatchNorm1d (inference) into the preceding Linear: w' = w*s, b' = b*s + t.
    def fold_bn(w, b, prefix):
        gamma = params[f"{prefix}_gamma"]
        beta = params[f"{prefix}_beta"]
        mean = params[f"{prefix}_mean"]
        var = params[f"{prefix}_var"]
        scale = gamma * jax.lax.rsqrt(var + eps)
        return w * scale[None, :], b * scale + (beta - mean * scale)

    w1, b1 = fold_bn(params["w1"], params["b1"], "bn1")
    w2, b2 = fold_bn(params["w2"], params["b2"], "bn2")
    w3, b3 = fold_bn(params["w3"], params["b3"], "bn3")
    w4, b4 = params["w4"], params["b4"]

    # Hidden/class dims padded to lane width (zeros are exact: GELU(0)=0 and zero weight
    # rows/cols contribute nothing).  D (first matmul's K) stays unpadded.
    Hp, Cp = _round_up(H, 128), _round_up(C, 128)

    # tile_b: one fat grid step per TensorCore, multiple of 16, capped at 512.
    if tile_b is None:
        per_core = pl.cdiv(N, _num_tensorcores())
        tile_b = min(_round_up(per_core, 16), 512)
    else:
        tile_b = min(_round_up(max(int(tile_b), 16), 16), _round_up(N, 16))
    Np = _round_up(N, tile_b)

    def pad2(a, rows, cols):
        return jnp.pad(a, ((0, rows - a.shape[0]), (0, cols - a.shape[1])))

    # x stays f32; only row-padded if the batch is not tile-aligned (no copy in the demo).
    xp = x if Np == N else jnp.pad(x, ((0, Np - N), (0, 0)))

    w1p = pad2(w1, D, Hp).astype(jnp.bfloat16)
    w2p = pad2(w2, Hp, Hp).astype(jnp.bfloat16)
    w3p = pad2(w3, Hp, Hp).astype(jnp.bfloat16)
    w4p = pad2(w4, Hp, Cp).astype(jnp.bfloat16)
    b1p = pad2(b1.reshape(1, -1), 1, Hp).astype(jnp.float32)
    b2p = pad2(b2.reshape(1, -1), 1, Hp).astype(jnp.float32)
    b3p = pad2(b3.reshape(1, -1), 1, Hp).astype(jnp.float32)
    b4p = pad2(b4.reshape(1, -1), 1, Cp).astype(jnp.float32)
    consts = (w1p, b1p, w2p, b2p, w3p, b3p, w4p, b4p)

    act_dtype = jnp.bfloat16 if (_bf16_epilogue_ok() and not gelu_exact) else jnp.float32

    grid = (Np // tile_b,)
    flops = 2 * Np * (D * Hp + 2 * Hp * Hp + Hp * Cp)
    transcendentals = 3 * Np * Hp               # one tanh (or erf) per hidden activation
    bytes_accessed = (Np * D * 4
                      + sum(int(a.size) * a.dtype.itemsize for a in consts)
                      + Np * Cp * 2)

    def build(buffered_weights):
        in_specs = [pl.BlockSpec((tile_b, D), lambda i: (i, 0))]
        for a in consts:
            if buffered_weights:
                # Constant-index blocks: single buffer -> weight VMEM does not double.
                in_specs.append(pl.BlockSpec(a.shape, lambda i: (0, 0),
                                             pipeline_mode=pl.Buffered(1)))
            else:
                in_specs.append(pl.BlockSpec(a.shape, lambda i: (0, 0)))
        out_spec = pl.BlockSpec((tile_b, Cp), lambda i: (i, 0))

        const_bytes = sum(int(a.size) * a.dtype.itemsize for a in consts)
        resident = (const_bytes * (1 if buffered_weights else 2)
                    + 2 * tile_b * (D * 4 + Cp * 2)   # double-buffered x / out tiles
                    + 4 * tile_b * Hp * 4)            # headroom for f32 intermediates
        vmem_limit = int(min(64 * 2**20, max(32 * 2**20, 2 * resident)))

        return pl.pallas_call(
            functools.partial(mlp_kernel, act_dtype=act_dtype, gelu_exact=gelu_exact),
            out_shape=jax.ShapeDtypeStruct((Np, Cp), jnp.bfloat16),
            grid_spec=pltpu.PrefetchScalarGridSpec(
                num_scalar_prefetch=0,
                grid=grid,
                in_specs=in_specs,
                out_specs=out_spec,
            ),
            compiler_params=pltpu.CompilerParams(
                dimension_semantics=("parallel",),
                vmem_limit_bytes=vmem_limit),
            cost_estimate=pl.CostEstimate(
                flops=flops,
                transcendentals=transcendentals,
                bytes_accessed=bytes_accessed),
        )(xp, *consts)

    try:
        out = build(buffered_weights=True)
    except Exception:
        # Fall back to default double-buffered weight blocks if Buffered(1) is rejected.
        out = build(buffered_weights=False)

    return out[:N, :C].astype(jnp.float32)


def init_params(key, input_dim, hidden_dim, num_classes=14):
    """Deterministic init matching the PyTorch module's init_weights()."""
    def kaiming_uniform(k, fan_in, fan_out):
        # torch kaiming_uniform_(a=0): bound = sqrt(2) * sqrt(3 / fan_in)
        bound = math.sqrt(6.0 / fan_in)
        # stored as [in, out] (transposed vs. torch's [out, in])
        return jax.random.uniform(k, (fan_in, fan_out), jnp.float32,
                                  minval=-bound, maxval=bound)

    keys = jax.random.split(key, 4)
    dims = [(input_dim, hidden_dim), (hidden_dim, hidden_dim),
            (hidden_dim, hidden_dim), (hidden_dim, num_classes)]
    params = {}
    for idx, (k, (fi, fo)) in enumerate(zip(keys, dims), start=1):
        params[f"w{idx}"] = kaiming_uniform(k, fi, fo)
        params[f"b{idx}"] = jnp.zeros((fo,), jnp.float32)
    for idx in (1, 2, 3):
        params[f"bn{idx}_gamma"] = jnp.ones((hidden_dim,), jnp.float32)
        params[f"bn{idx}_beta"] = jnp.zeros((hidden_dim,), jnp.float32)
        params[f"bn{idx}_mean"] = jnp.zeros((hidden_dim,), jnp.float32)
        params[f"bn{idx}_var"] = jnp.ones((hidden_dim,), jnp.float32)
    return params


def reference_forward(x, params):
    """Pure-JAX f32 reference (PyTorch inference semantics, exact-erf GELU)."""
    eps = 1e-5
    h = x
    for idx in (1, 2, 3):
        h = h @ params[f"w{idx}"] + params[f"b{idx}"]
        scale = params[f"bn{idx}_gamma"] / jnp.sqrt(params[f"bn{idx}_var"] + eps)
        h = (h - params[f"bn{idx}_mean"]) * scale + params[f"bn{idx}_beta"]
        h = 0.5 * h * (1.0 + jax.lax.erf(h / jnp.sqrt(2.0)))
    return h @ params["w4"] + params["b4"]


if __name__ == "__main__":
    key = jax.random.PRNGKey(0)
    k_x, k_p = jax.random.split(key)

    # Small but tiling-meaningful shapes.
    N, INPUT_DIM, HIDDEN_DIM, NUM_CLASSES = 256, 64, 256, 14
    x = jax.random.normal(k_x, (N, INPUT_DIM), jnp.float32)
    params = init_params(k_p, INPUT_DIM, HIDDEN_DIM, NUM_CLASSES)

    # tile_b auto-picked: grid=1 on single-TC chips (v5e/v6e), grid=2 on v7x.
    out = mlp_classifier_forward(x, params)
    out = jax.block_until_ready(out)

    ref = reference_forward(x, params)
    assert out.shape == (N, NUM_CLASSES)

    # bf16 MXU operands + bf16 inter-layer activations + tanh GELU -> relaxed,
    # norm-based tolerance vs. the f32 erf reference.
    rel_err = jnp.linalg.norm(out - ref) / (jnp.linalg.norm(ref) + 1e-12)
    max_abs = jnp.max(jnp.abs(out - ref))
    assert rel_err < 5e-2, f"mismatch vs reference: rel={rel_err} max_abs={max_abs}"

    print("KERNEL_OK")
</pallas_src>

<mosaic_0001>
module attributes {stable_mosaic.version = 11 : i64} {
  func.func @mlp_kernel(%arg0: i32, %arg1: memref<256x64xf32, #tpu.memory_space<vmem>>, %arg2: memref<64x256xbf16, #tpu.memory_space<vmem>>, %arg3: memref<1x256xf32, #tpu.memory_space<vmem>>, %arg4: memref<256x256xbf16, #tpu.memory_space<vmem>>, %arg5: memref<1x256xf32, #tpu.memory_space<vmem>>, %arg6: memref<256x256xbf16, #tpu.memory_space<vmem>>, %arg7: memref<1x256xf32, #tpu.memory_space<vmem>>, %arg8: memref<256x128xbf16, #tpu.memory_space<vmem>>, %arg9: memref<1x128xf32, #tpu.memory_space<vmem>>, %arg10: memref<256x128xbf16, #tpu.memory_space<vmem>>) attributes {dimension_semantics = [#tpu.dimension_semantics<parallel>], iteration_bounds = array<i64: 1>, scalar_prefetch = 0 : i64, scratch_operands = 0 : i64, tpu.core_type = #tpu.core_type<tc>, window_params = [{transform_indices = @transform_0, window_bounds = array<i64: 256, 64>}, {pipeline_mode = #tpu.pipeline_mode<synchronous>, transform_indices = @transform_1, window_bounds = array<i64: 64, 256>}, {pipeline_mode = #tpu.pipeline_mode<synchronous>, transform_indices = @transform_2, window_bounds = array<i64: 1, 256>}, {pipeline_mode = #tpu.pipeline_mode<synchronous>, transform_indices = @transform_3, window_bounds = array<i64: 256, 256>}, {pipeline_mode = #tpu.pipeline_mode<synchronous>, transform_indices = @transform_4, window_bounds = array<i64: 1, 256>}, {pipeline_mode = #tpu.pipeline_mode<synchronous>, transform_indices = @transform_5, window_bounds = array<i64: 256, 256>}, {pipeline_mode = #tpu.pipeline_mode<synchronous>, transform_indices = @transform_6, window_bounds = array<i64: 1, 256>}, {pipeline_mode = #tpu.pipeline_mode<synchronous>, transform_indices = @transform_7, window_bounds = array<i64: 256, 128>}, {pipeline_mode = #tpu.pipeline_mode<synchronous>, transform_indices = @transform_8, window_bounds = array<i64: 1, 128>}, {transform_indices = @transform_9, window_bounds = array<i64: 256, 128>}]} {
    %c0 = arith.constant 0 : index
    %c0_0 = arith.constant 0 : index
    %0 = vector.load %arg1[%c0, %c0_0] : memref<256x64xf32, #tpu.memory_space<vmem>>, vector<256x64xf32>
    %1 = arith.truncf %0 : vector<256x64xf32> to vector<256x64xbf16>
    %c0_1 = arith.constant 0 : index
    %c0_2 = arith.constant 0 : index
    %2 = vector.load %arg2[%c0_1, %c0_2] : memref<64x256xbf16, #tpu.memory_space<vmem>>, vector<64x256xbf16>
    %cst = arith.constant dense<0.000000e+00> : vector<256x256xf32>
    %3 = tpu.matmul %1, %2, %cst {dimension_numbers = #tpu.dot_dimension_numbers<[1], [0], [0], [1], [0, 0, 1, 1], [], []>} : vector<256x64xbf16>, vector<64x256xbf16>, vector<256x256xf32> -> vector<256x256xf32>
    %c0_3 = arith.constant 0 : index
    %c0_4 = arith.constant 0 : index
    %4 = vector.load %arg3[%c0_3, %c0_4] : memref<1x256xf32, #tpu.memory_space<vmem>>, vector<1x256xf32>
    %5 = vector.broadcast %4 : vector<1x256xf32> to vector<256x256xf32>
    %6 = arith.addf %3, %5 : vector<256x256xf32>
    %7 = arith.truncf %6 : vector<256x256xf32> to vector<256x256xbf16>
    %cst_5 = arith.constant 5.000000e-01 : bf16
    %8 = vector.broadcast %cst_5 : bf16 to vector<256x256xbf16>
    %9 = arith.mulf %8, %7 : vector<256x256xbf16>
    %cst_6 = arith.constant 4.467770e-02 : bf16
    %10 = vector.broadcast %cst_6 : bf16 to vector<256x256xbf16>
    %11 = arith.mulf %10, %7 : vector<256x256xbf16>
    %12 = arith.mulf %11, %7 : vector<256x256xbf16>
    %13 = arith.mulf %12, %7 : vector<256x256xbf16>
    %14 = arith.addf %7, %13 : vector<256x256xbf16>
    %cst_7 = arith.constant 7.968750e-01 : bf16
    %15 = vector.broadcast %cst_7 : bf16 to vector<256x256xbf16>
    %16 = arith.mulf %15, %14 : vector<256x256xbf16>
    %17 = math.tanh %16 : vector<256x256xbf16>
    %cst_8 = arith.constant 1.000000e+00 : bf16
    %18 = vector.broadcast %cst_8 : bf16 to vector<256x256xbf16>
    %19 = arith.addf %18, %17 : vector<256x256xbf16>
    %20 = arith.mulf %9, %19 : vector<256x256xbf16>
    %c0_9 = arith.constant 0 : index
    %c0_10 = arith.constant 0 : index
    %21 = vector.load %arg4[%c0_9, %c0_10] : memref<256x256xbf16, #tpu.memory_space<vmem>>, vector<256x256xbf16>
    %cst_11 = arith.constant dense<0.000000e+00> : vector<256x256xf32>
    %22 = tpu.matmul %20, %21, %cst_11 {dimension_numbers = #tpu.dot_dimension_numbers<[1], [0], [0], [1], [0, 0, 1, 1], [], []>} : vector<256x256xbf16>, vector<256x256xbf16>, vector<256x256xf32> -> vector<256x256xf32>
    %c0_12 = arith.constant 0 : index
    %c0_13 = arith.constant 0 : index
    %23 = vector.load %arg5[%c0_12, %c0_13] : memref<1x256xf32, #tpu.memory_space<vmem>>, vector<1x256xf32>
    %24 = vector.broadcast %23 : vector<1x256xf32> to vector<256x256xf32>
    %25 = arith.addf %22, %24 : vector<256x256xf32>
    %26 = arith.truncf %25 : vector<256x256xf32> to vector<256x256xbf16>
    %cst_14 = arith.constant 5.000000e-01 : bf16
    %27 = vector.broadcast %cst_14 : bf16 to vector<256x256xbf16>
    %28 = arith.mulf %27, %26 : vector<256x256xbf16>
    %cst_15 = arith.constant 4.467770e-02 : bf16
    %29 = vector.broadcast %cst_15 : bf16 to vector<256x256xbf16>
    %30 = arith.mulf %29, %26 : vector<256x256xbf16>
    %31 = arith.mulf %30, %26 : vector<256x256xbf16>
    %32 = arith.mulf %31, %26 : vector<256x256xbf16>
    %33 = arith.addf %26, %32 : vector<256x256xbf16>
    %cst_16 = arith.constant 7.968750e-01 : bf16
    %34 = vector.broadcast %cst_16 : bf16 to vector<256x256xbf16>
    %35 = arith.mulf %34, %33 : vector<256x256xbf16>
    %36 = math.tanh %35 : vector<256x256xbf16>
    %cst_17 = arith.constant 1.000000e+00 : bf16
    %37 = vector.broadcast %cst_17 : bf16 to vector<256x256xbf16>
    %38 = arith.addf %37, %36 : vector<256x256xbf16>
    %39 = arith.mulf %28, %38 : vector<256x256xbf16>
    %c0_18 = arith.constant 0 : index
    %c0_19 = arith.constant 0 : index
    %40 = vector.load %arg6[%c0_18, %c0_19] : memref<256x256xbf16, #tpu.memory_space<vmem>>, vector<256x256xbf16>
    %cst_20 = arith.constant dense<0.000000e+00> : vector<256x256xf32>
    %41 = tpu.matmul %39, %40, %cst_20 {dimension_numbers = #tpu.dot_dimension_numbers<[1], [0], [0], [1], [0, 0, 1, 1], [], []>} : vector<256x256xbf16>, vector<256x256xbf16>, vector<256x256xf32> -> vector<256x256xf32>
    %c0_21 = arith.constant 0 : index
    %c0_22 = arith.constant 0 : index
    %42 = vector.load %arg7[%c0_21, %c0_22] : memref<1x256xf32, #tpu.memory_space<vmem>>, vector<1x256xf32>
    %43 = vector.broadcast %42 : vector<1x256xf32> to vector<256x256xf32>
    %44 = arith.addf %41, %43 : vector<256x256xf32>
    %45 = arith.truncf %44 : vector<256x256xf32> to vector<256x256xbf16>
    %cst_23 = arith.constant 5.000000e-01 : bf16
    %46 = vector.broadcast %cst_23 : bf16 to vector<256x256xbf16>
    %47 = arith.mulf %46, %45 : vector<256x256xbf16>
    %cst_24 = arith.constant 4.467770e-02 : bf16
    %48 = vector.broadcast %cst_24 : bf16 to vector<256x256xbf16>
    %49 = arith.mulf %48, %45 : vector<256x256xbf16>
    %50 = arith.mulf %49, %45 : vector<256x256xbf16>
    %51 = arith.mulf %50, %45 : vector<256x256xbf16>
    %52 = arith.addf %45, %51 : vector<256x256xbf16>
    %cst_25 = arith.constant 7.968750e-01 : bf16
    %53 = vector.broadcast %cst_25 : bf16 to vector<256x256xbf16>
    %54 = arith.mulf %53, %52 : vector<256x256xbf16>
    %55 = math.tanh %54 : vector<256x256xbf16>
    %cst_26 = arith.constant 1.000000e+00 : bf16
    %56 = vector.broadcast %cst_26 : bf16 to vector<256x256xbf16>
    %57 = arith.addf %56, %55 : vector<256x256xbf16>
    %58 = arith.mulf %47, %57 : vector<256x256xbf16>
    %c0_27 = arith.constant 0 : index
    %c0_28 = arith.constant 0 : index
    %59 = vector.load %arg8[%c0_27, %c0_28] : memref<256x128xbf16, #tpu.memory_space<vmem>>, vector<256x128xbf16>
    %cst_29 = arith.constant dense<0.000000e+00> : vector<256x128xf32>
    %60 = tpu.matmul %58, %59, %cst_29 {dimension_numbers = #tpu.dot_dimension_numbers<[1], [0], [0], [1], [0, 0, 1, 1], [], []>} : vector<256x256xbf16>, vector<256x128xbf16>, vector<256x128xf32> -> vector<256x128xf32>
    %c0_30 = arith.constant 0 : index
    %c0_31 = arith.constant 0 : index
    %61 = vector.load %arg9[%c0_30, %c0_31] : memref<1x128xf32, #tpu.memory_space<vmem>>, vector<1x128xf32>
    %62 = vector.broadcast %61 : vector<1x128xf32> to vector<256x128xf32>
    %63 = arith.addf %60, %62 : vector<256x128xf32>
    %64 = arith.truncf %63 : vector<256x128xf32> to vector<256x128xbf16>
    %c0_32 = arith.constant 0 : index
    %c0_33 = arith.constant 0 : index
    %65 = vector.load %arg10[%c0_32, %c0_33] : memref<256x128xbf16, #tpu.memory_space<vmem>>, vector<256x128xbf16>
    tpu.vector_store %arg10[%c0_32, %c0_33], %64 {strides = array<i32>} : memref<256x128xbf16, #tpu.memory_space<vmem>>, vector<256x128xbf16>,
    return
  }
  func.func @transform_0(%arg0: i32) -> (i32, i32) {
    %c0_i32 = arith.constant 0 : i32
    %c0_i32_0 = arith.constant 0 : i32
    return %arg0, %c0_i32 : i32, i32
  }
  func.func @transform_1(%arg0: i32) -> (i32, i32) {
    %c0_i32 = arith.constant 0 : i32
    %c0_i32_0 = arith.constant 0 : i32
    %c0_i32_1 = arith.constant 0 : i32
    return %c0_i32, %c0_i32_0 : i32, i32
  }
  func.func @transform_2(%arg0: i32) -> (i32, i32) {
    %c0_i32 = arith.constant 0 : i32
    %c0_i32_0 = arith.constant 0 : i32
    %c0_i32_1 = arith.constant 0 : i32
    return %c0_i32, %c0_i32_0 : i32, i32
  }
  func.func @transform_3(%arg0: i32) -> (i32, i32) {
    %c0_i32 = arith.constant 0 : i32
    %c0_i32_0 = arith.constant 0 : i32
    %c0_i32_1 = arith.constant 0 : i32
    return %c0_i32, %c0_i32_0 : i32, i32
  }
  func.func @transform_4(%arg0: i32) -> (i32, i32) {
    %c0_i32 = arith.constant 0 : i32
    %c0_i32_0 = arith.constant 0 : i32
    %c0_i32_1 = arith.constant 0 : i32
    return %c0_i32, %c0_i32_0 : i32, i32
  }
  func.func @transform_5(%arg0: i32) -> (i32, i32) {
    %c0_i32 = arith.constant 0 : i32
    %c0_i32_0 = arith.constant 0 : i32
    %c0_i32_1 = arith.constant 0 : i32
    return %c0_i32, %c0_i32_0 : i32, i32
  }
  func.func @transform_6(%arg0: i32) -> (i32, i32) {
    %c0_i32 = arith.constant 0 : i32
    %c0_i32_0 = arith.constant 0 : i32
    %c0_i32_1 = arith.constant 0 : i32
    return %c0_i32, %c0_i32_0 : i32, i32
  }
  func.func @transform_7(%arg0: i32) -> (i32, i32) {
    %c0_i32 = arith.constant 0 : i32
    %c0_i32_0 = arith.constant 0 : i32
    %c0_i32_1 = arith.constant 0 : i32
    return %c0_i32, %c0_i32_0 : i32, i32
  }
  func.func @transform_8(%arg0: i32) -> (i32, i32) {
    %c0_i32 = arith.constant 0 : i32
    %c0_i32_0 = arith.constant 0 : i32
    %c0_i32_1 = arith.constant 0 : i32
    return %c0_i32, %c0_i32_0 : i32, i32
  }
  func.func @transform_9(%arg0: i32) -> (i32, i32) {
    %c0_i32 = arith.constant 0 : i32
    %c0_i32_0 = arith.constant 0 : i32
    return %arg0, %c0_i32 : i32, i32
  }
}

module attributes {stable_mosaic.version = 11 : i64} {
  func.func @mlp_kernel(%arg0: i32, %arg1: memref<256x64xf32, #tpu.memory_space<vmem>>, %arg2: memref<64x256xbf16, #tpu.memory_space<vmem>>, %arg3: memref<1x256xf32, #tpu.memory_space<vmem>>, %arg4: memref<256x256xbf16, #tpu.memory_space<vmem>>, %arg5: memref<1x256xf32, #tpu.memory_space<vmem>>, %arg6: memref<256x256xbf16, #tpu.memory_space<vmem>>, %arg7: memref<1x256xf32, #tpu.memory_space<vmem>>, %arg8: memref<256x128xbf16, #tpu.memory_space<vmem>>, %arg9: memref<1x128xf32, #tpu.memory_space<vmem>>, %arg10: memref<256x128xbf16, #tpu.memory_space<vmem>>) attributes {dimension_semantics = [#tpu.dimension_semantics<parallel>], iteration_bounds = array<i64: 1>, scalar_prefetch = 0 : i64, scratch_operands = 0 : i64, tpu.core_type = #tpu.core_type<tc>, window_params = [{transform_indices = @transform_0, window_bounds = array<i64: 256, 64>}, {pipeline_mode = #tpu.pipeline_mode<synchronous>, transform_indices = @transform_1, window_bounds = array<i64: 64, 256>}, {pipeline_mode = #tpu.pipeline_mode<synchronous>, transform_indices = @transform_2, window_bounds = array<i64: 1, 256>}, {pipeline_mode = #tpu.pipeline_mode<synchronous>, transform_indices = @transform_3, window_bounds = array<i64: 256, 256>}, {pipeline_mode = #tpu.pipeline_mode<synchronous>, transform_indices = @transform_4, window_bounds = array<i64: 1, 256>}, {pipeline_mode = #tpu.pipeline_mode<synchronous>, transform_indices = @transform_5, window_bounds = array<i64: 256, 256>}, {pipeline_mode = #tpu.pipeline_mode<synchronous>, transform_indices = @transform_6, window_bounds = array<i64: 1, 256>}, {pipeline_mode = #tpu.pipeline_mode<synchronous>, transform_indices = @transform_7, window_bounds = array<i64: 256, 128>}, {pipeline_mode = #tpu.pipeline_mode<synchronous>, transform_indices = @transform_8, window_bounds = array<i64: 1, 128>}, {transform_indices = @transform_9, window_bounds = array<i64: 256, 128>}]} {
    %c0 = arith.constant 0 : index
    %c0_0 = arith.constant 0 : index
    %0 = vector.load %arg1[%c0, %c0_0] : memref<256x64xf32, #tpu.memory_space<vmem>>, vector<256x64xf32>
    %1 = arith.truncf %0 : vector<256x64xf32> to vector<256x64xbf16>
    %c0_1 = arith.constant 0 : index
    %c0_2 = arith.constant 0 : index
    %2 = vector.load %arg2[%c0_1, %c0_2] : memref<64x256xbf16, #tpu.memory_space<vmem>>, vector<64x256xbf16>
    %cst = arith.constant dense<0.000000e+00> : vector<256x256xf32>
    %3 = tpu.matmul %1, %2, %cst {dimension_numbers = #tpu.dot_dimension_numbers<[1], [0], [0], [1], [0, 0, 1, 1], [], []>} : vector<256x64xbf16>, vector<64x256xbf16>, vector<256x256xf32> -> vector<256x256xf32>
    %c0_3 = arith.constant 0 : index
    %c0_4 = arith.constant 0 : index
    %4 = vector.load %arg3[%c0_3, %c0_4] : memref<1x256xf32, #tpu.memory_space<vmem>>, vector<1x256xf32>
    %5 = vector.broadcast %4 : vector<1x256xf32> to vector<256x256xf32>
    %6 = arith.addf %3, %5 : vector<256x256xf32>
    %7 = arith.truncf %6 : vector<256x256xf32> to vector<256x256xbf16>
    %cst_5 = arith.constant 5.000000e-01 : bf16
    %8 = vector.broadcast %cst_5 : bf16 to vector<256x256xbf16>
    %9 = arith.mulf %8, %7 : vector<256x256xbf16>
    %cst_6 = arith.constant 4.467770e-02 : bf16
    %10 = vector.broadcast %cst_6 : bf16 to vector<256x256xbf16>
    %11 = arith.mulf %10, %7 : vector<256x256xbf16>
    %12 = arith.mulf %11, %7 : vector<256x256xbf16>
    %13 = arith.mulf %12, %7 : vector<256x256xbf16>
    %14 = arith.addf %7, %13 : vector<256x256xbf16>
    %cst_7 = arith.constant 7.968750e-01 : bf16
    %15 = vector.broadcast %cst_7 : bf16 to vector<256x256xbf16>
    %16 = arith.mulf %15, %14 : vector<256x256xbf16>
    %17 = math.tanh %16 : vector<256x256xbf16>
    %cst_8 = arith.constant 1.000000e+00 : bf16
    %18 = vector.broadcast %cst_8 : bf16 to vector<256x256xbf16>
    %19 = arith.addf %18, %17 : vector<256x256xbf16>
    %20 = arith.mulf %9, %19 : vector<256x256xbf16>
    %c0_9 = arith.constant 0 : index
    %c0_10 = arith.constant 0 : index
    %21 = vector.load %arg4[%c0_9, %c0_10] : memref<256x256xbf16, #tpu.memory_space<vmem>>, vector<256x256xbf16>
    %cst_11 = arith.constant dense<0.000000e+00> : vector<256x256xf32>
    %22 = tpu.matmul %20, %21, %cst_11 {dimension_numbers = #tpu.dot_dimension_numbers<[1], [0], [0], [1], [0, 0, 1, 1], [], []>} : vector<256x256xbf16>, vector<256x256xbf16>, vector<256x256xf32> -> vector<256x256xf32>
    %c0_12 = arith.constant 0 : index
    %c0_13 = arith.constant 0 : index
    %23 = vector.load %arg5[%c0_12, %c0_13] : memref<1x256xf32, #tpu.memory_space<vmem>>, vector<1x256xf32>
    %24 = vector.broadcast %23 : vector<1x256xf32> to vector<256x256xf32>
    %25 = arith.addf %22, %24 : vector<256x256xf32>
    %26 = arith.truncf %25 : vector<256x256xf32> to vector<256x256xbf16>
    %cst_14 = arith.constant 5.000000e-01 : bf16
    %27 = vector.broadcast %cst_14 : bf16 to vector<256x256xbf16>
    %28 = arith.mulf %27, %26 : vector<256x256xbf16>
    %cst_15 = arith.constant 4.467770e-02 : bf16
    %29 = vector.broadcast %cst_15 : bf16 to vector<256x256xbf16>
    %30 = arith.mulf %29, %26 : vector<256x256xbf16>
    %31 = arith.mulf %30, %26 : vector<256x256xbf16>
    %32 = arith.mulf %31, %26 : vector<256x256xbf16>
    %33 = arith.addf %26, %32 : vector<256x256xbf16>
    %cst_16 = arith.constant 7.968750e-01 : bf16
    %34 = vector.broadcast %cst_16 : bf16 to vector<256x256xbf16>
    %35 = arith.mulf %34, %33 : vector<256x256xbf16>
    %36 = math.tanh %35 : vector<256x256xbf16>
    %cst_17 = arith.constant 1.000000e+00 : bf16
    %37 = vector.broadcast %cst_17 : bf16 to vector<256x256xbf16>
    %38 = arith.addf %37, %36 : vector<256x256xbf16>
    %39 = arith.mulf %28, %38 : vector<256x256xbf16>
    %c0_18 = arith.constant 0 : index
    %c0_19 = arith.constant 0 : index
    %40 = vector.load %arg6[%c0_18, %c0_19] : memref<256x256xbf16, #tpu.memory_space<vmem>>, vector<256x256xbf16>
    %cst_20 = arith.constant dense<0.000000e+00> : vector<256x256xf32>
    %41 = tpu.matmul %39, %40, %cst_20 {dimension_numbers = #tpu.dot_dimension_numbers<[1], [0], [0], [1], [0, 0, 1, 1], [], []>} : vector<256x256xbf16>, vector<256x256xbf16>, vector<256x256xf32> -> vector<256x256xf32>
    %c0_21 = arith.constant 0 : index
    %c0_22 = arith.constant 0 : index
    %42 = vector.load %arg7[%c0_21, %c0_22] : memref<1x256xf32, #tpu.memory_space<vmem>>, vector<1x256xf32>
    %43 = vector.broadcast %42 : vector<1x256xf32> to vector<256x256xf32>
    %44 = arith.addf %41, %43 : vector<256x256xf32>
    %45 = arith.truncf %44 : vector<256x256xf32> to vector<256x256xbf16>
    %cst_23 = arith.constant 5.000000e-01 : bf16
    %46 = vector.broadcast %cst_23 : bf16 to vector<256x256xbf16>
    %47 = arith.mulf %46, %45 : vector<256x256xbf16>
    %cst_24 = arith.constant 4.467770e-02 : bf16
    %48 = vector.broadcast %cst_24 : bf16 to vector<256x256xbf16>
    %49 = arith.mulf %48, %45 : vector<256x256xbf16>
    %50 = arith.mulf %49, %45 : vector<256x256xbf16>
    %51 = arith.mulf %50, %45 : vector<256x256xbf16>
    %52 = arith.addf %45, %51 : vector<256x256xbf16>
    %cst_25 = arith.constant 7.968750e-01 : bf16
    %53 = vector.broadcast %cst_25 : bf16 to vector<256x256xbf16>
    %54 = arith.mulf %53, %52 : vector<256x256xbf16>
    %55 = math.tanh %54 : vector<256x256xbf16>
    %cst_26 = arith.constant 1.000000e+00 : bf16
    %56 = vector.broadcast %cst_26 : bf16 to vector<256x256xbf16>
    %57 = arith.addf %56, %55 : vector<256x256xbf16>
    %58 = arith.mulf %47, %57 : vector<256x256xbf16>
    %c0_27 = arith.constant 0 : index
    %c0_28 = arith.constant 0 : index
    %59 = vector.load %arg8[%c0_27, %c0_28] : memref<256x128xbf16, #tpu.memory_space<vmem>>, vector<256x128xbf16>
    %cst_29 = arith.constant dense<0.000000e+00> : vector<256x128xf32>
    %60 = tpu.matmul %58, %59, %cst_29 {dimension_numbers = #tpu.dot_dimension_numbers<[1], [0], [0], [1], [0, 0, 1, 1], [], []>} : vector<256x256xbf16>, vector<256x128xbf16>, vector<256x128xf32> -> vector<256x128xf32>
    %c0_30 = arith.constant 0 : index
    %c0_31 = arith.constant 0 : index
    %61 = vector.load %arg9[%c0_30, %c0_31] : memref<1x128xf32, #tpu.memory_space<vmem>>, vector<1x128xf32>
    %62 = vector.broadcast %61 : vector<1x128xf32> to vector<256x128xf32>
    %63 = arith.addf %60, %62 : vector<256x128xf32>
    %64 = arith.truncf %63 : vector<256x128xf32> to vector<256x128xbf16>
    %c0_32 = arith.constant 0 : index
    %c0_33 = arith.constant 0 : index
    %65 = vector.load %arg10[%c0_32, %c0_33] : memref<256x128xbf16, #tpu.memory_space<vmem>>, vector<256x128xbf16>
    tpu.vector_store %arg10[%c0_32, %c0_33], %64 {strides = array<i32>} : memref<256x128xbf16, #tpu.memory_space<vmem>>, vector<256x128xbf16>,
    return
  }
  func.func @transform_0(%arg0: i32) -> (i32, i32) {
    %c0_i32 = arith.constant 0 : i32
    %c0_i32_0 = arith.constant 0 : i32
    return %arg0, %c0_i32 : i32, i32
  }
  func.func @transform_1(%arg0: i32) -> (i32, i32) {
    %c0_i32 = arith.constant 0 : i32
    %c0_i32_0 = arith.constant 0 : i32
    %c0_i32_1 = arith.constant 0 : i32
    return %c0_i32, %c0_i32_0 : i32, i32
  }
  func.func @transform_2(%arg0: i32) -> (i32, i32) {
    %c0_i32 = arith.constant 0 : i32
    %c0_i32_0 = arith.constant 0 : i32
    %c0_i32_1 = arith.constant 0 : i32
    return %c0_i32, %c0_i32_0 : i32, i32
  }
  func.func @transform_3(%arg0: i32) -> (i32, i32) {
    %c0_i32 = arith.constant 0 : i32
    %c0_i32_0 = arith.constant 0 : i32
    %c0_i32_1 = arith.constant 0 : i32
    return %c0_i32, %c0_i32_0 : i32, i32
  }
  func.func @transform_4(%arg0: i32) -> (i32, i32) {
    %c0_i32 = arith.constant 0 : i32
    %c0_i32_0 = arith.constant 0 : i32
    %c0_i32_1 = arith.constant 0 : i32
    return %c0_i32, %c0_i32_0 : i32, i32
  }
  func.func @transform_5(%arg0: i32) -> (i32, i32) {
    %c0_i32 = arith.constant 0 : i32
    %c0_i32_0 = arith.constant 0 : i32
    %c0_i32_1 = arith.constant 0 : i32
    return %c0_i32, %c0_i32_0 : i32, i32
  }
  func.func @transform_6(%arg0: i32) -> (i32, i32) {
    %c0_i32 = arith.constant 0 : i32
    %c0_i32_0 = arith.constant 0 : i32
    %c0_i32_1 = arith.constant 0 : i32
    return %c0_i32, %c0_i32_0 : i32, i32
  }
  func.func @transform_7(%arg0: i32) -> (i32, i32) {
    %c0_i32 = arith.constant 0 : i32
    %c0_i32_0 = arith.constant 0 : i32
    %c0_i32_1 = arith.constant 0 : i32
    return %c0_i32, %c0_i32_0 : i32, i32
  }
  func.func @transform_8(%arg0: i32) -> (i32, i32) {
    %c0_i32 = arith.constant 0 : i32
    %c0_i32_0 = arith.constant 0 : i32
    %c0_i32_1 = arith.constant 0 : i32
    return %c0_i32, %c0_i32_0 : i32, i32
  }
  func.func @transform_9(%arg0: i32) -> (i32, i32) {
    %c0_i32 = arith.constant 0 : i32
    %c0_i32_0 = arith.constant 0 : i32
    return %arg0, %c0_i32 : i32, i32
  }
}

</mosaic_0001>

<llo_original>
// kernel: tpu_custom_call.1
$region0: #{tpu_custom_call.1}
  #allocation0 [shape = 'u32[]', space=smem, size = 0x4, offset = 0x4, fixed_abs, tag = 'smem constant byte address 0x4 - core index']
  #allocation1 [shape = 'u32[144,128]{1,0:T(1,128)}', space=vmem, size = 0x12000, scoped, tag = 'internal scratch']
  %s0 = inlined_call_operand.vmem [shape: f32[256,64], index: 0, kind: input, shape index: {}]
  %s1 = inlined_call_operand.hbm [shape: bf16[64,256], index: 1, kind: input, shape index: {}]
  %s2 = inlined_call_operand.vmem [shape: f32[1,256], index: 2, kind: input, shape index: {}]
  %s3 = inlined_call_operand.vmem [shape: bf16[256,256], index: 3, kind: input, shape index: {}]
  %s4 = inlined_call_operand.vmem [shape: f32[1,256], index: 4, kind: input, shape index: {}]
  %s5 = inlined_call_operand.hbm [shape: bf16[256,256], index: 5, kind: input, shape index: {}]
  %s6 = inlined_call_operand.vmem [shape: f32[1,256], index: 6, kind: input, shape index: {}]
  %s7 = inlined_call_operand.vmem [shape: bf16[256,128], index: 7, kind: input, shape index: {}]
  %s8 = inlined_call_operand.vmem [shape: f32[1,128], index: 8, kind: input, shape index: {}]
  %s9 = inlined_call_operand.hbm [shape: bf16[256,128], index: 9, kind: output, shape index: {}]
  %s10 = sld [smem:[#allocation0]]
  $region54: #{tpu_custom_call.1} parent=0
    _
  %s12 = ssub.s32 1, %s10
  %s13 = scalar_select 0, %s12, %s10
  $region1: #{tpu_custom_call.1} parent=0
    #allocation2 [shape = 'u8[32768]{0}', space=vmem, size = 0x8000, scoped, tag = 'input window, operand 1, single buffered']
    #allocation3 [shape = 's32[1]{0}', space=sflag, size = 0x4, scoped, tag = 'scoped memory for tpu_custom_call.1']
    #allocation4 [shape = 's32[1]{0}', space=sflag, size = 0x4, scoped, tag = 'scoped memory for tpu_custom_call.1']
    #allocation5 [shape = 'u8[131072]{0}', space=vmem, size = 0x20000, scoped, tag = 'input window, operand 5, single buffered']
    #allocation6 [shape = 's32[1]{0}', space=sflag, size = 0x4, scoped, tag = 'scoped memory for tpu_custom_call.1']
    #allocation7 [shape = 'u8[65536]{0}', space=vmem, size = 0x10000, scoped, tag = 'output window, operand 0, single buffered']
    %14 = vsyncpa [#allocation3], 0
    %15 = vsyncpa [#allocation6], 0
    %16 = vsyncpa [#allocation4], 0
    // Predicated region
    $region2: #{tpu_custom_call.1} parent=1 // pred_check
      _
    $region3: #{tpu_custom_call.1} parent=1 // pred_check_branch
      %18 = sbr.rel (0) target = $region5
    $region4: #{tpu_custom_call.1} parent=1 // pred_region
      _
    $region5: #{tpu_custom_call.1} parent=1 // pred_fallthru
      _
    // Predicated region
    $region6: #{tpu_custom_call.1} parent=1 // pred_check
      _
    $region7: #{tpu_custom_call.1} parent=1 // pred_check_branch
      %20 = sbr.rel (0) target = $region9
    $region8: #{tpu_custom_call.1} parent=1 // pred_region
      %s22 = ssub.s32 1024, 1024
      %23 = vsyncadd [#allocation3], %s22
      %s24 = sshll.u32 [#allocation2], 4
      %s25 = int_to_ptr.vmem [resolvable:$true] %s24
      %30 = dma.hbm_to_vmem [thread:$0]  %s1, 1024, %s25, [#allocation3], 128, 128, 8
    $region9: #{tpu_custom_call.1} parent=1 // pred_fallthru
      _
    // Predicated region
    $region10: #{tpu_custom_call.1} parent=1 // pred_check
      _
    $region11: #{tpu_custom_call.1} parent=1 // pred_check_branch
      %32 = sbr.rel (0) target = $region13
    $region12: #{tpu_custom_call.1} parent=1 // pred_region
      _
    $region13: #{tpu_custom_call.1} parent=1 // pred_fallthru
      _
    // Predicated region
    $region14: #{tpu_custom_call.1} parent=1 // pred_check
      _
    $region15: #{tpu_custom_call.1} parent=1 // pred_check_branch
      %34 = sbr.rel (0) target = $region17
    $region16: #{tpu_custom_call.1} parent=1 // pred_region
      _
    $region17: #{tpu_custom_call.1} parent=1 // pred_fallthru
      _
    // Predicated region
    $region18: #{tpu_custom_call.1} parent=1 // pred_check
      _
    $region19: #{tpu_custom_call.1} parent=1 // pred_check_branch
      %36 = sbr.rel (0) target = $region21
    $region20: #{tpu_custom_call.1} parent=1 // pred_region
      _
    $region21: #{tpu_custom_call.1} parent=1 // pred_fallthru
      _
    // Predicated region
    $region22: #{tpu_custom_call.1} parent=1 // pred_check
      _
    $region23: #{tpu_custom_call.1} parent=1 // pred_check_branch
      %38 = sbr.rel (0) target = $region25
    $region24: #{tpu_custom_call.1} parent=1 // pred_region
      %s40 = ssub.s32 4096, 4096
      %41 = vsyncadd [#allocation6], %s40
      %s42 = sshll.u32 [#allocation5], 4
      %s43 = int_to_ptr.vmem [resolvable:$true] %s42
      %48 = dma.hbm_to_vmem [thread:$0]  %s5, 4096, %s43, [#allocation6], 128, 128, 8
    $region25: #{tpu_custom_call.1} parent=1 // pred_fallthru
      _
    // Predicated region
    $region26: #{tpu_custom_call.1} parent=1 // pred_check
      _
    $region27: #{tpu_custom_call.1} parent=1 // pred_check_branch
      %50 = sbr.rel (0) target = $region29
    $region28: #{tpu_custom_call.1} parent=1 // pred_region
      _
    $region29: #{tpu_custom_call.1} parent=1 // pred_fallthru
      _
    // Predicated region
    $region30: #{tpu_custom_call.1} parent=1 // pred_check
      _
    $region31: #{tpu_custom_call.1} parent=1 // pred_check_branch
      %52 = sbr.rel (0) target = $region33
    $region32: #{tpu_custom_call.1} parent=1 // pred_region
      _
    $region33: #{tpu_custom_call.1} parent=1 // pred_fallthru
      _
    // Predicated region
    $region34: #{tpu_custom_call.1} parent=1 // pred_check
      _
    $region35: #{tpu_custom_call.1} parent=1 // pred_check_branch
      %54 = sbr.rel (0) target = $region37
    $region36: #{tpu_custom_call.1} parent=1 // pred_region
      _
    $region37: #{tpu_custom_call.1} parent=1 // pred_fallthru
      _
    // Predicated region
    $region38: #{tpu_custom_call.1} parent=1 // pred_check
      _
    $region39: #{tpu_custom_call.1} parent=1 // pred_check_branch
      %56 = sbr.rel (0) target = $region41
    $region40: #{tpu_custom_call.1} parent=1 // pred_region
      %57 = dma.done [#allocation3], 1024
    $region41: #{tpu_custom_call.1} parent=1 // pred_fallthru
      _
    // Predicated region
    $region42: #{tpu_custom_call.1} parent=1 // pred_check
      _
    $region43: #{tpu_custom_call.1} parent=1 // pred_check_branch
      %59 = sbr.rel (0) target = $region45
    $region44: #{tpu_custom_call.1} parent=1 // pred_region
      %60 = dma.done [#allocation6], 4096
    $region45: #{tpu_custom_call.1} parent=1 // pred_fallthru
      _
    %v66 = vld [vmem:[%s0] sm:$0xff]
    %v67 = vld [vmem:[%s0 + $0x8] sm:$0xff]
    %v68 = vld [vmem:[%s0 + $0x10] sm:$0xff]
    %v69 = vld [vmem:[%s0 + $0x18] sm:$0xff]
    %v70 = vld [vmem:[%s0 + $0x20] sm:$0xff]
    %v71 = vld [vmem:[%s0 + $0x28] sm:$0xff]
    %v72 = vld [vmem:[%s0 + $0x30] sm:$0xff]
    %v73 = vld [vmem:[%s0 + $0x38] sm:$0xff]
    %v74 = vld [vmem:[%s0 + $0x40] sm:$0xff]
    %v75 = vld [vmem:[%s0 + $0x48] sm:$0xff]
    %v76 = vld [vmem:[%s0 + $0x50] sm:$0xff]
    %v77 = vld [vmem:[%s0 + $0x58] sm:$0xff]
    %v78 = vld [vmem:[%s0 + $0x60] sm:$0xff]
    %v79 = vld [vmem:[%s0 + $0x68] sm:$0xff]
    %v80 = vld [vmem:[%s0 + $0x70] sm:$0xff]
    %v81 = vld [vmem:[%s0 + $0x78] sm:$0xff]
    %v82 = vld [vmem:[%s0 + $0x80] sm:$0xff]
    %v83 = vld [vmem:[%s0 + $0x88] sm:$0xff]
    %v84 = vld [vmem:[%s0 + $0x90] sm:$0xff]
    %v85 = vld [vmem:[%s0 + $0x98] sm:$0xff]
    %v86 = vld [vmem:[%s0 + $0xa0] sm:$0xff]
    %v87 = vld [vmem:[%s0 + $0xa8] sm:$0xff]
    %v88 = vld [vmem:[%s0 + $0xb0] sm:$0xff]
    %v89 = vld [vmem:[%s0 + $0xb8] sm:$0xff]
    %v90 = vld [vmem:[%s0 + $0xc0] sm:$0xff]
    %v91 = vld [vmem:[%s0 + $0xc8] sm:$0xff]
    %v92 = vld [vmem:[%s0 + $0xd0] sm:$0xff]
    %v93 = vld [vmem:[%s0 + $0xd8] sm:$0xff]
    %v94 = vld [vmem:[%s0 + $0xe0] sm:$0xff]
    %v95 = vld [vmem:[%s0 + $0xe8] sm:$0xff]
    %v96 = vld [vmem:[%s0 + $0xf0] sm:$0xff]
    %v97 = vld [vmem:[%s0 + $0xf8] sm:$0xff]
    %v98 = vpack.c.bf16 %v67, %v66
    %v99 = vpack.c.bf16 %v69, %v68
    %v100 = vpack.c.bf16 %v71, %v70
    %v101 = vpack.c.bf16 %v73, %v72
    %v102 = vpack.c.bf16 %v75, %v74
    %v103 = vpack.c.bf16 %v77, %v76
    %v104 = vpack.c.bf16 %v79, %v78
    %v105 = vpack.c.bf16 %v81, %v80
    %v106 = vpack.c.bf16 %v83, %v82
    %v107 = vpack.c.bf16 %v85, %v84
    %v108 = vpack.c.bf16 %v87, %v86
    %v109 = vpack.c.bf16 %v89, %v88
    %v110 = vpack.c.bf16 %v91, %v90
    %v111 = vpack.c.bf16 %v93, %v92
    %v112 = vpack.c.bf16 %v95, %v94
    %v113 = vpack.c.bf16 %v97, %v96
    %v114 = vld [vmem:[#allocation2] sm:$0xff]
    %v115 = vld [vmem:[#allocation2 + $0x8] sm:$0xff]
    %v116 = vld [vmem:[#allocation2 + $0x10] sm:$0xff]
    %v117 = vld [vmem:[#allocation2 + $0x18] sm:$0xff]
    %v118 = vld [vmem:[#allocation2 + $0x20] sm:$0xff]
    %v119 = vld [vmem:[#allocation2 + $0x28] sm:$0xff]
    %v120 = vld [vmem:[#allocation2 + $0x30] sm:$0xff]
    %v121 = vld [vmem:[#allocation2 + $0x38] sm:$0xff]
    %v122 = vld [vmem:[%s2] sm:$0x3]
    %v124 = vlaneseq
    %v125 = vshrl.u32 %v124, 7
    %v126 = vsub.s32 0, %v125
    %v127 = vrot.slane %v122, %v126
    %v128 = vlaneseq
    %v129 = vshrl.u32 %v128, 7
    %v130 = vsub.s32 1, %v129
    %v131 = vrot.slane %v122, %v130
    %v142 = vunpack.c.l.b16 %v114
    %v143 = vunpack.c.h.b16 %v114
    %v144 = vunpack.c.l.b16 %v115
    %v145 = vunpack.c.h.b16 %v115
    %v146 = vunpack.c.l.b16 %v116
    %v147 = vunpack.c.h.b16 %v116
    %v148 = vunpack.c.l.b16 %v117
    %v149 = vunpack.c.h.b16 %v117
    %v150 = vunpack.c.l.b16 %v118
    %v151 = vunpack.c.h.b16 %v118
    %v152 = vunpack.c.l.b16 %v119
    %v153 = vunpack.c.h.b16 %v119
    %v154 = vunpack.c.l.b16 %v120
    %v155 = vunpack.c.h.b16 %v120
    %v156 = vunpack.c.l.b16 %v121
    %v157 = vunpack.c.h.b16 %v121
    %v158 = vpack.c.b16 %v144, %v142
    %v159 = vpack.c.b16 %v145, %v143
    %v160 = vpack.c.b16 %v148, %v146
    %v161 = vpack.c.b16 %v149, %v147
    %v162 = vpack.c.b16 %v152, %v150
    %v163 = vpack.c.b16 %v153, %v151
    %v164 = vpack.c.b16 %v156, %v154
    %v165 = vpack.c.b16 %v157, %v155
    %vm174 = vcmask 523264
    %v176 = vsel %vm174, %v98, 0
    %v179 = vsel %vm174, %v99, 0
    %v182 = vsel %vm174, %v100, 0
    %v185 = vsel %vm174, %v101, 0
    %v188 = vsel %vm174, %v102, 0
    %v191 = vsel %vm174, %v103, 0
    %v194 = vsel %vm174, %v104, 0
    %v197 = vsel %vm174, %v105, 0
    %v200 = vsel %vm174, %v106, 0
    %v203 = vsel %vm174, %v107, 0
    %v206 = vsel %vm174, %v108, 0
    %v209 = vsel %vm174, %v109, 0
    %v212 = vsel %vm174, %v110, 0
    %v215 = vsel %vm174, %v111, 0
    %v218 = vsel %vm174, %v112, 0
    %v221 = vsel %vm174, %v113, 0
    %223 = vmatprep.subr.bf16.mxu0 %v159
    %224 = vmatpush1.bf16.msra.mxu0 %v158
    %225 = vmatprep.subr.bf16.mxu0 %v161
    %226 = vmatpush1.bf16.msra.mxu0 %v160
    %227 = vmatprep.subr.bf16.mxu0 %v163
    %228 = vmatpush1.bf16.msra.mxu0 %v162
    %229 = vmatprep.subr.bf16.mxu0 %v165
    %230 = vmatpush1.bf16.msra.mxu0 %v164
    %231 = vmatprep.subr.bf16.mxu0 0
    %232 = vmatpush1.bf16.msra.mxu0 0
    %233 = vmatprep.subr.bf16.mxu0 0
    %234 = vmatpush1.bf16.msra.mxu0 0
    %235 = vmatprep.subr.bf16.mxu0 0
    %236 = vmatpush1.bf16.msra.mxu0 0
    %237 = vmatprep.subr.bf16.mxu0 0
    %238 = vmatpush1.bf16.msra.mxu0 0
    %239 = vmatprep.subr.bf16.mxu0 0
    %240 = vmatpush1.bf16.msra.mxu0 0
    %241 = vmatprep.subr.bf16.mxu0 0
    %242 = vmatpush1.bf16.msra.mxu0 0
    %243 = vmatprep.subr.bf16.mxu0 0
    %244 = vmatpush1.bf16.msra.mxu0 0
    %245 = vmatprep.subr.bf16.mxu0 0
    %246 = vmatpush1.bf16.msra.mxu0 0
    %247 = vmatprep.subr.bf16.mxu0 0
    %248 = vmatpush1.bf16.msra.mxu0 0
    %249 = vmatprep.subr.bf16.mxu0 0
    %250 = vmatpush1.bf16.msra.mxu0 0
    %251 = vmatprep.subr.bf16.mxu0 0
    %252 = vmatpush1.bf16.msra.mxu0 0
    %253 = vmatprep.subr.bf16.mxu0 0
    %254 = vmatpush1.bf16.msra.mxu0 0
    %255 = vmatprep.mubr.bf16.mxu0 0
    %256 = vmatmul.mubr.bf16.gmra.mrb[0].mxu0 %v176
    %v257 = vpop.f32.mrb[0].mxu0
    %v258 = vadd.f32 %v127, %v257
    %v259 = vpop.f32.mrb[0].mxu0
    %v260 = vadd.f32 %v131, %v259
    %v261 = vpop.f32.mrb[0].mxu0
    %v262 = vadd.f32 %v127, %v261
    %v263 = vpop.f32.mrb[0].mxu0
    %v264 = vadd.f32 %v131, %v263
    %265 = vmatprep.mubr.bf16.mxu0 0
    %266 = vmatmul.mubr.bf16.gmra.mrb[0].mxu0 %v179
    %v267 = vpop.f32.mrb[0].mxu0
    %v268 = vadd.f32 %v127, %v267
    %v269 = vpop.f32.mrb[0].mxu0
    %v270 = vadd.f32 %v131, %v269
    %v271 = vpop.f32.mrb[0].mxu0
    %v272 = vadd.f32 %v127, %v271
    %v273 = vpop.f32.mrb[0].mxu0
    %v274 = vadd.f32 %v131, %v273
    %275 = vmatprep.mubr.bf16.mxu0 0
    %276 = vmatmul.mubr.bf16.gmra.mrb[0].mxu0 %v182
    %v277 = vpop.f32.mrb[0].mxu0
    %v278 = vadd.f32 %v127, %v277
    %v279 = vpop.f32.mrb[0].mxu0
    %v280 = vadd.f32 %v131, %v279
    %v281 = vpop.f32.mrb[0].mxu0
    %v282 = vadd.f32 %v127, %v281
    %v283 = vpop.f32.mrb[0].mxu0
    %v284 = vadd.f32 %v131, %v283
    %285 = vmatprep.mubr.bf16.mxu0 0
    %286 = vmatmul.mubr.bf16.gmra.mrb[0].mxu0 %v185
    %v287 = vpop.f32.mrb[0].mxu0
    %v288 = vadd.f32 %v127, %v287
    %v289 = vpop.f32.mrb[0].mxu0
    %v290 = vadd.f32 %v131, %v289
    %v291 = vpop.f32.mrb[0].mxu0
    %v292 = vadd.f32 %v127, %v291
    %v293 = vpop.f32.mrb[0].mxu0
    %v294 = vadd.f32 %v131, %v293
    %295 = vmatprep.mubr.bf16.mxu0 0
    %296 = vmatmul.mubr.bf16.gmra.mrb[0].mxu0 %v188
    %v297 = vpop.f32.mrb[0].mxu0
    %v298 = vadd.f32 %v127, %v297
    %v299 = vpop.f32.mrb[0].mxu0
    %v300 = vadd.f32 %v131, %v299
    %v301 = vpop.f32.mrb[0].mxu0
    %v302 = vadd.f32 %v127, %v301
    %v303 = vpop.f32.mrb[0].mxu0
    %v304 = vadd.f32 %v131, %v303
    %305 = vmatprep.mubr.bf16.mxu0 0
    %306 = vmatmul.mubr.bf16.gmra.mrb[0].mxu0 %v191
    %v307 = vpop.f32.mrb[0].mxu0
    %v308 = vadd.f32 %v127, %v307
    %v309 = vpop.f32.mrb[0].mxu0
    %v310 = vadd.f32 %v131, %v309
    %v311 = vpop.f32.mrb[0].mxu0
    %v312 = vadd.f32 %v127, %v311
    %v313 = vpop.f32.mrb[0].mxu0
    %v314 = vadd.f32 %v131, %v313
    %315 = vmatprep.mubr.bf16.mxu0 0
    %316 = vmatmul.mubr.bf16.gmra.mrb[0].mxu0 %v194
    %v317 = vpop.f32.mrb[0].mxu0
    %v318 = vadd.f32 %v127, %v317
    %v319 = vpop.f32.mrb[0].mxu0
    %v320 = vadd.f32 %v131, %v319
    %v321 = vpop.f32.mrb[0].mxu0
    %v322 = vadd.f32 %v127, %v321
    %v323 = vpop.f32.mrb[0].mxu0
    %v324 = vadd.f32 %v131, %v323
    %325 = vmatprep.mubr.bf16.mxu0 0
    %326 = vmatmul.mubr.bf16.gmra.mrb[0].mxu0 %v197
    %v327 = vpop.f32.mrb[0].mxu0
    %v328 = vadd.f32 %v127, %v327
    %v329 = vpop.f32.mrb[0].mxu0
    %v330 = vadd.f32 %v131, %v329
    %v331 = vpop.f32.mrb[0].mxu0
    %v332 = vadd.f32 %v127, %v331
    %v333 = vpop.f32.mrb[0].mxu0
    %v334 = vadd.f32 %v131, %v333
    %335 = vmatprep.mubr.bf16.mxu0 0
    %336 = vmatmul.mubr.bf16.gmra.mrb[0].mxu0 %v200
    %v337 = vpop.f32.mrb[0].mxu0
    %v338 = vadd.f32 %v127, %v337
    %v339 = vpop.f32.mrb[0].mxu0
    %v340 = vadd.f32 %v131, %v339
    %v341 = vpop.f32.mrb[0].mxu0
    %v342 = vadd.f32 %v127, %v341
    %v343 = vpop.f32.mrb[0].mxu0
    %v344 = vadd.f32 %v131, %v343
    %345 = vmatprep.mubr.bf16.mxu0 0
    %346 = vmatmul.mubr.bf16.gmra.mrb[0].mxu0 %v203
    %v347 = vpop.f32.mrb[0].mxu0
    %v348 = vadd.f32 %v127, %v347
    %v349 = vpop.f32.mrb[0].mxu0
    %v350 = vadd.f32 %v131, %v349
    %v351 = vpop.f32.mrb[0].mxu0
    %v352 = vadd.f32 %v127, %v351
    %v353 = vpop.f32.mrb[0].mxu0
    %v354 = vadd.f32 %v131, %v353
    %355 = vmatprep.mubr.bf16.mxu0 0
    %356 = vmatmul.mubr.bf16.gmra.mrb[0].mxu0 %v206
    %v357 = vpop.f32.mrb[0].mxu0
    %v358 = vadd.f32 %v127, %v357
    %v359 = vpop.f32.mrb[0].mxu0
    %v360 = vadd.f32 %v131, %v359
    %v361 = vpop.f32.mrb[0].mxu0
    %v362 = vadd.f32 %v127, %v361
    %v363 = vpop.f32.mrb[0].mxu0
    %v364 = vadd.f32 %v131, %v363
    %365 = vmatprep.mubr.bf16.mxu0 0
    %366 = vmatmul.mubr.bf16.gmra.mrb[0].mxu0 %v209
    %v367 = vpop.f32.mrb[0].mxu0
    %v368 = vadd.f32 %v127, %v367
    %v369 = vpop.f32.mrb[0].mxu0
    %v370 = vadd.f32 %v131, %v369
    %v371 = vpop.f32.mrb[0].mxu0
    %v372 = vadd.f32 %v127, %v371
    %v373 = vpop.f32.mrb[0].mxu0
    %v374 = vadd.f32 %v131, %v373
    %375 = vmatprep.mubr.bf16.mxu0 0
    %376 = vmatmul.mubr.bf16.gmra.mrb[0].mxu0 %v212
    %v377 = vpop.f32.mrb[0].mxu0
    %v378 = vadd.f32 %v127, %v377
    %v379 = vpop.f32.mrb[0].mxu0
    %v380 = vadd.f32 %v131, %v379
    %v381 = vpop.f32.mrb[0].mxu0
    %v382 = vadd.f32 %v127, %v381
    %v383 = vpop.f32.mrb[0].mxu0
    %v384 = vadd.f32 %v131, %v383
    %385 = vmatprep.mubr.bf16.mxu0 0
    %386 = vmatmul.mubr.bf16.gmra.mrb[0].mxu0 %v215
    %v387 = vpop.f32.mrb[0].mxu0
    %v388 = vadd.f32 %v127, %v387
    %v389 = vpop.f32.mrb[0].mxu0
    %v390 = vadd.f32 %v131, %v389
    %v391 = vpop.f32.mrb[0].mxu0
    %v392 = vadd.f32 %v127, %v391
    %v393 = vpop.f32.mrb[0].mxu0
    %v394 = vadd.f32 %v131, %v393
    %395 = vmatprep.mubr.bf16.mxu0 0
    %396 = vmatmul.mubr.bf16.gmra.mrb[0].mxu0 %v218
    %v397 = vpop.f32.mrb[0].mxu0
    %v398 = vadd.f32 %v127, %v397
    %v399 = vpop.f32.mrb[0].mxu0
    %v400 = vadd.f32 %v131, %v399
    %v401 = vpop.f32.mrb[0].mxu0
    %v402 = vadd.f32 %v127, %v401
    %v403 = vpop.f32.mrb[0].mxu0
    %v404 = vadd.f32 %v131, %v403
    %405 = vmatprep.mubr.bf16.mxu0 0
    %406 = vmatmul.mubr.bf16.gmra.mrb[0].mxu0 %v221
    %v407 = vpop.f32.mrb[0].mxu0
    %v408 = vadd.f32 %v127, %v407
    %v409 = vpop.f32.mrb[0].mxu0
    %v410 = vadd.f32 %v131, %v409
    %v411 = vpop.f32.mrb[0].mxu0
    %v412 = vadd.f32 %v127, %v411
    %v413 = vpop.f32.mrb[0].mxu0
    %v414 = vadd.f32 %v131, %v413
    %415 = vdwg.mxu0
    %v416 = vpack.c.bf16 %v262, %v258
    %v417 = vpack.c.bf16 %v264, %v260
    %v418 = vpack.c.bf16 %v272, %v268
    %v419 = vpack.c.bf16 %v274, %v270
    %v420 = vpack.c.bf16 %v282, %v278
    %v421 = vpack.c.bf16 %v284, %v280
    %v422 = vpack.c.bf16 %v292, %v288
    %v423 = vpack.c.bf16 %v294, %v290
    %v424 = vpack.c.bf16 %v302, %v298
    %v425 = vpack.c.bf16 %v304, %v300
    %v426 = vpack.c.bf16 %v312, %v308
    %v427 = vpack.c.bf16 %v314, %v310
    %v428 = vpack.c.bf16 %v322, %v318
    %v429 = vpack.c.bf16 %v324, %v320
    %v430 = vpack.c.bf16 %v332, %v328
    %v431 = vpack.c.bf16 %v334, %v330
    %v432 = vpack.c.bf16 %v342, %v338
    %v433 = vpack.c.bf16 %v344, %v340
    %v434 = vpack.c.bf16 %v352, %v348
    %v435 = vpack.c.bf16 %v354, %v350
    %v436 = vpack.c.bf16 %v362, %v358
    %v437 = vpack.c.bf16 %v364, %v360
    %v438 = vpack.c.bf16 %v372, %v368
    %v439 = vpack.c.bf16 %v374, %v370
    %v440 = vpack.c.bf16 %v382, %v378
    %v441 = vpack.c.bf16 %v384, %v380
    %v442 = vpack.c.bf16 %v392, %v388
    %v443 = vpack.c.bf16 %v394, %v390
    %v444 = vpack.c.bf16 %v402, %v398
    %v445 = vpack.c.bf16 %v404, %v400
    %v446 = vpack.c.bf16 %v412, %v408
    %v447 = vpack.c.bf16 %v414, %v410
    %v448 = vmul.bf16 %v416, 1056980736
    %v449 = vmul.bf16 %v417, 1056980736
    %v450 = vmul.bf16 %v418, 1056980736
    %v451 = vmul.bf16 %v419, 1056980736
    %v452 = vmul.bf16 %v420, 1056980736
    %v453 = vmul.bf16 %v421, 1056980736
    %v454 = vmul.bf16 %v422, 1056980736
    %v455 = vmul.bf16 %v423, 1056980736
    %v456 = vmul.bf16 %v424, 1056980736
    %v457 = vmul.bf16 %v425, 1056980736
    %v458 = vmul.bf16 %v426, 1056980736
    %v459 = vmul.bf16 %v427, 1056980736
    %v460 = vmul.bf16 %v428, 1056980736
    %v461 = vmul.bf16 %v429, 1056980736
    %v462 = vmul.bf16 %v430, 1056980736
    %v463 = vmul.bf16 %v431, 1056980736
    %v464 = vmul.bf16 %v432, 1056980736
    %v465 = vmul.bf16 %v433, 1056980736
    %v466 = vmul.bf16 %v434, 1056980736
    %v467 = vmul.bf16 %v435, 1056980736
    %v468 = vmul.bf16 %v436, 1056980736
    %v469 = vmul.bf16 %v437, 1056980736
    %v470 = vmul.bf16 %v438, 1056980736
    %v471 = vmul.bf16 %v439, 1056980736
    %v472 = vmul.bf16 %v440, 1056980736
    %v473 = vmul.bf16 %v441, 1056980736
    %v474 = vmul.bf16 %v442, 1056980736
    %v475 = vmul.bf16 %v443, 1056980736
    %v476 = vmul.bf16 %v444, 1056980736
    %v477 = vmul.bf16 %v445, 1056980736
    %v478 = vmul.bf16 %v446, 1056980736
    %v479 = vmul.bf16 %v447, 1056980736
    %v480 = vmul.bf16 %v416, 1027030327
    %v481 = vmul.bf16 %v417, 1027030327
    %v482 = vmul.bf16 %v418, 1027030327
    %v483 = vmul.bf16 %v419, 1027030327
    %v484 = vmul.bf16 %v420, 1027030327
    %v485 = vmul.bf16 %v421, 1027030327
    %v486 = vmul.bf16 %v422, 1027030327
    %v487 = vmul.bf16 %v423, 1027030327
    %v488 = vmul.bf16 %v424, 1027030327
    %v489 = vmul.bf16 %v425, 1027030327
    %v490 = vmul.bf16 %v426, 1027030327
    %v491 = vmul.bf16 %v427, 1027030327
    %v492 = vmul.bf16 %v428, 1027030327
    %v493 = vmul.bf16 %v429, 1027030327
    %v494 = vmul.bf16 %v430, 1027030327
    %v495 = vmul.bf16 %v431, 1027030327
    %v496 = vmul.bf16 %v432, 1027030327
    %v497 = vmul.bf16 %v433, 1027030327
    %v498 = vmul.bf16 %v434, 1027030327
    %v499 = vmul.bf16 %v435, 1027030327
    %v500 = vmul.bf16 %v436, 1027030327
    %v501 = vmul.bf16 %v437, 1027030327
    %v502 = vmul.bf16 %v438, 1027030327
    %v503 = vmul.bf16 %v439, 1027030327
    %v504 = vmul.bf16 %v440, 1027030327
    %v505 = vmul.bf16 %v441, 1027030327
    %v506 = vmul.bf16 %v442, 1027030327
    %v507 = vmul.bf16 %v443, 1027030327
    %v508 = vmul.bf16 %v444, 1027030327
    %v509 = vmul.bf16 %v445, 1027030327
    %v510 = vmul.bf16 %v446, 1027030327
    %v511 = vmul.bf16 %v447, 1027030327
    %v512 = vmul.bf16 %v480, %v416
    %v513 = vmul.bf16 %v481, %v417
    %v514 = vmul.bf16 %v482, %v418
    %v515 = vmul.bf16 %v483, %v419
    %v516 = vmul.bf16 %v484, %v420
    %v517 = vmul.bf16 %v485, %v421
    %v518 = vmul.bf16 %v486, %v422
    %v519 = vmul.bf16 %v487, %v423
    %v520 = vmul.bf16 %v488, %v424
    %v521 = vmul.bf16 %v489, %v425
    %v522 = vmul.bf16 %v490, %v426
    %v523 = vmul.bf16 %v491, %v427
    %v524 = vmul.bf16 %v492, %v428
    %v525 = vmul.bf16 %v493, %v429
    %v526 = vmul.bf16 %v494, %v430
    %v527 = vmul.bf16 %v495, %v431
    %v528 = vmul.bf16 %v496, %v432
    %v529 = vmul.bf16 %v497, %v433
    %v530 = vmul.bf16 %v498, %v434
    %v531 = vmul.bf16 %v499, %v435
    %v532 = vmul.bf16 %v500, %v436
    %v533 = vmul.bf16 %v501, %v437
    %v534 = vmul.bf16 %v502, %v438
    %v535 = vmul.bf16 %v503, %v439
    %v536 = vmul.bf16 %v504, %v440
    %v537 = vmul.bf16 %v505, %v441
    %v538 = vmul.bf16 %v506, %v442
    %v539 = vmul.bf16 %v507, %v443
    %v540 = vmul.bf16 %v508, %v444
    %v541 = vmul.bf16 %v509, %v445
    %v542 = vmul.bf16 %v510, %v446
    %v543 = vmul.bf16 %v511, %v447
    %v544 = vmul.bf16 %v512, %v416
    %v545 = vmul.bf16 %v513, %v417
    %v546 = vmul.bf16 %v514, %v418
    %v547 = vmul.bf16 %v515, %v419
    %v548 = vmul.bf16 %v516, %v420
    %v549 = vmul.bf16 %v517, %v421
    %v550 = vmul.bf16 %v518, %v422
    %v551 = vmul.bf16 %v519, %v423
    %v552 = vmul.bf16 %v520, %v424
    %v553 = vmul.bf16 %v521, %v425
    %v554 = vmul.bf16 %v522, %v426
    %v555 = vmul.bf16 %v523, %v427
    %v556 = vmul.bf16 %v524, %v428
    %v557 = vmul.bf16 %v525, %v429
    %v558 = vmul.bf16 %v526, %v430
    %v559 = vmul.bf16 %v527, %v431
    %v560 = vmul.bf16 %v528, %v432
    %v561 = vmul.bf16 %v529, %v433
    %v562 = vmul.bf16 %v530, %v434
    %v563 = vmul.bf16 %v531, %v435
    %v564 = vmul.bf16 %v532, %v436
    %v565 = vmul.bf16 %v533, %v437
    %v566 = vmul.bf16 %v534, %v438
    %v567 = vmul.bf16 %v535, %v439
    %v568 = vmul.bf16 %v536, %v440
    %v569 = vmul.bf16 %v537, %v441
    %v570 = vmul.bf16 %v538, %v442
    %v571 = vmul.bf16 %v539, %v443
    %v572 = vmul.bf16 %v540, %v444
    %v573 = vmul.bf16 %v541, %v445
    %v574 = vmul.bf16 %v542, %v446
    %v575 = vmul.bf16 %v543, %v447
    %v576 = vadd.bf16 %v416, %v544
    %v577 = vadd.bf16 %v417, %v545
    %v578 = vadd.bf16 %v418, %v546
    %v579 = vadd.bf16 %v419, %v547
    %v580 = vadd.bf16 %v420, %v548
    %v581 = vadd.bf16 %v421, %v549
    %v582 = vadd.bf16 %v422, %v550
    %v583 = vadd.bf16 %v423, %v551
    %v584 = vadd.bf16 %v424, %v552
    %v585 = vadd.bf16 %v425, %v553
    %v586 = vadd.bf16 %v426, %v554
    %v587 = vadd.bf16 %v427, %v555
    %v588 = vadd.bf16 %v428, %v556
    %v589 = vadd.bf16 %v429, %v557
    %v590 = vadd.bf16 %v430, %v558
    %v591 = vadd.bf16 %v431, %v559
    %v592 = vadd.bf16 %v432, %v560
    %v593 = vadd.bf16 %v433, %v561
    %v594 = vadd.bf16 %v434, %v562
    %v595 = vadd.bf16 %v435, %v563
    %v596 = vadd.bf16 %v436, %v564
    %v597 = vadd.bf16 %v437, %v565
    %v598 = vadd.bf16 %v438, %v566
    %v599 = vadd.bf16 %v439, %v567
    %v600 = vadd.bf16 %v440, %v568
    %v601 = vadd.bf16 %v441, %v569
    %v602 = vadd.bf16 %v442, %v570
    %v603 = vadd.bf16 %v443, %v571
    %v604 = vadd.bf16 %v444, %v572
    %v605 = vadd.bf16 %v445, %v573
    %v606 = vadd.bf16 %v446, %v574
    %v607 = vadd.bf16 %v447, %v575
    %v608 = vmul.bf16 %v576, 1061961548
    %v609 = vmul.bf16 %v577, 1061961548
    %v610 = vmul.bf16 %v578, 1061961548
    %v611 = vmul.bf16 %v579, 1061961548
    %v612 = vmul.bf16 %v580, 1061961548
    %v613 = vmul.bf16 %v581, 1061961548
    %v614 = vmul.bf16 %v582, 1061961548
    %v615 = vmul.bf16 %v583, 1061961548
    %v616 = vmul.bf16 %v584, 1061961548
    %v617 = vmul.bf16 %v585, 1061961548
    %v618 = vmul.bf16 %v586, 1061961548
    %v619 = vmul.bf16 %v587, 1061961548
    %v620 = vmul.bf16 %v588, 1061961548
    %v621 = vmul.bf16 %v589, 1061961548
    %v622 = vmul.bf16 %v590, 1061961548
    %v623 = vmul.bf16 %v591, 1061961548
    %v624 = vmul.bf16 %v592, 1061961548
    %v625 = vmul.bf16 %v593, 1061961548
    %v626 = vmul.bf16 %v594, 1061961548
    %v627 = vmul.bf16 %v595, 1061961548
    %v628 = vmul.bf16 %v596, 1061961548
    %v629 = vmul.bf16 %v597, 1061961548
    %v630 = vmul.bf16 %v598, 1061961548
    %v631 = vmul.bf16 %v599, 1061961548
    %v632 = vmul.bf16 %v600, 1061961548
    %v633 = vmul.bf16 %v601, 1061961548
    %v634 = vmul.bf16 %v602, 1061961548
    %v635 = vmul.bf16 %v603, 1061961548
    %v636 = vmul.bf16 %v604, 1061961548
    %v637 = vmul.bf16 %v605, 1061961548
    %v638 = vmul.bf16 %v606, 1061961548
    %v639 = vmul.bf16 %v607, 1061961548
    %v640 = vtanh.bf16.pop %v608
    %v641 = vtanh.bf16.pop %v609
    %v642 = vtanh.bf16.pop %v610
    %v643 = vtanh.bf16.pop %v611
    %v644 = vtanh.bf16.pop %v612
    %v645 = vtanh.bf16.pop %v613
    %v646 = vtanh.bf16.pop %v614
    %v647 = vtanh.bf16.pop %v615
    %v648 = vtanh.bf16.pop %v616
    %v649 = vtanh.bf16.pop %v617
    %v650 = vtanh.bf16.pop %v618
    %v651 = vtanh.bf16.pop %v619
    %v652 = vtanh.bf16.pop %v620
    %v653 = vtanh.bf16.pop %v621
    %v654 = vtanh.bf16.pop %v622
    %v655 = vtanh.bf16.pop %v623
    %v656 = vtanh.bf16.pop %v624
    %v657 = vtanh.bf16.pop %v625
    %v658 = vtanh.bf16.pop %v626
    %v659 = vtanh.bf16.pop %v627
    %v660 = vtanh.bf16.pop %v628
    %v661 = vtanh.bf16.pop %v629
    %v662 = vtanh.bf16.pop %v630
    %v663 = vtanh.bf16.pop %v631
    %v664 = vtanh.bf16.pop %v632
    %v665 = vtanh.bf16.pop %v633
    %v666 = vtanh.bf16.pop %v634
    %v667 = vtanh.bf16.pop %v635
    %v668 = vtanh.bf16.pop %v636
    %v669 = vtanh.bf16.pop %v637
    %v670 = vtanh.bf16.pop %v638
    %v671 = vtanh.bf16.pop %v639
    %v672 = vadd.bf16 %v640, 1065369472
    %v673 = vadd.bf16 %v641, 1065369472
    %v674 = vadd.bf16 %v642, 1065369472
    %v675 = vadd.bf16 %v643, 1065369472
    %v676 = vadd.bf16 %v644, 1065369472
    %v677 = vadd.bf16 %v645, 1065369472
    %v678 = vadd.bf16 %v646, 1065369472
    %v679 = vadd.bf16 %v647, 1065369472
    %v680 = vadd.bf16 %v648, 1065369472
    %v681 = vadd.bf16 %v649, 1065369472
    %v682 = vadd.bf16 %v650, 1065369472
    %v683 = vadd.bf16 %v651, 1065369472
    %v684 = vadd.bf16 %v652, 1065369472
    %v685 = vadd.bf16 %v653, 1065369472
    %v686 = vadd.bf16 %v654, 1065369472
    %v687 = vadd.bf16 %v655, 1065369472
    %v688 = vadd.bf16 %v656, 1065369472
    %v689 = vadd.bf16 %v657, 1065369472
    %v690 = vadd.bf16 %v658, 1065369472
    %v691 = vadd.bf16 %v659, 1065369472
    %v692 = vadd.bf16 %v660, 1065369472
    %v693 = vadd.bf16 %v661, 1065369472
    %v694 = vadd.bf16 %v662, 1065369472
    %v695 = vadd.bf16 %v663, 1065369472
    %v696 = vadd.bf16 %v664, 1065369472
    %v697 = vadd.bf16 %v665, 1065369472
    %v698 = vadd.bf16 %v666, 1065369472
    %v699 = vadd.bf16 %v667, 1065369472
    %v700 = vadd.bf16 %v668, 1065369472
    %v701 = vadd.bf16 %v669, 1065369472
    %v702 = vadd.bf16 %v670, 1065369472
    %v703 = vadd.bf16 %v671, 1065369472
    %v704 = vmul.bf16 %v448, %v672
    %v705 = vmul.bf16 %v449, %v673
    %v706 = vmul.bf16 %v450, %v674
    %v707 = vmul.bf16 %v451, %v675
    %v708 = vmul.bf16 %v452, %v676
    %v709 = vmul.bf16 %v453, %v677
    %v710 = vmul.bf16 %v454, %v678
    %v711 = vmul.bf16 %v455, %v679
    %v712 = vmul.bf16 %v456, %v680
    %v713 = vmul.bf16 %v457, %v681
    %v714 = vmul.bf16 %v458, %v682
    %v715 = vmul.bf16 %v459, %v683
    %v716 = vmul.bf16 %v460, %v684
    %v717 = vmul.bf16 %v461, %v685
    %v718 = vmul.bf16 %v462, %v686
    %v719 = vmul.bf16 %v463, %v687
    %v720 = vmul.bf16 %v464, %v688
    %v721 = vmul.bf16 %v465, %v689
    %v722 = vmul.bf16 %v466, %v690
    %v723 = vmul.bf16 %v467, %v691
    %v724 = vmul.bf16 %v468, %v692
    %v725 = vmul.bf16 %v469, %v693
    %v726 = vmul.bf16 %v470, %v694
    %v727 = vmul.bf16 %v471, %v695
    %v728 = vmul.bf16 %v472, %v696
    %v729 = vmul.bf16 %v473, %v697
    %v730 = vmul.bf16 %v474, %v698
    %v731 = vmul.bf16 %v475, %v699
    %v732 = vmul.bf16 %v476, %v700
    %v733 = vmul.bf16 %v477, %v701
    %v734 = vmul.bf16 %v478, %v702
    %v735 = vmul.bf16 %v479, %v703
    %v736 = vld [vmem:[%s3] sm:$0xff]
    %v737 = vld [vmem:[%s3 + $0x8] sm:$0xff]
    %v738 = vld [vmem:[%s3 + $0x10] sm:$0xff]
    %v739 = vld [vmem:[%s3 + $0x18] sm:$0xff]
    %v740 = vld [vmem:[%s3 + $0x20] sm:$0xff]
    %v741 = vld [vmem:[%s3 + $0x28] sm:$0xff]
    %v742 = vld [vmem:[%s3 + $0x30] sm:$0xff]
    %v743 = vld [vmem:[%s3 + $0x38] sm:$0xff]
    %v744 = vld [vmem:[%s3 + $0x40] sm:$0xff]
    %v745 = vld [vmem:[%s3 + $0x48] sm:$0xff]
    %v746 = vld [vmem:[%s3 + $0x50] sm:$0xff]
    %v747 = vld [vmem:[%s3 + $0x58] sm:$0xff]
    %v748 = vld [vmem:[%s3 + $0x60] sm:$0xff]
    %v749 = vld [vmem:[%s3 + $0x68] sm:$0xff]
    %v750 = vld [vmem:[%s3 + $0x70] sm:$0xff]
    %v751 = vld [vmem:[%s3 + $0x78] sm:$0xff]
    %v752 = vld [vmem:[%s3 + $0x80] sm:$0xff]
    %v753 = vld [vmem:[%s3 + $0x88] sm:$0xff]
    %v754 = vld [vmem:[%s3 + $0x90] sm:$0xff]
    %v755 = vld [vmem:[%s3 + $0x98] sm:$0xff]
    %v756 = vld [vmem:[%s3 + $0xa0] sm:$0xff]
    %v757 = vld [vmem:[%s3 + $0xa8] sm:$0xff]
    %v758 = vld [vmem:[%s3 + $0xb0] sm:$0xff]
    %v759 = vld [vmem:[%s3 + $0xb8] sm:$0xff]
    %v760 = vld [vmem:[%s3 + $0xc0] sm:$0xff]
    %v761 = vld [vmem:[%s3 + $0xc8] sm:$0xff]
    %v762 = vld [vmem:[%s3 + $0xd0] sm:$0xff]
    %v763 = vld [vmem:[%s3 + $0xd8] sm:$0xff]
    %v764 = vld [vmem:[%s3 + $0xe0] sm:$0xff]
    %v765 = vld [vmem:[%s3 + $0xe8] sm:$0xff]
    %v766 = vld [vmem:[%s3 + $0xf0] sm:$0xff]
    %v767 = vld [vmem:[%s3 + $0xf8] sm:$0xff]
    %v768 = vld [vmem:[%s4] sm:$0x3]
    %v770 = vlaneseq
    %v771 = vshrl.u32 %v770, 7
    %v772 = vsub.s32 0, %v771
    %v773 = vrot.slane %v768, %v772
    %v774 = vlaneseq
    %v775 = vshrl.u32 %v774, 7
    %v776 = vsub.s32 1, %v775
    %v777 = vrot.slane %v768, %v776
    %v812 = vunpack.c.l.b16 %v736
    %v813 = vunpack.c.h.b16 %v736
    %v814 = vunpack.c.l.b16 %v737
    %v815 = vunpack.c.h.b16 %v737
    %v816 = vunpack.c.l.b16 %v738
    %v817 = vunpack.c.h.b16 %v738
    %v818 = vunpack.c.l.b16 %v739
    %v819 = vunpack.c.h.b16 %v739
    %v820 = vunpack.c.l.b16 %v740
    %v821 = vunpack.c.h.b16 %v740
    %v822 = vunpack.c.l.b16 %v741
    %v823 = vunpack.c.h.b16 %v741
    %v824 = vunpack.c.l.b16 %v742
    %v825 = vunpack.c.h.b16 %v742
    %v826 = vunpack.c.l.b16 %v743
    %v827 = vunpack.c.h.b16 %v743
    %v828 = vunpack.c.l.b16 %v744
    %v829 = vunpack.c.h.b16 %v744
    %v830 = vunpack.c.l.b16 %v745
    %v831 = vunpack.c.h.b16 %v745
    %v832 = vunpack.c.l.b16 %v746
    %v833 = vunpack.c.h.b16 %v746
    %v834 = vunpack.c.l.b16 %v747
    %v835 = vunpack.c.h.b16 %v747
    %v836 = vunpack.c.l.b16 %v748
    %v837 = vunpack.c.h.b16 %v748
    %v838 = vunpack.c.l.b16 %v749
    %v839 = vunpack.c.h.b16 %v749
    %v840 = vunpack.c.l.b16 %v750
    %v841 = vunpack.c.h.b16 %v750
    %v842 = vunpack.c.l.b16 %v751
    %v843 = vunpack.c.h.b16 %v751
    %v844 = vunpack.c.l.b16 %v752
    %v845 = vunpack.c.h.b16 %v752
    %v846 = vunpack.c.l.b16 %v753
    %v847 = vunpack.c.h.b16 %v753
    %v848 = vunpack.c.l.b16 %v754
    %v849 = vunpack.c.h.b16 %v754
    %v850 = vunpack.c.l.b16 %v755
    %v851 = vunpack.c.h.b16 %v755
    %v852 = vunpack.c.l.b16 %v756
    %v853 = vunpack.c.h.b16 %v756
    %v854 = vunpack.c.l.b16 %v757
    %v855 = vunpack.c.h.b16 %v757
    %v856 = vunpack.c.l.b16 %v758
    %v857 = vunpack.c.h.b16 %v758
    %v858 = vunpack.c.l.b16 %v759
    %v859 = vunpack.c.h.b16 %v759
    %v860 = vunpack.c.l.b16 %v760
    %v861 = vunpack.c.h.b16 %v760
    %v862 = vunpack.c.l.b16 %v761
    %v863 = vunpack.c.h.b16 %v761
    %v864 = vunpack.c.l.b16 %v762
    %v865 = vunpack.c.h.b16 %v762
    %v866 = vunpack.c.l.b16 %v763
    %v867 = vunpack.c.h.b16 %v763
    %v868 = vunpack.c.l.b16 %v764
    %v869 = vunpack.c.h.b16 %v764
    %v870 = vunpack.c.l.b16 %v765
    %v871 = vunpack.c.h.b16 %v765
    %v872 = vunpack.c.l.b16 %v766
    %v873 = vunpack.c.h.b16 %v766
    %v874 = vunpack.c.l.b16 %v767
    %v875 = vunpack.c.h.b16 %v767
    %v876 = vpack.c.b16 %v814, %v812
    %v877 = vpack.c.b16 %v815, %v813
    %v878 = vpack.c.b16 %v818, %v816
    %v879 = vpack.c.b16 %v819, %v817
    %v880 = vpack.c.b16 %v822, %v820
    %v881 = vpack.c.b16 %v823, %v821
    %v882 = vpack.c.b16 %v826, %v824
    %v883 = vpack.c.b16 %v827, %v825
    %v884 = vpack.c.b16 %v830, %v828
    %v885 = vpack.c.b16 %v831, %v829
    %v886 = vpack.c.b16 %v834, %v832
    %v887 = vpack.c.b16 %v835, %v833
    %v888 = vpack.c.b16 %v838, %v836
    %v889 = vpack.c.b16 %v839, %v837
    %v890 = vpack.c.b16 %v842, %v840
    %v891 = vpack.c.b16 %v843, %v841
    %v892 = vpack.c.b16 %v846, %v844
    %v893 = vpack.c.b16 %v847, %v845
    %v894 = vpack.c.b16 %v850, %v848
    %v895 = vpack.c.b16 %v851, %v849
    %v896 = vpack.c.b16 %v854, %v852
    %v897 = vpack.c.b16 %v855, %v853
    %v898 = vpack.c.b16 %v858, %v856
    %v899 = vpack.c.b16 %v859, %v857
    %v900 = vpack.c.b16 %v862, %v860
    %v901 = vpack.c.b16 %v863, %v861
    %v902 = vpack.c.b16 %v866, %v864
    %v903 = vpack.c.b16 %v867, %v865
    %v904 = vpack.c.b16 %v870, %v868
    %v905 = vpack.c.b16 %v871, %v869
    %v906 = vpack.c.b16 %v874, %v872
    %v907 = vpack.c.b16 %v875, %v873
    %940 = vmatprep.subr.bf16.mxu0 %v877
    %941 = vmatpush1.bf16.msra.mxu0 %v876
    %942 = vmatprep.subr.bf16.mxu0 %v879
    %943 = vmatpush1.bf16.msra.mxu0 %v878
    %944 = vmatprep.subr.bf16.mxu0 %v881
    %945 = vmatpush1.bf16.msra.mxu0 %v880
    %946 = vmatprep.subr.bf16.mxu0 %v883
    %947 = vmatpush1.bf16.msra.mxu0 %v882
    %948 = vmatprep.subr.bf16.mxu0 %v885
    %949 = vmatpush1.bf16.msra.mxu0 %v884
    %950 = vmatprep.subr.bf16.mxu0 %v887
    %951 = vmatpush1.bf16.msra.mxu0 %v886
    %952 = vmatprep.subr.bf16.mxu0 %v889
    %953 = vmatpush1.bf16.msra.mxu0 %v888
    %954 = vmatprep.subr.bf16.mxu0 %v891
    %955 = vmatpush1.bf16.msra.mxu0 %v890
    %956 = vmatprep.subr.bf16.mxu0 %v893
    %957 = vmatpush1.bf16.msra.mxu0 %v892
    %958 = vmatprep.subr.bf16.mxu0 %v895
    %959 = vmatpush1.bf16.msra.mxu0 %v894
    %960 = vmatprep.subr.bf16.mxu0 %v897
    %961 = vmatpush1.bf16.msra.mxu0 %v896
    %962 = vmatprep.subr.bf16.mxu0 %v899
    %963 = vmatpush1.bf16.msra.mxu0 %v898
    %964 = vmatprep.subr.bf16.mxu0 %v901
    %965 = vmatpush1.bf16.msra.mxu0 %v900
    %966 = vmatprep.subr.bf16.mxu0 %v903
    %967 = vmatpush1.bf16.msra.mxu0 %v902
    %968 = vmatprep.subr.bf16.mxu0 %v905
    %969 = vmatpush1.bf16.msra.mxu0 %v904
    %970 = vmatprep.subr.bf16.mxu0 %v907
    %971 = vmatpush1.bf16.msra.mxu0 %v906
    %972 = vmatprep.mubr.bf16.mxu0 %v705
    %973 = vmatmul.mubr.bf16.gmra.mrb[0].mxu0 %v704
    %v974 = vpop.f32.mrb[0].mxu0
    %v975 = vadd.f32 %v773, %v974
    %v976 = vpop.f32.mrb[0].mxu0
    %v977 = vadd.f32 %v777, %v976
    %v978 = vpop.f32.mrb[0].mxu0
    %v979 = vadd.f32 %v773, %v978
    %v980 = vpop.f32.mrb[0].mxu0
    %v981 = vadd.f32 %v777, %v980
    %982 = vmatprep.mubr.bf16.mxu0 %v707
    %983 = vmatmul.mubr.bf16.gmra.mrb[0].mxu0 %v706
    %v984 = vpop.f32.mrb[0].mxu0
    %v985 = vadd.f32 %v773, %v984
    %v986 = vpop.f32.mrb[0].mxu0
    %v987 = vadd.f32 %v777, %v986
    %v988 = vpop.f32.mrb[0].mxu0
    %v989 = vadd.f32 %v773, %v988
    %v990 = vpop.f32.mrb[0].mxu0
    %v991 = vadd.f32 %v777, %v990
    %992 = vmatprep.mubr.bf16.mxu0 %v709
    %993 = vmatmul.mubr.bf16.gmra.mrb[0].mxu0 %v708
    %v994 = vpop.f32.mrb[0].mxu0
    %v995 = vadd.f32 %v773, %v994
    %v996 = vpop.f32.mrb[0].mxu0
    %v997 = vadd.f32 %v777, %v996
    %v998 = vpop.f32.mrb[0].mxu0
    %v999 = vadd.f32 %v773, %v998
    %v1000 = vpop.f32.mrb[0].mxu0
    %v1001 = vadd.f32 %v777, %v1000
    %1002 = vmatprep.mubr.bf16.mxu0 %v711
    %1003 = vmatmul.mubr.bf16.gmra.mrb[0].mxu0 %v710
    %v1004 = vpop.f32.mrb[0].mxu0
    %v1005 = vadd.f32 %v773, %v1004
    %v1006 = vpop.f32.mrb[0].mxu0
    %v1007 = vadd.f32 %v777, %v1006
    %v1008 = vpop.f32.mrb[0].mxu0
    %v1009 = vadd.f32 %v773, %v1008
    %v1010 = vpop.f32.mrb[0].mxu0
    %v1011 = vadd.f32 %v777, %v1010
    %1012 = vmatprep.mubr.bf16.mxu0 %v713
    %1013 = vmatmul.mubr.bf16.gmra.mrb[0].mxu0 %v712
    %v1014 = vpop.f32.mrb[0].mxu0
    %v1015 = vadd.f32 %v773, %v1014
    %v1016 = vpop.f32.mrb[0].mxu0
    %v1017 = vadd.f32 %v777, %v1016
    %v1018 = vpop.f32.mrb[0].mxu0
    %v1019 = vadd.f32 %v773, %v1018
    %v1020 = vpop.f32.mrb[0].mxu0
    %v1021 = vadd.f32 %v777, %v1020
    %1022 = vmatprep.mubr.bf16.mxu0 %v715
    %1023 = vmatmul.mubr.bf16.gmra.mrb[0].mxu0 %v714
    %v1024 = vpop.f32.mrb[0].mxu0
    %v1025 = vadd.f32 %v773, %v1024
    %v1026 = vpop.f32.mrb[0].mxu0
    %v1027 = vadd.f32 %v777, %v1026
    %v1028 = vpop.f32.mrb[0].mxu0
    %v1029 = vadd.f32 %v773, %v1028
    %v1030 = vpop.f32.mrb[0].mxu0
    %v1031 = vadd.f32 %v777, %v1030
    %1032 = vmatprep.mubr.bf16.mxu0 %v717
    %1033 = vmatmul.mubr.bf16.gmra.mrb[0].mxu0 %v716
    %v1034 = vpop.f32.mrb[0].mxu0
    %v1035 = vadd.f32 %v773, %v1034
    %v1036 = vpop.f32.mrb[0].mxu0
    %v1037 = vadd.f32 %v777, %v1036
    %v1038 = vpop.f32.mrb[0].mxu0
    %v1039 = vadd.f32 %v773, %v1038
    %v1040 = vpop.f32.mrb[0].mxu0
    %v1041 = vadd.f32 %v777, %v1040
    %1042 = vmatprep.mubr.bf16.mxu0 %v719
    %1043 = vmatmul.mubr.bf16.gmra.mrb[0].mxu0 %v718
    %v1044 = vpop.f32.mrb[0].mxu0
    %v1045 = vadd.f32 %v773, %v1044
    %v1046 = vpop.f32.mrb[0].mxu0
    %v1047 = vadd.f32 %v777, %v1046
    %v1048 = vpop.f32.mrb[0].mxu0
    %v1049 = vadd.f32 %v773, %v1048
    %v1050 = vpop.f32.mrb[0].mxu0
    %v1051 = vadd.f32 %v777, %v1050
    %1052 = vmatprep.mubr.bf16.mxu0 %v721
    %1053 = vmatmul.mubr.bf16.gmra.mrb[0].mxu0 %v720
    %v1054 = vpop.f32.mrb[0].mxu0
    %v1055 = vadd.f32 %v773, %v1054
    %v1056 = vpop.f32.mrb[0].mxu0
    %v1057 = vadd.f32 %v777, %v1056
    %v1058 = vpop.f32.mrb[0].mxu0
    %v1059 = vadd.f32 %v773, %v1058
    %v1060 = vpop.f32.mrb[0].mxu0
    %v1061 = vadd.f32 %v777, %v1060
    %1062 = vmatprep.mubr.bf16.mxu0 %v723
    %1063 = vmatmul.mubr.bf16.gmra.mrb[0].mxu0 %v722
    %v1064 = vpop.f32.mrb[0].mxu0
    %v1065 = vadd.f32 %v773, %v1064
    %v1066 = vpop.f32.mrb[0].mxu0
    %v1067 = vadd.f32 %v777, %v1066
    %v1068 = vpop.f32.mrb[0].mxu0
    %v1069 = vadd.f32 %v773, %v1068
    %v1070 = vpop.f32.mrb[0].mxu0
    %v1071 = vadd.f32 %v777, %v1070
    %1072 = vmatprep.mubr.bf16.mxu0 %v725
    %1073 = vmatmul.mubr.bf16.gmra.mrb[0].mxu0 %v724
    %v1074 = vpop.f32.mrb[0].mxu0
    %v1075 = vadd.f32 %v773, %v1074
    %v1076 = vpop.f32.mrb[0].mxu0
    %v1077 = vadd.f32 %v777, %v1076
    %v1078 = vpop.f32.mrb[0].mxu0
    %v1079 = vadd.f32 %v773, %v1078
    %v1080 = vpop.f32.mrb[0].mxu0
    %v1081 = vadd.f32 %v777, %v1080
    %1082 = vmatprep.mubr.bf16.mxu0 %v727
    %1083 = vmatmul.mubr.bf16.gmra.mrb[0].mxu0 %v726
    %v1084 = vpop.f32.mrb[0].mxu0
    %v1085 = vadd.f32 %v773, %v1084
    %v1086 = vpop.f32.mrb[0].mxu0
    %v1087 = vadd.f32 %v777, %v1086
    %v1088 = vpop.f32.mrb[0].mxu0
    %v1089 = vadd.f32 %v773, %v1088
    %v1090 = vpop.f32.mrb[0].mxu0
    %v1091 = vadd.f32 %v777, %v1090
    %1092 = vmatprep.mubr.bf16.mxu0 %v729
    %1093 = vmatmul.mubr.bf16.gmra.mrb[0].mxu0 %v728
    %v1094 = vpop.f32.mrb[0].mxu0
    %v1095 = vadd.f32 %v773, %v1094
    %v1096 = vpop.f32.mrb[0].mxu0
    %v1097 = vadd.f32 %v777, %v1096
    %v1098 = vpop.f32.mrb[0].mxu0
    %v1099 = vadd.f32 %v773, %v1098
    %v1100 = vpop.f32.mrb[0].mxu0
    %v1101 = vadd.f32 %v777, %v1100
    %1102 = vmatprep.mubr.bf16.mxu0 %v731
    %1103 = vmatmul.mubr.bf16.gmra.mrb[0].mxu0 %v730
    %v1104 = vpop.f32.mrb[0].mxu0
    %v1105 = vadd.f32 %v773, %v1104
    %v1106 = vpop.f32.mrb[0].mxu0
    %v1107 = vadd.f32 %v777, %v1106
    %v1108 = vpop.f32.mrb[0].mxu0
    %v1109 = vadd.f32 %v773, %v1108
    %v1110 = vpop.f32.mrb[0].mxu0
    %v1111 = vadd.f32 %v777, %v1110
    %1112 = vmatprep.mubr.bf16.mxu0 %v733
    %1113 = vmatmul.mubr.bf16.gmra.mrb[0].mxu0 %v732
    %v1114 = vpop.f32.mrb[0].mxu0
    %v1115 = vadd.f32 %v773, %v1114
    %v1116 = vpop.f32.mrb[0].mxu0
    %v1117 = vadd.f32 %v777, %v1116
    %v1118 = vpop.f32.mrb[0].mxu0
    %v1119 = vadd.f32 %v773, %v1118
    %v1120 = vpop.f32.mrb[0].mxu0
    %v1121 = vadd.f32 %v777, %v1120
    %1122 = vmatprep.mubr.bf16.mxu0 %v735
    %1123 = vmatmul.mubr.bf16.gmra.mrb[0].mxu0 %v734
    %v1124 = vpop.f32.mrb[0].mxu0
    %v1125 = vadd.f32 %v773, %v1124
    %v1126 = vpop.f32.mrb[0].mxu0
    %v1127 = vadd.f32 %v777, %v1126
    %v1128 = vpop.f32.mrb[0].mxu0
    %v1129 = vadd.f32 %v773, %v1128
    %v1130 = vpop.f32.mrb[0].mxu0
    %v1131 = vadd.f32 %v777, %v1130
    %1132 = vdwg.mxu0
    %v1133 = vpack.c.bf16 %v979, %v975
    %v1134 = vpack.c.bf16 %v981, %v977
    %v1135 = vpack.c.bf16 %v989, %v985
    %v1136 = vpack.c.bf16 %v991, %v987
    %v1137 = vpack.c.bf16 %v999, %v995
    %v1138 = vpack.c.bf16 %v1001, %v997
    %v1139 = vpack.c.bf16 %v1009, %v1005
    %v1140 = vpack.c.bf16 %v1011, %v1007
    %v1141 = vpack.c.bf16 %v1019, %v1015
    %v1142 = vpack.c.bf16 %v1021, %v1017
    %v1143 = vpack.c.bf16 %v1029, %v1025
    %v1144 = vpack.c.bf16 %v1031, %v1027
    %v1145 = vpack.c.bf16 %v1039, %v1035
    %v1146 = vpack.c.bf16 %v1041, %v1037
    %v1147 = vpack.c.bf16 %v1049, %v1045
    %v1148 = vpack.c.bf16 %v1051, %v1047
    %v1149 = vpack.c.bf16 %v1059, %v1055
    %v1150 = vpack.c.bf16 %v1061, %v1057
    %v1151 = vpack.c.bf16 %v1069, %v1065
    %v1152 = vpack.c.bf16 %v1071, %v1067
    %v1153 = vpack.c.bf16 %v1079, %v1075
    %v1154 = vpack.c.bf16 %v1081, %v1077
    %v1155 = vpack.c.bf16 %v1089, %v1085
    %v1156 = vpack.c.bf16 %v1091, %v1087
    %v1157 = vpack.c.bf16 %v1099, %v1095
    %v1158 = vpack.c.bf16 %v1101, %v1097
    %v1159 = vpack.c.bf16 %v1109, %v1105
    %v1160 = vpack.c.bf16 %v1111, %v1107
    %v1161 = vpack.c.bf16 %v1119, %v1115
    %v1162 = vpack.c.bf16 %v1121, %v1117
    %v1163 = vpack.c.bf16 %v1129, %v1125
    %v1164 = vpack.c.bf16 %v1131, %v1127
    %v1165 = vmul.bf16 %v1133, 1056980736
    %v1166 = vmul.bf16 %v1134, 1056980736
    %v1167 = vmul.bf16 %v1135, 1056980736
    %v1168 = vmul.bf16 %v1136, 1056980736
    %v1169 = vmul.bf16 %v1137, 1056980736
    %v1170 = vmul.bf16 %v1138, 1056980736
    %v1171 = vmul.bf16 %v1139, 1056980736
    %v1172 = vmul.bf16 %v1140, 1056980736
    %v1173 = vmul.bf16 %v1141, 1056980736
    %v1174 = vmul.bf16 %v1142, 1056980736
    %v1175 = vmul.bf16 %v1143, 1056980736
    %v1176 = vmul.bf16 %v1144, 1056980736
    %v1177 = vmul.bf16 %v1145, 1056980736
    %v1178 = vmul.bf16 %v1146, 1056980736
    %v1179 = vmul.bf16 %v1147, 1056980736
    %v1180 = vmul.bf16 %v1148, 1056980736
    %v1181 = vmul.bf16 %v1149, 1056980736
    %v1182 = vmul.bf16 %v1150, 1056980736
    %v1183 = vmul.bf16 %v1151, 1056980736
    %v1184 = vmul.bf16 %v1152, 1056980736
    %v1185 = vmul.bf16 %v1153, 1056980736
    %v1186 = vmul.bf16 %v1154, 1056980736
    %v1187 = vmul.bf16 %v1155, 1056980736
    %v1188 = vmul.bf16 %v1156, 1056980736
    %v1189 = vmul.bf16 %v1157, 1056980736
    %v1190 = vmul.bf16 %v1158, 1056980736
    %v1191 = vmul.bf16 %v1159, 1056980736
    %v1192 = vmul.bf16 %v1160, 1056980736
    %v1193 = vmul.bf16 %v1161, 1056980736
    %v1194 = vmul.bf16 %v1162, 1056980736
    %v1195 = vmul.bf16 %v1163, 1056980736
    %v1196 = vmul.bf16 %v1164, 1056980736
    %v1197 = vmul.bf16 %v1133, 1027030327
    %v1198 = vmul.bf16 %v1134, 1027030327
    %v1199 = vmul.bf16 %v1135, 1027030327
    %v1200 = vmul.bf16 %v1136, 1027030327
    %v1201 = vmul.bf16 %v1137, 1027030327
    %v1202 = vmul.bf16 %v1138, 1027030327
    %v1203 = vmul.bf16 %v1139, 1027030327
    %v1204 = vmul.bf16 %v1140, 1027030327
    %v1205 = vmul.bf16 %v1141, 1027030327
    %v1206 = vmul.bf16 %v1142, 1027030327
    %v1207 = vmul.bf16 %v1143, 1027030327
    %v1208 = vmul.bf16 %v1144, 1027030327
    %v1209 = vmul.bf16 %v1145, 1027030327
    %v1210 = vmul.bf16 %v1146, 1027030327
    %v1211 = vmul.bf16 %v1147, 1027030327
    %v1212 = vmul.bf16 %v1148, 1027030327
    %v1213 = vmul.bf16 %v1149, 1027030327
    %v1214 = vmul.bf16 %v1150, 1027030327
    %v1215 = vmul.bf16 %v1151, 1027030327
    %v1216 = vmul.bf16 %v1152, 1027030327
    %v1217 = vmul.bf16 %v1153, 1027030327
    %v1218 = vmul.bf16 %v1154, 1027030327
    %v1219 = vmul.bf16 %v1155, 1027030327
    %v1220 = vmul.bf16 %v1156, 1027030327
    %v1221 = vmul.bf16 %v1157, 1027030327
    %v1222 = vmul.bf16 %v1158, 1027030327
    %v1223 = vmul.bf16 %v1159, 1027030327
    %v1224 = vmul.bf16 %v1160, 1027030327
    %v1225 = vmul.bf16 %v1161, 1027030327
    %v1226 = vmul.bf16 %v1162, 1027030327
    %v1227 = vmul.bf16 %v1163, 1027030327
    %v1228 = vmul.bf16 %v1164, 1027030327
    %v1229 = vmul.bf16 %v1197, %v1133
    %v1230 = vmul.bf16 %v1198, %v1134
    %v1231 = vmul.bf16 %v1199, %v1135
    %v1232 = vmul.bf16 %v1200, %v1136
    %v1233 = vmul.bf16 %v1201, %v1137
    %v1234 = vmul.bf16 %v1202, %v1138
    %v1235 = vmul.bf16 %v1203, %v1139
    %v1236 = vmul.bf16 %v1204, %v1140
    %v1237 = vmul.bf16 %v1205, %v1141
    %v1238 = vmul.bf16 %v1206, %v1142
    %v1239 = vmul.bf16 %v1207, %v1143
    %v1240 = vmul.bf16 %v1208, %v1144
    %v1241 = vmul.bf16 %v1209, %v1145
    %v1242 = vmul.bf16 %v1210, %v1146
    %v1243 = vmul.bf16 %v1211, %v1147
    %v1244 = vmul.bf16 %v1212, %v1148
    %v1245 = vmul.bf16 %v1213, %v1149
    %v1246 = vmul.bf16 %v1214, %v1150
    %v1247 = vmul.bf16 %v1215, %v1151
    %v1248 = vmul.bf16 %v1216, %v1152
    %v1249 = vmul.bf16 %v1217, %v1153
    %v1250 = vmul.bf16 %v1218, %v1154
    %v1251 = vmul.bf16 %v1219, %v1155
    %v1252 = vmul.bf16 %v1220, %v1156
    %v1253 = vmul.bf16 %v1221, %v1157
    %v1254 = vmul.bf16 %v1222, %v1158
    %v1255 = vmul.bf16 %v1223, %v1159
    %v1256 = vmul.bf16 %v1224, %v1160
    %v1257 = vmul.bf16 %v1225, %v1161
    %v1258 = vmul.bf16 %v1226, %v1162
    %v1259 = vmul.bf16 %v1227, %v1163
    %v1260 = vmul.bf16 %v1228, %v1164
    %v1261 = vmul.bf16 %v1229, %v1133
    %v1262 = vmul.bf16 %v1230, %v1134
    %v1263 = vmul.bf16 %v1231, %v1135
    %v1264 = vmul.bf16 %v1232, %v1136
    %v1265 = vmul.bf16 %v1233, %v1137
    %v1266 = vmul.bf16 %v1234, %v1138
    %v1267 = vmul.bf16 %v1235, %v1139
    %v1268 = vmul.bf16 %v1236, %v1140
    %v1269 = vmul.bf16 %v1237, %v1141
    %v1270 = vmul.bf16 %v1238, %v1142
    %v1271 = vmul.bf16 %v1239, %v1143
    %v1272 = vmul.bf16 %v1240, %v1144
    %v1273 = vmul.bf16 %v1241, %v1145
    %v1274 = vmul.bf16 %v1242, %v1146
    %v1275 = vmul.bf16 %v1243, %v1147
    %v1276 = vmul.bf16 %v1244, %v1148
    %v1277 = vmul.bf16 %v1245, %v1149
    %v1278 = vmul.bf16 %v1246, %v1150
    %v1279 = vmul.bf16 %v1247, %v1151
    %v1280 = vmul.bf16 %v1248, %v1152
    %v1281 = vmul.bf16 %v1249, %v1153
    %v1282 = vmul.bf16 %v1250, %v1154
    %v1283 = vmul.bf16 %v1251, %v1155
    %v1284 = vmul.bf16 %v1252, %v1156
    %v1285 = vmul.bf16 %v1253, %v1157
    %v1286 = vmul.bf16 %v1254, %v1158
    %v1287 = vmul.bf16 %v1255, %v1159
    %v1288 = vmul.bf16 %v1256, %v1160
    %v1289 = vmul.bf16 %v1257, %v1161
    %v1290 = vmul.bf16 %v1258, %v1162
    %v1291 = vmul.bf16 %v1259, %v1163
    %v1292 = vmul.bf16 %v1260, %v1164
    %v1293 = vadd.bf16 %v1133, %v1261
    %v1294 = vadd.bf16 %v1134, %v1262
    %v1295 = vadd.bf16 %v1135, %v1263
    %v1296 = vadd.bf16 %v1136, %v1264
    %v1297 = vadd.bf16 %v1137, %v1265
    %v1298 = vadd.bf16 %v1138, %v1266
    %v1299 = vadd.bf16 %v1139, %v1267
    %v1300 = vadd.bf16 %v1140, %v1268
    %v1301 = vadd.bf16 %v1141, %v1269
    %v1302 = vadd.bf16 %v1142, %v1270
    %v1303 = vadd.bf16 %v1143, %v1271
    %v1304 = vadd.bf16 %v1144, %v1272
    %v1305 = vadd.bf16 %v1145, %v1273
    %v1306 = vadd.bf16 %v1146, %v1274
    %v1307 = vadd.bf16 %v1147, %v1275
    %v1308 = vadd.bf16 %v1148, %v1276
    %v1309 = vadd.bf16 %v1149, %v1277
    %v1310 = vadd.bf16 %v1150, %v1278
    %v1311 = vadd.bf16 %v1151, %v1279
    %v1312 = vadd.bf16 %v1152, %v1280
    %v1313 = vadd.bf16 %v1153, %v1281
    %v1314 = vadd.bf16 %v1154, %v1282
    %v1315 = vadd.bf16 %v1155, %v1283
    %v1316 = vadd.bf16 %v1156, %v1284
    %v1317 = vadd.bf16 %v1157, %v1285
    %v1318 = vadd.bf16 %v1158, %v1286
    %v1319 = vadd.bf16 %v1159, %v1287
    %v1320 = vadd.bf16 %v1160, %v1288
    %v1321 = vadd.bf16 %v1161, %v1289
    %v1322 = vadd.bf16 %v1162, %v1290
    %v1323 = vadd.bf16 %v1163, %v1291
    %v1324 = vadd.bf16 %v1164, %v1292
    %v1325 = vmul.bf16 %v1293, 1061961548
    %v1326 = vmul.bf16 %v1294, 1061961548
    %v1327 = vmul.bf16 %v1295, 1061961548
    %v1328 = vmul.bf16 %v1296, 1061961548
    %v1329 = vmul.bf16 %v1297, 1061961548
    %v1330 = vmul.bf16 %v1298, 1061961548
    %v1331 = vmul.bf16 %v1299, 1061961548
    %v1332 = vmul.bf16 %v1300, 1061961548
    %v1333 = vmul.bf16 %v1301, 1061961548
    %v1334 = vmul.bf16 %v1302, 1061961548
    %v1335 = vmul.bf16 %v1303, 1061961548
    %v1336 = vmul.bf16 %v1304, 1061961548
    %v1337 = vmul.bf16 %v1305, 1061961548
    %v1338 = vmul.bf16 %v1306, 1061961548
    %v1339 = vmul.bf16 %v1307, 1061961548
    %v1340 = vmul.bf16 %v1308, 1061961548
    %v1341 = vmul.bf16 %v1309, 1061961548
    %v1342 = vmul.bf16 %v1310, 1061961548
    %v1343 = vmul.bf16 %v1311, 1061961548
    %v1344 = vmul.bf16 %v1312, 1061961548
    %v1345 = vmul.bf16 %v1313, 1061961548
    %v1346 = vmul.bf16 %v1314, 1061961548
    %v1347 = vmul.bf16 %v1315, 1061961548
    %v1348 = vmul.bf16 %v1316, 1061961548
    %v1349 = vmul.bf16 %v1317, 1061961548
    %v1350 = vmul.bf16 %v1318, 1061961548
    %v1351 = vmul.bf16 %v1319, 1061961548
    %v1352 = vmul.bf16 %v1320, 1061961548
    %v1353 = vmul.bf16 %v1321, 1061961548
    %v1354 = vmul.bf16 %v1322, 1061961548
    %v1355 = vmul.bf16 %v1323, 1061961548
    %v1356 = vmul.bf16 %v1324, 1061961548
    %v1357 = vtanh.bf16.pop %v1325
    %v1358 = vtanh.bf16.pop %v1326
    %v1359 = vtanh.bf16.pop %v1327
    %v1360 = vtanh.bf16.pop %v1328
    %v1361 = vtanh.bf16.pop %v1329
    %v1362 = vtanh.bf16.pop %v1330
    %v1363 = vtanh.bf16.pop %v1331
    %v1364 = vtanh.bf16.pop %v1332
    %v1365 = vtanh.bf16.pop %v1333
    %v1366 = vtanh.bf16.pop %v1334
    %v1367 = vtanh.bf16.pop %v1335
    %v1368 = vtanh.bf16.pop %v1336
    %v1369 = vtanh.bf16.pop %v1337
    %v1370 = vtanh.bf16.pop %v1338
    %v1371 = vtanh.bf16.pop %v1339
    %v1372 = vtanh.bf16.pop %v1340
    %v1373 = vtanh.bf16.pop %v1341
    %v1374 = vtanh.bf16.pop %v1342
    %v1375 = vtanh.bf16.pop %v1343
    %v1376 = vtanh.bf16.pop %v1344
    %v1377 = vtanh.bf16.pop %v1345
    %v1378 = vtanh.bf16.pop %v1346
    %v1379 = vtanh.bf16.pop %v1347
    %v1380 = vtanh.bf16.pop %v1348
    %v1381 = vtanh.bf16.pop %v1349
    %v1382 = vtanh.bf16.pop %v1350
    %v1383 = vtanh.bf16.pop %v1351
    %v1384 = vtanh.bf16.pop %v1352
    %v1385 = vtanh.bf16.pop %v1353
    %v1386 = vtanh.bf16.pop %v1354
    %v1387 = vtanh.bf16.pop %v1355
    %v1388 = vtanh.bf16.pop %v1356
    %v1389 = vadd.bf16 %v1357, 1065369472
    %v1390 = vadd.bf16 %v1358, 1065369472
    %v1391 = vadd.bf16 %v1359, 1065369472
    %v1392 = vadd.bf16 %v1360, 1065369472
    %v1393 = vadd.bf16 %v1361, 1065369472
    %v1394 = vadd.bf16 %v1362, 1065369472
    %v1395 = vadd.bf16 %v1363, 1065369472
    %v1396 = vadd.bf16 %v1364, 1065369472
    %v1397 = vadd.bf16 %v1365, 1065369472
    %v1398 = vadd.bf16 %v1366, 1065369472
    %v1399 = vadd.bf16 %v1367, 1065369472
    %v1400 = vadd.bf16 %v1368, 1065369472
    %v1401 = vadd.bf16 %v1369, 1065369472
    %v1402 = vadd.bf16 %v1370, 1065369472
    %v1403 = vadd.bf16 %v1371, 1065369472
    %v1404 = vadd.bf16 %v1372, 1065369472
    %v1405 = vadd.bf16 %v1373, 1065369472
    %v1406 = vadd.bf16 %v1374, 1065369472
    %v1407 = vadd.bf16 %v1375, 1065369472
    %v1408 = vadd.bf16 %v1376, 1065369472
    %v1409 = vadd.bf16 %v1377, 1065369472
    %v1410 = vadd.bf16 %v1378, 1065369472
    %v1411 = vadd.bf16 %v1379, 1065369472
    %v1412 = vadd.bf16 %v1380, 1065369472
    %v1413 = vadd.bf16 %v1381, 1065369472
    %v1414 = vadd.bf16 %v1382, 1065369472
    %v1415 = vadd.bf16 %v1383, 1065369472
    %v1416 = vadd.bf16 %v1384, 1065369472
    %v1417 = vadd.bf16 %v1385, 1065369472
    %v1418 = vadd.bf16 %v1386, 1065369472
    %v1419 = vadd.bf16 %v1387, 1065369472
    %v1420 = vadd.bf16 %v1388, 1065369472
    %v1421 = vmul.bf16 %v1165, %v1389
    %v1422 = vmul.bf16 %v1166, %v1390
    %v1423 = vmul.bf16 %v1167, %v1391
    %v1424 = vmul.bf16 %v1168, %v1392
    %v1425 = vmul.bf16 %v1169, %v1393
    %v1426 = vmul.bf16 %v1170, %v1394
    %v1427 = vmul.bf16 %v1171, %v1395
    %v1428 = vmul.bf16 %v1172, %v1396
    %v1429 = vmul.bf16 %v1173, %v1397
    %v1430 = vmul.bf16 %v1174, %v1398
    %v1431 = vmul.bf16 %v1175, %v1399
    %v1432 = vmul.bf16 %v1176, %v1400
    %v1433 = vmul.bf16 %v1177, %v1401
    %v1434 = vmul.bf16 %v1178, %v1402
    %v1435 = vmul.bf16 %v1179, %v1403
    %v1436 = vmul.bf16 %v1180, %v1404
    %v1437 = vmul.bf16 %v1181, %v1405
    %v1438 = vmul.bf16 %v1182, %v1406
    %v1439 = vmul.bf16 %v1183, %v1407
    %v1440 = vmul.bf16 %v1184, %v1408
    %v1441 = vmul.bf16 %v1185, %v1409
    %v1442 = vmul.bf16 %v1186, %v1410
    %v1443 = vmul.bf16 %v1187, %v1411
    %v1444 = vmul.bf16 %v1188, %v1412
    %v1445 = vmul.bf16 %v1189, %v1413
    %v1446 = vmul.bf16 %v1190, %v1414
    %v1447 = vmul.bf16 %v1191, %v1415
    %v1448 = vmul.bf16 %v1192, %v1416
    %v1449 = vmul.bf16 %v1193, %v1417
    %v1450 = vmul.bf16 %v1194, %v1418
    %v1451 = vmul.bf16 %v1195, %v1419
    %v1452 = vmul.bf16 %v1196, %v1420
    %v1453 = vld [vmem:[#allocation5] sm:$0xff]
    %v1454 = vld [vmem:[#allocation5 + $0x8] sm:$0xff]
    %v1455 = vld [vmem:[#allocation5 + $0x10] sm:$0xff]
    %v1456 = vld [vmem:[#allocation5 + $0x18] sm:$0xff]
    %v1457 = vld [vmem:[#allocation5 + $0x20] sm:$0xff]
    %v1458 = vld [vmem:[#allocation5 + $0x28] sm:$0xff]
    %v1459 = vld [vmem:[#allocation5 + $0x30] sm:$0xff]
    %v1460 = vld [vmem:[#allocation5 + $0x38] sm:$0xff]
    %v1461 = vld [vmem:[#allocation5 + $0x40] sm:$0xff]
    %v1462 = vld [vmem:[#allocation5 + $0x48] sm:$0xff]
    %v1463 = vld [vmem:[#allocation5 + $0x50] sm:$0xff]
    %v1464 = vld [vmem:[#allocation5 + $0x58] sm:$0xff]
    %v1465 = vld [vmem:[#allocation5 + $0x60] sm:$0xff]
    %v1466 = vld [vmem:[#allocation5 + $0x68] sm:$0xff]
    %v1467 = vld [vmem:[#allocation5 + $0x70] sm:$0xff]
    %v1468 = vld [vmem:[#allocation5 + $0x78] sm:$0xff]
    %v1469 = vld [vmem:[#allocation5 + $0x80] sm:$0xff]
    %v1470 = vld [vmem:[#allocation5 + $0x88] sm:$0xff]
    %v1471 = vld [vmem:[#allocation5 + $0x90] sm:$0xff]
    %v1472 = vld [vmem:[#allocation5 + $0x98] sm:$0xff]
    %v1473 = vld [vmem:[#allocation5 + $0xa0] sm:$0xff]
    %v1474 = vld [vmem:[#allocation5 + $0xa8] sm:$0xff]
    %v1475 = vld [vmem:[#allocation5 + $0xb0] sm:$0xff]
    %v1476 = vld [vmem:[#allocation5 + $0xb8] sm:$0xff]
    %v1477 = vld [vmem:[#allocation5 + $0xc0] sm:$0xff]
    %v1478 = vld [vmem:[#allocation5 + $0xc8] sm:$0xff]
    %v1479 = vld [vmem:[#allocation5 + $0xd0] sm:$0xff]
    %v1480 = vld [vmem:[#allocation5 + $0xd8] sm:$0xff]
    %v1481 = vld [vmem:[#allocation5 + $0xe0] sm:$0xff]
    %v1482 = vld [vmem:[#allocation5 + $0xe8] sm:$0xff]
    %v1483 = vld [vmem:[#allocation5 + $0xf0] sm:$0xff]
    %v1484 = vld [vmem:[#allocation5 + $0xf8] sm:$0xff]
    %v1485 = vld [vmem:[%s6] sm:$0x3]
    %v1487 = vlaneseq
    %v1488 = vshrl.u32 %v1487, 7
    %v1489 = vsub.s32 0, %v1488
    %v1490 = vrot.slane %v1485, %v1489
    %v1491 = vlaneseq
    %v1492 = vshrl.u32 %v1491, 7
    %v1493 = vsub.s32 1, %v1492
    %v1494 = vrot.slane %v1485, %v1493
    %v1529 = vunpack.c.l.b16 %v1453
    %v1530 = vunpack.c.h.b16 %v1453
    %v1531 = vunpack.c.l.b16 %v1454
    %v1532 = vunpack.c.h.b16 %v1454
    %v1533 = vunpack.c.l.b16 %v1455
    %v1534 = vunpack.c.h.b16 %v1455
    %v1535 = vunpack.c.l.b16 %v1456
    %v1536 = vunpack.c.h.b16 %v1456
    %v1537 = vunpack.c.l.b16 %v1457
    %v1538 = vunpack.c.h.b16 %v1457
    %v1539 = vunpack.c.l.b16 %v1458
    %v1540 = vunpack.c.h.b16 %v1458
    %v1541 = vunpack.c.l.b16 %v1459
    %v1542 = vunpack.c.h.b16 %v1459
    %v1543 = vunpack.c.l.b16 %v1460
    %v1544 = vunpack.c.h.b16 %v1460
    %v1545 = vunpack.c.l.b16 %v1461
    %v1546 = vunpack.c.h.b16 %v1461
    %v1547 = vunpack.c.l.b16 %v1462
    %v1548 = vunpack.c.h.b16 %v1462
    %v1549 = vunpack.c.l.b16 %v1463
    %v1550 = vunpack.c.h.b16 %v1463
    %v1551 = vunpack.c.l.b16 %v1464
    %v1552 = vunpack.c.h.b16 %v1464
    %v1553 = vunpack.c.l.b16 %v1465
    %v1554 = vunpack.c.h.b16 %v1465
    %v1555 = vunpack.c.l.b16 %v1466
    %v1556 = vunpack.c.h.b16 %v1466
    %v1557 = vunpack.c.l.b16 %v1467
    %v1558 = vunpack.c.h.b16 %v1467
    %v1559 = vunpack.c.l.b16 %v1468
    %v1560 = vunpack.c.h.b16 %v1468
    %v1561 = vunpack.c.l.b16 %v1469
    %v1562 = vunpack.c.h.b16 %v1469
    %v1563 = vunpack.c.l.b16 %v1470
    %v1564 = vunpack.c.h.b16 %v1470
    %v1565 = vunpack.c.l.b16 %v1471
    %v1566 = vunpack.c.h.b16 %v1471
    %v1567 = vunpack.c.l.b16 %v1472
    %v1568 = vunpack.c.h.b16 %v1472
    %v1569 = vunpack.c.l.b16 %v1473
    %v1570 = vunpack.c.h.b16 %v1473
    %v1571 = vunpack.c.l.b16 %v1474
    %v1572 = vunpack.c.h.b16 %v1474
    %v1573 = vunpack.c.l.b16 %v1475
    %v1574 = vunpack.c.h.b16 %v1475
    %v1575 = vunpack.c.l.b16 %v1476
    %v1576 = vunpack.c.h.b16 %v1476
    %v1577 = vunpack.c.l.b16 %v1477
    %v1578 = vunpack.c.h.b16 %v1477
    %v1579 = vunpack.c.l.b16 %v1478
    %v1580 = vunpack.c.h.b16 %v1478
    %v1581 = vunpack.c.l.b16 %v1479
    %v1582 = vunpack.c.h.b16 %v1479
    %v1583 = vunpack.c.l.b16 %v1480
    %v1584 = vunpack.c.h.b16 %v1480
    %v1585 = vunpack.c.l.b16 %v1481
    %v1586 = vunpack.c.h.b16 %v1481
    %v1587 = vunpack.c.l.b16 %v1482
    %v1588 = vunpack.c.h.b16 %v1482
    %v1589 = vunpack.c.l.b16 %v1483
    %v1590 = vunpack.c.h.b16 %v1483
    %v1591 = vunpack.c.l.b16 %v1484
    %v1592 = vunpack.c.h.b16 %v1484
    %v1593 = vpack.c.b16 %v1531, %v1529
    %v1594 = vpack.c.b16 %v1532, %v1530
    %v1595 = vpack.c.b16 %v1535, %v1533
    %v1596 = vpack.c.b16 %v1536, %v1534
    %v1597 = vpack.c.b16 %v1539, %v1537
    %v1598 = vpack.c.b16 %v1540, %v1538
    %v1599 = vpack.c.b16 %v1543, %v1541
    %v1600 = vpack.c.b16 %v1544, %v1542
    %v1601 = vpack.c.b16 %v1547, %v1545
    %v1602 = vpack.c.b16 %v1548, %v1546
    %v1603 = vpack.c.b16 %v1551, %v1549
    %v1604 = vpack.c.b16 %v1552, %v1550
    %v1605 = vpack.c.b16 %v1555, %v1553
    %v1606 = vpack.c.b16 %v1556, %v1554
    %v1607 = vpack.c.b16 %v1559, %v1557
    %v1608 = vpack.c.b16 %v1560, %v1558
    %v1609 = vpack.c.b16 %v1563, %v1561
    %v1610 = vpack.c.b16 %v1564, %v1562
    %v1611 = vpack.c.b16 %v1567, %v1565
    %v1612 = vpack.c.b16 %v1568, %v1566
    %v1613 = vpack.c.b16 %v1571, %v1569
    %v1614 = vpack.c.b16 %v1572, %v1570
    %v1615 = vpack.c.b16 %v1575, %v1573
    %v1616 = vpack.c.b16 %v1576, %v1574
    %v1617 = vpack.c.b16 %v1579, %v1577
    %v1618 = vpack.c.b16 %v1580, %v1578
    %v1619 = vpack.c.b16 %v1583, %v1581
    %v1620 = vpack.c.b16 %v1584, %v1582
    %v1621 = vpack.c.b16 %v1587, %v1585
    %v1622 = vpack.c.b16 %v1588, %v1586
    %v1623 = vpack.c.b16 %v1591, %v1589
    %v1624 = vpack.c.b16 %v1592, %v1590
    %1657 = vmatprep.subr.bf16.mxu0 %v1594
    %1658 = vmatpush1.bf16.msra.mxu0 %v1593
    %1659 = vmatprep.subr.bf16.mxu0 %v1596
    %1660 = vmatpush1.bf16.msra.mxu0 %v1595
    %1661 = vmatprep.subr.bf16.mxu0 %v1598
    %1662 = vmatpush1.bf16.msra.mxu0 %v1597
    %1663 = vmatprep.subr.bf16.mxu0 %v1600
    %1664 = vmatpush1.bf16.msra.mxu0 %v1599
    %1665 = vmatprep.subr.bf16.mxu0 %v1602
    %1666 = vmatpush1.bf16.msra.mxu0 %v1601
    %1667 = vmatprep.subr.bf16.mxu0 %v1604
    %1668 = vmatpush1.bf16.msra.mxu0 %v1603
    %1669 = vmatprep.subr.bf16.mxu0 %v1606
    %1670 = vmatpush1.bf16.msra.mxu0 %v1605
    %1671 = vmatprep.subr.bf16.mxu0 %v1608
    %1672 = vmatpush1.bf16.msra.mxu0 %v1607
    %1673 = vmatprep.subr.bf16.mxu0 %v1610
    %1674 = vmatpush1.bf16.msra.mxu0 %v1609
    %1675 = vmatprep.subr.bf16.mxu0 %v1612
    %1676 = vmatpush1.bf16.msra.mxu0 %v1611
    %1677 = vmatprep.subr.bf16.mxu0 %v1614
    %1678 = vmatpush1.bf16.msra.mxu0 %v1613
    %1679 = vmatprep.subr.bf16.mxu0 %v1616
    %1680 = vmatpush1.bf16.msra.mxu0 %v1615
    %1681 = vmatprep.subr.bf16.mxu0 %v1618
    %1682 = vmatpush1.bf16.msra.mxu0 %v1617
    %1683 = vmatprep.subr.bf16.mxu0 %v1620
    %1684 = vmatpush1.bf16.msra.mxu0 %v1619
    %1685 = vmatprep.subr.bf16.mxu0 %v1622
    %1686 = vmatpush1.bf16.msra.mxu0 %v1621
    %1687 = vmatprep.subr.bf16.mxu0 %v1624
    %1688 = vmatpush1.bf16.msra.mxu0 %v1623
    %1689 = vmatprep.mubr.bf16.mxu0 %v1422
    %1690 = vmatmul.mubr.bf16.gmra.mrb[0].mxu0 %v1421
    %v1691 = vpop.f32.mrb[0].mxu0
    %v1692 = vadd.f32 %v1490, %v1691
    %v1693 = vpop.f32.mrb[0].mxu0
    %v1694 = vadd.f32 %v1494, %v1693
    %v1695 = vpop.f32.mrb[0].mxu0
    %v1696 = vadd.f32 %v1490, %v1695
    %v1697 = vpop.f32.mrb[0].mxu0
    %v1698 = vadd.f32 %v1494, %v1697
    %1699 = vmatprep.mubr.bf16.mxu0 %v1424
    %1700 = vmatmul.mubr.bf16.gmra.mrb[0].mxu0 %v1423
    %v1701 = vpop.f32.mrb[0].mxu0
    %v1702 = vadd.f32 %v1490, %v1701
    %v1703 = vpop.f32.mrb[0].mxu0
    %v1704 = vadd.f32 %v1494, %v1703
    %v1705 = vpop.f32.mrb[0].mxu0
    %v1706 = vadd.f32 %v1490, %v1705
    %v1707 = vpop.f32.mrb[0].mxu0
    %v1708 = vadd.f32 %v1494, %v1707
    %1709 = vmatprep.mubr.bf16.mxu0 %v1426
    %1710 = vmatmul.mubr.bf16.gmra.mrb[0].mxu0 %v1425
    %v1711 = vpop.f32.mrb[0].mxu0
    %v1712 = vadd.f32 %v1490, %v1711
    %v1713 = vpop.f32.mrb[0].mxu0
    %v1714 = vadd.f32 %v1494, %v1713
    %v1715 = vpop.f32.mrb[0].mxu0
    %v1716 = vadd.f32 %v1490, %v1715
    %v1717 = vpop.f32.mrb[0].mxu0
    %v1718 = vadd.f32 %v1494, %v1717
    %1719 = vmatprep.mubr.bf16.mxu0 %v1428
    %1720 = vmatmul.mubr.bf16.gmra.mrb[0].mxu0 %v1427
    %v1721 = vpop.f32.mrb[0].mxu0
    %v1722 = vadd.f32 %v1490, %v1721
    %v1723 = vpop.f32.mrb[0].mxu0
    %v1724 = vadd.f32 %v1494, %v1723
    %v1725 = vpop.f32.mrb[0].mxu0
    %v1726 = vadd.f32 %v1490, %v1725
    %v1727 = vpop.f32.mrb[0].mxu0
    %v1728 = vadd.f32 %v1494, %v1727
    %1729 = vmatprep.mubr.bf16.mxu0 %v1430
    %1730 = vmatmul.mubr.bf16.gmra.mrb[0].mxu0 %v1429
    %v1731 = vpop.f32.mrb[0].mxu0
    %v1732 = vadd.f32 %v1490, %v1731
    %v1733 = vpop.f32.mrb[0].mxu0
    %v1734 = vadd.f32 %v1494, %v1733
    %v1735 = vpop.f32.mrb[0].mxu0
    %v1736 = vadd.f32 %v1490, %v1735
    %v1737 = vpop.f32.mrb[0].mxu0
    %v1738 = vadd.f32 %v1494, %v1737
    %1739 = vmatprep.mubr.bf16.mxu0 %v1432
    %1740 = vmatmul.mubr.bf16.gmra.mrb[0].mxu0 %v1431
    %v1741 = vpop.f32.mrb[0].mxu0
    %v1742 = vadd.f32 %v1490, %v1741
    %v1743 = vpop.f32.mrb[0].mxu0
    %v1744 = vadd.f32 %v1494, %v1743
    %v1745 = vpop.f32.mrb[0].mxu0
    %v1746 = vadd.f32 %v1490, %v1745
    %v1747 = vpop.f32.mrb[0].mxu0
    %v1748 = vadd.f32 %v1494, %v1747
    %1749 = vmatprep.mubr.bf16.mxu0 %v1434
    %1750 = vmatmul.mubr.bf16.gmra.mrb[0].mxu0 %v1433
    %v1751 = vpop.f32.mrb[0].mxu0
    %v1752 = vadd.f32 %v1490, %v1751
    %v1753 = vpop.f32.mrb[0].mxu0
    %v1754 = vadd.f32 %v1494, %v1753
    %v1755 = vpop.f32.mrb[0].mxu0
    %v1756 = vadd.f32 %v1490, %v1755
    %v1757 = vpop.f32.mrb[0].mxu0
    %v1758 = vadd.f32 %v1494, %v1757
    %1759 = vmatprep.mubr.bf16.mxu0 %v1436
    %1760 = vmatmul.mubr.bf16.gmra.mrb[0].mxu0 %v1435
    %v1761 = vpop.f32.mrb[0].mxu0
    %v1762 = vadd.f32 %v1490, %v1761
    %v1763 = vpop.f32.mrb[0].mxu0
    %v1764 = vadd.f32 %v1494, %v1763
    %v1765 = vpop.f32.mrb[0].mxu0
    %v1766 = vadd.f32 %v1490, %v1765
    %v1767 = vpop.f32.mrb[0].mxu0
    %v1768 = vadd.f32 %v1494, %v1767
    %1769 = vmatprep.mubr.bf16.mxu0 %v1438
    %1770 = vmatmul.mubr.bf16.gmra.mrb[0].mxu0 %v1437
    %v1771 = vpop.f32.mrb[0].mxu0
    %v1772 = vadd.f32 %v1490, %v1771
    %v1773 = vpop.f32.mrb[0].mxu0
    %v1774 = vadd.f32 %v1494, %v1773
    %v1775 = vpop.f32.mrb[0].mxu0
    %v1776 = vadd.f32 %v1490, %v1775
    %v1777 = vpop.f32.mrb[0].mxu0
    %v1778 = vadd.f32 %v1494, %v1777
    %1779 = vmatprep.mubr.bf16.mxu0 %v1440
    %1780 = vmatmul.mubr.bf16.gmra.mrb[0].mxu0 %v1439
    %v1781 = vpop.f32.mrb[0].mxu0
    %v1782 = vadd.f32 %v1490, %v1781
    %v1783 = vpop.f32.mrb[0].mxu0
    %v1784 = vadd.f32 %v1494, %v1783
    %v1785 = vpop.f32.mrb[0].mxu0
    %v1786 = vadd.f32 %v1490, %v1785
    %v1787 = vpop.f32.mrb[0].mxu0
    %v1788 = vadd.f32 %v1494, %v1787
    %1789 = vmatprep.mubr.bf16.mxu0 %v1442
    %1790 = vmatmul.mubr.bf16.gmra.mrb[0].mxu0 %v1441
    %v1791 = vpop.f32.mrb[0].mxu0
    %v1792 = vadd.f32 %v1490, %v1791
    %v1793 = vpop.f32.mrb[0].mxu0
    %v1794 = vadd.f32 %v1494, %v1793
    %v1795 = vpop.f32.mrb[0].mxu0
    %v1796 = vadd.f32 %v1490, %v1795
    %v1797 = vpop.f32.mrb[0].mxu0
    %v1798 = vadd.f32 %v1494, %v1797
    %1799 = vmatprep.mubr.bf16.mxu0 %v1444
    %1800 = vmatmul.mubr.bf16.gmra.mrb[0].mxu0 %v1443
    %v1801 = vpop.f32.mrb[0].mxu0
    %v1802 = vadd.f32 %v1490, %v1801
    %v1803 = vpop.f32.mrb[0].mxu0
    %v1804 = vadd.f32 %v1494, %v1803
    %v1805 = vpop.f32.mrb[0].mxu0
    %v1806 = vadd.f32 %v1490, %v1805
    %v1807 = vpop.f32.mrb[0].mxu0
    %v1808 = vadd.f32 %v1494, %v1807
    %1809 = vmatprep.mubr.bf16.mxu0 %v1446
    %1810 = vmatmul.mubr.bf16.gmra.mrb[0].mxu0 %v1445
    %v1811 = vpop.f32.mrb[0].mxu0
    %v1812 = vadd.f32 %v1490, %v1811
    %v1813 = vpop.f32.mrb[0].mxu0
    %v1814 = vadd.f32 %v1494, %v1813
    %v1815 = vpop.f32.mrb[0].mxu0
    %v1816 = vadd.f32 %v1490, %v1815
    %v1817 = vpop.f32.mrb[0].mxu0
    %v1818 = vadd.f32 %v1494, %v1817
    %1819 = vmatprep.mubr.bf16.mxu0 %v1448
    %1820 = vmatmul.mubr.bf16.gmra.mrb[0].mxu0 %v1447
    %v1821 = vpop.f32.mrb[0].mxu0
    %v1822 = vadd.f32 %v1490, %v1821
    %v1823 = vpop.f32.mrb[0].mxu0
    %v1824 = vadd.f32 %v1494, %v1823
    %v1825 = vpop.f32.mrb[0].mxu0
    %v1826 = vadd.f32 %v1490, %v1825
    %v1827 = vpop.f32.mrb[0].mxu0
    %v1828 = vadd.f32 %v1494, %v1827
    %1829 = vmatprep.mubr.bf16.mxu0 %v1450
    %1830 = vmatmul.mubr.bf16.gmra.mrb[0].mxu0 %v1449
    %v1831 = vpop.f32.mrb[0].mxu0
    %v1832 = vadd.f32 %v1490, %v1831
    %v1833 = vpop.f32.mrb[0].mxu0
    %v1834 = vadd.f32 %v1494, %v1833
    %v1835 = vpop.f32.mrb[0].mxu0
    %v1836 = vadd.f32 %v1490, %v1835
    %v1837 = vpop.f32.mrb[0].mxu0
    %v1838 = vadd.f32 %v1494, %v1837
    %1839 = vmatprep.mubr.bf16.mxu0 %v1452
    %1840 = vmatmul.mubr.bf16.gmra.mrb[0].mxu0 %v1451
    %v1841 = vpop.f32.mrb[0].mxu0
    %v1842 = vadd.f32 %v1490, %v1841
    %v1843 = vpop.f32.mrb[0].mxu0
    %v1844 = vadd.f32 %v1494, %v1843
    %v1845 = vpop.f32.mrb[0].mxu0
    %v1846 = vadd.f32 %v1490, %v1845
    %v1847 = vpop.f32.mrb[0].mxu0
    %v1848 = vadd.f32 %v1494, %v1847
    %1849 = vdwg.mxu0
    %v1850 = vpack.c.bf16 %v1696, %v1692
    %v1851 = vpack.c.bf16 %v1698, %v1694
    %v1852 = vpack.c.bf16 %v1706, %v1702
    %v1853 = vpack.c.bf16 %v1708, %v1704
    %v1854 = vpack.c.bf16 %v1716, %v1712
    %v1855 = vpack.c.bf16 %v1718, %v1714
    %v1856 = vpack.c.bf16 %v1726, %v1722
    %v1857 = vpack.c.bf16 %v1728, %v1724
    %v1858 = vpack.c.bf16 %v1736, %v1732
    %v1859 = vpack.c.bf16 %v1738, %v1734
    %v1860 = vpack.c.bf16 %v1746, %v1742
    %v1861 = vpack.c.bf16 %v1748, %v1744
    %v1862 = vpack.c.bf16 %v1756, %v1752
    %v1863 = vpack.c.bf16 %v1758, %v1754
    %v1864 = vpack.c.bf16 %v1766, %v1762
    %v1865 = vpack.c.bf16 %v1768, %v1764
    %v1866 = vpack.c.bf16 %v1776, %v1772
    %v1867 = vpack.c.bf16 %v1778, %v1774
    %v1868 = vpack.c.bf16 %v1786, %v1782
    %v1869 = vpack.c.bf16 %v1788, %v1784
    %v1870 = vpack.c.bf16 %v1796, %v1792
    %v1871 = vpack.c.bf16 %v1798, %v1794
    %v1872 = vpack.c.bf16 %v1806, %v1802
    %v1873 = vpack.c.bf16 %v1808, %v1804
    %v1874 = vpack.c.bf16 %v1816, %v1812
    %v1875 = vpack.c.bf16 %v1818, %v1814
    %v1876 = vpack.c.bf16 %v1826, %v1822
    %v1877 = vpack.c.bf16 %v1828, %v1824
    %v1878 = vpack.c.bf16 %v1836, %v1832
    %v1879 = vpack.c.bf16 %v1838, %v1834
    %v1880 = vpack.c.bf16 %v1846, %v1842
    %v1881 = vpack.c.bf16 %v1848, %v1844
    %v1882 = vmul.bf16 %v1850, 1056980736
    %v1883 = vmul.bf16 %v1851, 1056980736
    %v1884 = vmul.bf16 %v1852, 1056980736
    %v1885 = vmul.bf16 %v1853, 1056980736
    %v1886 = vmul.bf16 %v1854, 1056980736
    %v1887 = vmul.bf16 %v1855, 1056980736
    %v1888 = vmul.bf16 %v1856, 1056980736
    %v1889 = vmul.bf16 %v1857, 1056980736
    %v1890 = vmul.bf16 %v1858, 1056980736
    %v1891 = vmul.bf16 %v1859, 1056980736
    %v1892 = vmul.bf16 %v1860, 1056980736
    %v1893 = vmul.bf16 %v1861, 1056980736
    %v1894 = vmul.bf16 %v1862, 1056980736
    %v1895 = vmul.bf16 %v1863, 1056980736
    %v1896 = vmul.bf16 %v1864, 1056980736
    %v1897 = vmul.bf16 %v1865, 1056980736
    %v1898 = vmul.bf16 %v1866, 1056980736
    %v1899 = vmul.bf16 %v1867, 1056980736
    %v1900 = vmul.bf16 %v1868, 1056980736
    %v1901 = vmul.bf16 %v1869, 1056980736
    %v1902 = vmul.bf16 %v1870, 1056980736
    %v1903 = vmul.bf16 %v1871, 1056980736
    %v1904 = vmul.bf16 %v1872, 1056980736
    %v1905 = vmul.bf16 %v1873, 1056980736
    %v1906 = vmul.bf16 %v1874, 1056980736
    %v1907 = vmul.bf16 %v1875, 1056980736
    %v1908 = vmul.bf16 %v1876, 1056980736
    %v1909 = vmul.bf16 %v1877, 1056980736
    %v1910 = vmul.bf16 %v1878, 1056980736
    %v1911 = vmul.bf16 %v1879, 1056980736
    %v1912 = vmul.bf16 %v1880, 1056980736
    %v1913 = vmul.bf16 %v1881, 1056980736
    %v1914 = vmul.bf16 %v1850, 1027030327
    %v1915 = vmul.bf16 %v1851, 1027030327
    %v1916 = vmul.bf16 %v1852, 1027030327
    %v1917 = vmul.bf16 %v1853, 1027030327
    %v1918 = vmul.bf16 %v1854, 1027030327
    %v1919 = vmul.bf16 %v1855, 1027030327
    %v1920 = vmul.bf16 %v1856, 1027030327
    %v1921 = vmul.bf16 %v1857, 1027030327
    %v1922 = vmul.bf16 %v1858, 1027030327
    %v1923 = vmul.bf16 %v1859, 1027030327
    %v1924 = vmul.bf16 %v1860, 1027030327
    %v1925 = vmul.bf16 %v1861, 1027030327
    %v1926 = vmul.bf16 %v1862, 1027030327
    %v1927 = vmul.bf16 %v1863, 1027030327
    %v1928 = vmul.bf16 %v1864, 1027030327
    %v1929 = vmul.bf16 %v1865, 1027030327
    %v1930 = vmul.bf16 %v1866, 1027030327
    %v1931 = vmul.bf16 %v1867, 1027030327
    %v1932 = vmul.bf16 %v1868, 1027030327
    %v1933 = vmul.bf16 %v1869, 1027030327
    %v1934 = vmul.bf16 %v1870, 1027030327
    %v1935 = vmul.bf16 %v1871, 1027030327
    %v1936 = vmul.bf16 %v1872, 1027030327
    %v1937 = vmul.bf16 %v1873, 1027030327
    %v1938 = vmul.bf16 %v1874, 1027030327
    %v1939 = vmul.bf16 %v1875, 1027030327
    %v1940 = vmul.bf16 %v1876, 1027030327
    %v1941 = vmul.bf16 %v1877, 1027030327
    %v1942 = vmul.bf16 %v1878, 1027030327
    %v1943 = vmul.bf16 %v1879, 1027030327
    %v1944 = vmul.bf16 %v1880, 1027030327
    %v1945 = vmul.bf16 %v1881, 1027030327
    %v1946 = vmul.bf16 %v1914, %v1850
    %v1947 = vmul.bf16 %v1915, %v1851
    %v1948 = vmul.bf16 %v1916, %v1852
    %v1949 = vmul.bf16 %v1917, %v1853
    %v1950 = vmul.bf16 %v1918, %v1854
    %v1951 = vmul.bf16 %v1919, %v1855
    %v1952 = vmul.bf16 %v1920, %v1856
    %v1953 = vmul.bf16 %v1921, %v1857
    %v1954 = vmul.bf16 %v1922, %v1858
    %v1955 = vmul.bf16 %v1923, %v1859
    %v1956 = vmul.bf16 %v1924, %v1860
    %v1957 = vmul.bf16 %v1925, %v1861
    %v1958 = vmul.bf16 %v1926, %v1862
    %v1959 = vmul.bf16 %v1927, %v1863
    %v1960 = vmul.bf16 %v1928, %v1864
    %v1961 = vmul.bf16 %v1929, %v1865
    %v1962 = vmul.bf16 %v1930, %v1866
    %v1963 = vmul.bf16 %v1931, %v1867
    %v1964 = vmul.bf16 %v1932, %v1868
    %v1965 = vmul.bf16 %v1933, %v1869
    %v1966 = vmul.bf16 %v1934, %v1870
    %v1967 = vmul.bf16 %v1935, %v1871
    %v1968 = vmul.bf16 %v1936, %v1872
    %v1969 = vmul.bf16 %v1937, %v1873
    %v1970 = vmul.bf16 %v1938, %v1874
    %v1971 = vmul.bf16 %v1939, %v1875
    %v1972 = vmul.bf16 %v1940, %v1876
    %v1973 = vmul.bf16 %v1941, %v1877
    %v1974 = vmul.bf16 %v1942, %v1878
    %v1975 = vmul.bf16 %v1943, %v1879
    %v1976 = vmul.bf16 %v1944, %v1880
    %v1977 = vmul.bf16 %v1945, %v1881
    %v1978 = vmul.bf16 %v1946, %v1850
    %v1979 = vmul.bf16 %v1947, %v1851
    %v1980 = vmul.bf16 %v1948, %v1852
    %v1981 = vmul.bf16 %v1949, %v1853
    %v1982 = vmul.bf16 %v1950, %v1854
    %v1983 = vmul.bf16 %v1951, %v1855
    %v1984 = vmul.bf16 %v1952, %v1856
    %v1985 = vmul.bf16 %v1953, %v1857
    %v1986 = vmul.bf16 %v1954, %v1858
    %v1987 = vmul.bf16 %v1955, %v1859
    %v1988 = vmul.bf16 %v1956, %v1860
    %v1989 = vmul.bf16 %v1957, %v1861
    %v1990 = vmul.bf16 %v1958, %v1862
    %v1991 = vmul.bf16 %v1959, %v1863
    %v1992 = vmul.bf16 %v1960, %v1864
    %v1993 = vmul.bf16 %v1961, %v1865
    %v1994 = vmul.bf16 %v1962, %v1866
    %v1995 = vmul.bf16 %v1963, %v1867
    %v1996 = vmul.bf16 %v1964, %v1868
    %v1997 = vmul.bf16 %v1965, %v1869
    %v1998 = vmul.bf16 %v1966, %v1870
    %v1999 = vmul.bf16 %v1967, %v1871
    %v2000 = vmul.bf16 %v1968, %v1872
    %v2001 = vmul.bf16 %v1969, %v1873
    %v2002 = vmul.bf16 %v1970, %v1874
    %v2003 = vmul.bf16 %v1971, %v1875
    %v2004 = vmul.bf16 %v1972, %v1876
    %v2005 = vmul.bf16 %v1973, %v1877
    %v2006 = vmul.bf16 %v1974, %v1878
    %v2007 = vmul.bf16 %v1975, %v1879
    %v2008 = vmul.bf16 %v1976, %v1880
    %v2009 = vmul.bf16 %v1977, %v1881
    %v2010 = vadd.bf16 %v1850, %v1978
    %v2011 = vadd.bf16 %v1851, %v1979
    %v2012 = vadd.bf16 %v1852, %v1980
    %v2013 = vadd.bf16 %v1853, %v1981
    %v2014 = vadd.bf16 %v1854, %v1982
    %v2015 = vadd.bf16 %v1855, %v1983
    %v2016 = vadd.bf16 %v1856, %v1984
    %v2017 = vadd.bf16 %v1857, %v1985
    %v2018 = vadd.bf16 %v1858, %v1986
    %v2019 = vadd.bf16 %v1859, %v1987
    %v2020 = vadd.bf16 %v1860, %v1988
    %v2021 = vadd.bf16 %v1861, %v1989
    %v2022 = vadd.bf16 %v1862, %v1990
    %v2023 = vadd.bf16 %v1863, %v1991
    %v2024 = vadd.bf16 %v1864, %v1992
    %v2025 = vadd.bf16 %v1865, %v1993
    %v2026 = vadd.bf16 %v1866, %v1994
    %v2027 = vadd.bf16 %v1867, %v1995
    %v2028 = vadd.bf16 %v1868, %v1996
    %v2029 = vadd.bf16 %v1869, %v1997
    %v2030 = vadd.bf16 %v1870, %v1998
    %v2031 = vadd.bf16 %v1871, %v1999
    %v2032 = vadd.bf16 %v1872, %v2000
    %v2033 = vadd.bf16 %v1873, %v2001
    %v2034 = vadd.bf16 %v1874, %v2002
    %v2035 = vadd.bf16 %v1875, %v2003
    %v2036 = vadd.bf16 %v1876, %v2004
    %v2037 = vadd.bf16 %v1877, %v2005
    %v2038 = vadd.bf16 %v1878, %v2006
    %v2039 = vadd.bf16 %v1879, %v2007
    %v2040 = vadd.bf16 %v1880, %v2008
    %v2041 = vadd.bf16 %v1881, %v2009
    %v2042 = vmul.bf16 %v2010, 1061961548
    %v2043 = vmul.bf16 %v2011, 1061961548
    %v2044 = vmul.bf16 %v2012, 1061961548
    %v2045 = vmul.bf16 %v2013, 1061961548
    %v2046 = vmul.bf16 %v2014, 1061961548
    %v2047 = vmul.bf16 %v2015, 1061961548
    %v2048 = vmul.bf16 %v2016, 1061961548
    %v2049 = vmul.bf16 %v2017, 1061961548
    %v2050 = vmul.bf16 %v2018, 1061961548
    %v2051 = vmul.bf16 %v2019, 1061961548
    %v2052 = vmul.bf16 %v2020, 1061961548
    %v2053 = vmul.bf16 %v2021, 1061961548
    %v2054 = vmul.bf16 %v2022, 1061961548
    %v2055 = vmul.bf16 %v2023, 1061961548
    %v2056 = vmul.bf16 %v2024, 1061961548
    %v2057 = vmul.bf16 %v2025, 1061961548
    %v2058 = vmul.bf16 %v2026, 1061961548
    %v2059 = vmul.bf16 %v2027, 1061961548
    %v2060 = vmul.bf16 %v2028, 1061961548
    %v2061 = vmul.bf16 %v2029, 1061961548
    %v2062 = vmul.bf16 %v2030, 1061961548
    %v2063 = vmul.bf16 %v2031, 1061961548
    %v2064 = vmul.bf16 %v2032, 1061961548
    %v2065 = vmul.bf16 %v2033, 1061961548
    %v2066 = vmul.bf16 %v2034, 1061961548
    %v2067 = vmul.bf16 %v2035, 1061961548
    %v2068 = vmul.bf16 %v2036, 1061961548
    %v2069 = vmul.bf16 %v2037, 1061961548
    %v2070 = vmul.bf16 %v2038, 1061961548
    %v2071 = vmul.bf16 %v2039, 1061961548
    %v2072 = vmul.bf16 %v2040, 1061961548
    %v2073 = vmul.bf16 %v2041, 1061961548
    %v2074 = vtanh.bf16.pop %v2042
    %v2075 = vtanh.bf16.pop %v2043
    %v2076 = vtanh.bf16.pop %v2044
    %v2077 = vtanh.bf16.pop %v2045
    %v2078 = vtanh.bf16.pop %v2046
    %v2079 = vtanh.bf16.pop %v2047
    %v2080 = vtanh.bf16.pop %v2048
    %v2081 = vtanh.bf16.pop %v2049
    %v2082 = vtanh.bf16.pop %v2050
    %v2083 = vtanh.bf16.pop %v2051
    %v2084 = vtanh.bf16.pop %v2052
    %v2085 = vtanh.bf16.pop %v2053
    %v2086 = vtanh.bf16.pop %v2054
    %v2087 = vtanh.bf16.pop %v2055
    %v2088 = vtanh.bf16.pop %v2056
    %v2089 = vtanh.bf16.pop %v2057
    %v2090 = vtanh.bf16.pop %v2058
    %v2091 = vtanh.bf16.pop %v2059
    %v2092 = vtanh.bf16.pop %v2060
    %v2093 = vtanh.bf16.pop %v2061
    %v2094 = vtanh.bf16.pop %v2062
    %v2095 = vtanh.bf16.pop %v2063
    %v2096 = vtanh.bf16.pop %v2064
    %v2097 = vtanh.bf16.pop %v2065
    %v2098 = vtanh.bf16.pop %v2066
    %v2099 = vtanh.bf16.pop %v2067
    %v2100 = vtanh.bf16.pop %v2068
    %v2101 = vtanh.bf16.pop %v2069
    %v2102 = vtanh.bf16.pop %v2070
    %v2103 = vtanh.bf16.pop %v2071
    %v2104 = vtanh.bf16.pop %v2072
    %v2105 = vtanh.bf16.pop %v2073
    %v2106 = vadd.bf16 %v2074, 1065369472
    %v2107 = vadd.bf16 %v2075, 1065369472
    %v2108 = vadd.bf16 %v2076, 1065369472
    %v2109 = vadd.bf16 %v2077, 1065369472
    %v2110 = vadd.bf16 %v2078, 1065369472
    %v2111 = vadd.bf16 %v2079, 1065369472
    %v2112 = vadd.bf16 %v2080, 1065369472
    %v2113 = vadd.bf16 %v2081, 1065369472
    %v2114 = vadd.bf16 %v2082, 1065369472
    %v2115 = vadd.bf16 %v2083, 1065369472
    %v2116 = vadd.bf16 %v2084, 1065369472
    %v2117 = vadd.bf16 %v2085, 1065369472
    %v2118 = vadd.bf16 %v2086, 1065369472
    %v2119 = vadd.bf16 %v2087, 1065369472
    %v2120 = vadd.bf16 %v2088, 1065369472
    %v2121 = vadd.bf16 %v2089, 1065369472
    %v2122 = vadd.bf16 %v2090, 1065369472
    %v2123 = vadd.bf16 %v2091, 1065369472
    %v2124 = vadd.bf16 %v2092, 1065369472
    %v2125 = vadd.bf16 %v2093, 1065369472
    %v2126 = vadd.bf16 %v2094, 1065369472
    %v2127 = vadd.bf16 %v2095, 1065369472
    %v2128 = vadd.bf16 %v2096, 1065369472
    %v2129 = vadd.bf16 %v2097, 1065369472
    %v2130 = vadd.bf16 %v2098, 1065369472
    %v2131 = vadd.bf16 %v2099, 1065369472
    %v2132 = vadd.bf16 %v2100, 1065369472
    %v2133 = vadd.bf16 %v2101, 1065369472
    %v2134 = vadd.bf16 %v2102, 1065369472
    %v2135 = vadd.bf16 %v2103, 1065369472
    %v2136 = vadd.bf16 %v2104, 1065369472
    %v2137 = vadd.bf16 %v2105, 1065369472
    %v2138 = vmul.bf16 %v1882, %v2106
    %v2139 = vmul.bf16 %v1883, %v2107
    %v2140 = vmul.bf16 %v1884, %v2108
    %v2141 = vmul.bf16 %v1885, %v2109
    %v2142 = vmul.bf16 %v1886, %v2110
    %v2143 = vmul.bf16 %v1887, %v2111
    %v2144 = vmul.bf16 %v1888, %v2112
    %v2145 = vmul.bf16 %v1889, %v2113
    %v2146 = vmul.bf16 %v1890, %v2114
    %v2147 = vmul.bf16 %v1891, %v2115
    %v2148 = vmul.bf16 %v1892, %v2116
    %v2149 = vmul.bf16 %v1893, %v2117
    %v2150 = vmul.bf16 %v1894, %v2118
    %v2151 = vmul.bf16 %v1895, %v2119
    %v2152 = vmul.bf16 %v1896, %v2120
    %v2153 = vmul.bf16 %v1897, %v2121
    %v2154 = vmul.bf16 %v1898, %v2122
    %v2155 = vmul.bf16 %v1899, %v2123
    %v2156 = vmul.bf16 %v1900, %v2124
    %v2157 = vmul.bf16 %v1901, %v2125
    %v2158 = vmul.bf16 %v1902, %v2126
    %v2159 = vmul.bf16 %v1903, %v2127
    %v2160 = vmul.bf16 %v1904, %v2128
    %v2161 = vmul.bf16 %v1905, %v2129
    %v2162 = vmul.bf16 %v1906, %v2130
    %v2163 = vmul.bf16 %v1907, %v2131
    %v2164 = vmul.bf16 %v1908, %v2132
    %v2165 = vmul.bf16 %v1909, %v2133
    %v2166 = vmul.bf16 %v1910, %v2134
    %v2167 = vmul.bf16 %v1911, %v2135
    %v2168 = vmul.bf16 %v1912, %v2136
    %v2169 = vmul.bf16 %v1913, %v2137
    %v2170 = vld [vmem:[%s7] sm:$0xf]
    %v2171 = vld [vmem:[%s7 + $0x4] sm:$0xf]
    %v2172 = vld [vmem:[%s7 + $0x8] sm:$0xf]
    %v2173 = vld [vmem:[%s7 + $0xc] sm:$0xf]
    %v2174 = vld [vmem:[%s7 + $0x10] sm:$0xf]
    %v2175 = vld [vmem:[%s7 + $0x14] sm:$0xf]
    %v2176 = vld [vmem:[%s7 + $0x18] sm:$0xf]
    %v2177 = vld [vmem:[%s7 + $0x1c] sm:$0xf]
    %v2178 = vld [vmem:[%s7 + $0x20] sm:$0xf]
    %v2179 = vld [vmem:[%s7 + $0x24] sm:$0xf]
    %v2180 = vld [vmem:[%s7 + $0x28] sm:$0xf]
    %v2181 = vld [vmem:[%s7 + $0x2c] sm:$0xf]
    %v2182 = vld [vmem:[%s7 + $0x30] sm:$0xf]
    %v2183 = vld [vmem:[%s7 + $0x34] sm:$0xf]
    %v2184 = vld [vmem:[%s7 + $0x38] sm:$0xf]
    %v2185 = vld [vmem:[%s7 + $0x3c] sm:$0xf]
    %v2186 = vld [vmem:[%s7 + $0x40] sm:$0xf]
    %v2187 = vld [vmem:[%s7 + $0x44] sm:$0xf]
    %v2188 = vld [vmem:[%s7 + $0x48] sm:$0xf]
    %v2189 = vld [vmem:[%s7 + $0x4c] sm:$0xf]
    %v2190 = vld [vmem:[%s7 + $0x50] sm:$0xf]
    %v2191 = vld [vmem:[%s7 + $0x54] sm:$0xf]
    %v2192 = vld [vmem:[%s7 + $0x58] sm:$0xf]
    %v2193 = vld [vmem:[%s7 + $0x5c] sm:$0xf]
    %v2194 = vld [vmem:[%s7 + $0x60] sm:$0xf]
    %v2195 = vld [vmem:[%s7 + $0x64] sm:$0xf]
    %v2196 = vld [vmem:[%s7 + $0x68] sm:$0xf]
    %v2197 = vld [vmem:[%s7 + $0x6c] sm:$0xf]
    %v2198 = vld [vmem:[%s7 + $0x70] sm:$0xf]
    %v2199 = vld [vmem:[%s7 + $0x74] sm:$0xf]
    %v2200 = vld [vmem:[%s7 + $0x78] sm:$0xf]
    %v2201 = vld [vmem:[%s7 + $0x7c] sm:$0xf]
    %v2202 = vld [vmem:[%s8] sm:$0x1]
    %v2204 = vlaneseq
    %v2205 = vshrl.u32 %v2204, 7
    %v2206 = vsub.s32 0, %v2205
    %v2207 = vrot.slane %v2202, %v2206
    %v2241 = vunpack.c.l.b16 %v2170
    %v2242 = vunpack.c.l.b16 %v2171
    %v2243 = vunpack.c.l.b16 %v2172
    %v2244 = vunpack.c.l.b16 %v2173
    %v2245 = vunpack.c.l.b16 %v2174
    %v2246 = vunpack.c.l.b16 %v2175
    %v2247 = vunpack.c.l.b16 %v2176
    %v2248 = vunpack.c.l.b16 %v2177
    %v2249 = vunpack.c.l.b16 %v2178
    %v2250 = vunpack.c.l.b16 %v2179
    %v2251 = vunpack.c.l.b16 %v2180
    %v2252 = vunpack.c.l.b16 %v2181
    %v2253 = vunpack.c.l.b16 %v2182
    %v2254 = vunpack.c.l.b16 %v2183
    %v2255 = vunpack.c.l.b16 %v2184
    %v2256 = vunpack.c.l.b16 %v2185
    %v2257 = vunpack.c.l.b16 %v2186
    %v2258 = vunpack.c.l.b16 %v2187
    %v2259 = vunpack.c.l.b16 %v2188
    %v2260 = vunpack.c.l.b16 %v2189
    %v2261 = vunpack.c.l.b16 %v2190
    %v2262 = vunpack.c.l.b16 %v2191
    %v2263 = vunpack.c.l.b16 %v2192
    %v2264 = vunpack.c.l.b16 %v2193
    %v2265 = vunpack.c.l.b16 %v2194
    %v2266 = vunpack.c.l.b16 %v2195
    %v2267 = vunpack.c.l.b16 %v2196
    %v2268 = vunpack.c.l.b16 %v2197
    %v2269 = vunpack.c.l.b16 %v2198
    %v2270 = vunpack.c.l.b16 %v2199
    %v2271 = vunpack.c.l.b16 %v2200
    %v2272 = vunpack.c.l.b16 %v2201
    %v2273 = vpack.c.b16 %v2242, %v2241
    %v2274 = vpack.c.b16 %v2244, %v2243
    %v2275 = vpack.c.b16 %v2246, %v2245
    %v2276 = vpack.c.b16 %v2248, %v2247
    %v2277 = vpack.c.b16 %v2250, %v2249
    %v2278 = vpack.c.b16 %v2252, %v2251
    %v2279 = vpack.c.b16 %v2254, %v2253
    %v2280 = vpack.c.b16 %v2256, %v2255
    %v2281 = vpack.c.b16 %v2258, %v2257
    %v2282 = vpack.c.b16 %v2260, %v2259
    %v2283 = vpack.c.b16 %v2262, %v2261
    %v2284 = vpack.c.b16 %v2264, %v2263
    %v2285 = vpack.c.b16 %v2266, %v2265
    %v2286 = vpack.c.b16 %v2268, %v2267
    %v2287 = vpack.c.b16 %v2270, %v2269
    %v2288 = vpack.c.b16 %v2272, %v2271
    %2305 = vmatprep.subr.bf16.mxu0 0
    %2306 = vmatpush1.bf16.msra.mxu0 %v2273
    %2307 = vmatprep.subr.bf16.mxu0 0
    %2308 = vmatpush1.bf16.msra.mxu0 %v2274
    %2309 = vmatprep.subr.bf16.mxu0 0
    %2310 = vmatpush1.bf16.msra.mxu0 %v2275
    %2311 = vmatprep.subr.bf16.mxu0 0
    %2312 = vmatpush1.bf16.msra.mxu0 %v2276
    %2313 = vmatprep.subr.bf16.mxu0 0
    %2314 = vmatpush1.bf16.msra.mxu0 %v2277
    %2315 = vmatprep.subr.bf16.mxu0 0
    %2316 = vmatpush1.bf16.msra.mxu0 %v2278
    %2317 = vmatprep.subr.bf16.mxu0 0
    %2318 = vmatpush1.bf16.msra.mxu0 %v2279
    %2319 = vmatprep.subr.bf16.mxu0 0
    %2320 = vmatpush1.bf16.msra.mxu0 %v2280
    %2321 = vmatprep.subr.bf16.mxu0 0
    %2322 = vmatpush1.bf16.msra.mxu0 %v2281
    %2323 = vmatprep.subr.bf16.mxu0 0
    %2324 = vmatpush1.bf16.msra.mxu0 %v2282
    %2325 = vmatprep.subr.bf16.mxu0 0
    %2326 = vmatpush1.bf16.msra.mxu0 %v2283
    %2327 = vmatprep.subr.bf16.mxu0 0
    %2328 = vmatpush1.bf16.msra.mxu0 %v2284
    %2329 = vmatprep.subr.bf16.mxu0 0
    %2330 = vmatpush1.bf16.msra.mxu0 %v2285
    %2331 = vmatprep.subr.bf16.mxu0 0
    %2332 = vmatpush1.bf16.msra.mxu0 %v2286
    %2333 = vmatprep.subr.bf16.mxu0 0
    %2334 = vmatpush1.bf16.msra.mxu0 %v2287
    %2335 = vmatprep.subr.bf16.mxu0 0
    %2336 = vmatpush1.bf16.msra.mxu0 %v2288
    %2337 = vmatprep.mubr.bf16.mxu0 %v2139
    %2338 = vmatmul.mubr.bf16.gmra.mrb[0].mxu0 %v2138
    %v2339 = vpop.f32.mrb[0].mxu0
    %v2340 = vadd.f32 %v2207, %v2339
    %v2341 = vpop.f32.mrb[0].mxu0
    %v2342 = vpop.f32.mrb[0].mxu0
    %v2343 = vadd.f32 %v2207, %v2342
    %v2344 = vpop.f32.mrb[0].mxu0
    %2345 = vmatprep.mubr.bf16.mxu0 %v2141
    %2346 = vmatmul.mubr.bf16.gmra.mrb[0].mxu0 %v2140
    %v2347 = vpop.f32.mrb[0].mxu0
    %v2348 = vadd.f32 %v2207, %v2347
    %v2349 = vpop.f32.mrb[0].mxu0
    %v2350 = vpop.f32.mrb[0].mxu0
    %v2351 = vadd.f32 %v2207, %v2350
    %v2352 = vpop.f32.mrb[0].mxu0
    %2353 = vmatprep.mubr.bf16.mxu0 %v2143
    %2354 = vmatmul.mubr.bf16.gmra.mrb[0].mxu0 %v2142
    %v2355 = vpop.f32.mrb[0].mxu0
    %v2356 = vadd.f32 %v2207, %v2355
    %v2357 = vpop.f32.mrb[0].mxu0
    %v2358 = vpop.f32.mrb[0].mxu0
    %v2359 = vadd.f32 %v2207, %v2358
    %v2360 = vpop.f32.mrb[0].mxu0
    %2361 = vmatprep.mubr.bf16.mxu0 %v2145
    %2362 = vmatmul.mubr.bf16.gmra.mrb[0].mxu0 %v2144
    %v2363 = vpop.f32.mrb[0].mxu0
    %v2364 = vadd.f32 %v2207, %v2363
    %v2365 = vpop.f32.mrb[0].mxu0
    %v2366 = vpop.f32.mrb[0].mxu0
    %v2367 = vadd.f32 %v2207, %v2366
    %v2368 = vpop.f32.mrb[0].mxu0
    %2369 = vmatprep.mubr.bf16.mxu0 %v2147
    %2370 = vmatmul.mubr.bf16.gmra.mrb[0].mxu0 %v2146
    %v2371 = vpop.f32.mrb[0].mxu0
    %v2372 = vadd.f32 %v2207, %v2371
    %v2373 = vpop.f32.mrb[0].mxu0
    %v2374 = vpop.f32.mrb[0].mxu0
    %v2375 = vadd.f32 %v2207, %v2374
    %v2376 = vpop.f32.mrb[0].mxu0
    %2377 = vmatprep.mubr.bf16.mxu0 %v2149
    %2378 = vmatmul.mubr.bf16.gmra.mrb[0].mxu0 %v2148
    %v2379 = vpop.f32.mrb[0].mxu0
    %v2380 = vadd.f32 %v2207, %v2379
    %v2381 = vpop.f32.mrb[0].mxu0
    %v2382 = vpop.f32.mrb[0].mxu0
    %v2383 = vadd.f32 %v2207, %v2382
    %v2384 = vpop.f32.mrb[0].mxu0
    %2385 = vmatprep.mubr.bf16.mxu0 %v2151
    %2386 = vmatmul.mubr.bf16.gmra.mrb[0].mxu0 %v2150
    %v2387 = vpop.f32.mrb[0].mxu0
    %v2388 = vadd.f32 %v2207, %v2387
    %v2389 = vpop.f32.mrb[0].mxu0
    %v2390 = vpop.f32.mrb[0].mxu0
    %v2391 = vadd.f32 %v2207, %v2390
    %v2392 = vpop.f32.mrb[0].mxu0
    %2393 = vmatprep.mubr.bf16.mxu0 %v2153
    %2394 = vmatmul.mubr.bf16.gmra.mrb[0].mxu0 %v2152
    %v2395 = vpop.f32.mrb[0].mxu0
    %v2396 = vadd.f32 %v2207, %v2395
    %v2397 = vpop.f32.mrb[0].mxu0
    %v2398 = vpop.f32.mrb[0].mxu0
    %v2399 = vadd.f32 %v2207, %v2398
    %v2400 = vpop.f32.mrb[0].mxu0
    %2401 = vmatprep.mubr.bf16.mxu0 %v2155
    %2402 = vmatmul.mubr.bf16.gmra.mrb[0].mxu0 %v2154
    %v2403 = vpop.f32.mrb[0].mxu0
    %v2404 = vadd.f32 %v2207, %v2403
    %v2405 = vpop.f32.mrb[0].mxu0
    %v2406 = vpop.f32.mrb[0].mxu0
    %v2407 = vadd.f32 %v2207, %v2406
    %v2408 = vpop.f32.mrb[0].mxu0
    %2409 = vmatprep.mubr.bf16.mxu0 %v2157
    %2410 = vmatmul.mubr.bf16.gmra.mrb[0].mxu0 %v2156
    %v2411 = vpop.f32.mrb[0].mxu0
    %v2412 = vadd.f32 %v2207, %v2411
    %v2413 = vpop.f32.mrb[0].mxu0
    %v2414 = vpop.f32.mrb[0].mxu0
    %v2415 = vadd.f32 %v2207, %v2414
    %v2416 = vpop.f32.mrb[0].mxu0
    %2417 = vmatprep.mubr.bf16.mxu0 %v2159
    %2418 = vmatmul.mubr.bf16.gmra.mrb[0].mxu0 %v2158
    %v2419 = vpop.f32.mrb[0].mxu0
    %v2420 = vadd.f32 %v2207, %v2419
    %v2421 = vpop.f32.mrb[0].mxu0
    %v2422 = vpop.f32.mrb[0].mxu0
    %v2423 = vadd.f32 %v2207, %v2422
    %v2424 = vpop.f32.mrb[0].mxu0
    %2425 = vmatprep.mubr.bf16.mxu0 %v2161
    %2426 = vmatmul.mubr.bf16.gmra.mrb[0].mxu0 %v2160
    %v2427 = vpop.f32.mrb[0].mxu0
    %v2428 = vadd.f32 %v2207, %v2427
    %v2429 = vpop.f32.mrb[0].mxu0
    %v2430 = vpop.f32.mrb[0].mxu0
    %v2431 = vadd.f32 %v2207, %v2430
    %v2432 = vpop.f32.mrb[0].mxu0
    %2433 = vmatprep.mubr.bf16.mxu0 %v2163
    %2434 = vmatmul.mubr.bf16.gmra.mrb[0].mxu0 %v2162
    %v2435 = vpop.f32.mrb[0].mxu0
    %v2436 = vadd.f32 %v2207, %v2435
    %v2437 = vpop.f32.mrb[0].mxu0
    %v2438 = vpop.f32.mrb[0].mxu0
    %v2439 = vadd.f32 %v2207, %v2438
    %v2440 = vpop.f32.mrb[0].mxu0
    %2441 = vmatprep.mubr.bf16.mxu0 %v2165
    %2442 = vmatmul.mubr.bf16.gmra.mrb[0].mxu0 %v2164
    %v2443 = vpop.f32.mrb[0].mxu0
    %v2444 = vadd.f32 %v2207, %v2443
    %v2445 = vpop.f32.mrb[0].mxu0
    %v2446 = vpop.f32.mrb[0].mxu0
    %v2447 = vadd.f32 %v2207, %v2446
    %v2448 = vpop.f32.mrb[0].mxu0
    %2449 = vmatprep.mubr.bf16.mxu0 %v2167
    %2450 = vmatmul.mubr.bf16.gmra.mrb[0].mxu0 %v2166
    %v2451 = vpop.f32.mrb[0].mxu0
    %v2452 = vadd.f32 %v2207, %v2451
    %v2453 = vpop.f32.mrb[0].mxu0
    %v2454 = vpop.f32.mrb[0].mxu0
    %v2455 = vadd.f32 %v2207, %v2454
    %v2456 = vpop.f32.mrb[0].mxu0
    %2457 = vmatprep.mubr.bf16.mxu0 %v2169
    %2458 = vmatmul.mubr.bf16.gmra.mrb[0].mxu0 %v2168
    %v2459 = vpop.f32.mrb[0].mxu0
    %v2460 = vadd.f32 %v2207, %v2459
    %v2461 = vpop.f32.mrb[0].mxu0
    %v2462 = vpop.f32.mrb[0].mxu0
    %v2463 = vadd.f32 %v2207, %v2462
    %v2464 = vpop.f32.mrb[0].mxu0
    %2465 = vdwg.mxu0
    %v2466 = vpack.c.bf16 %v2343, %v2340
    %v2467 = vpack.c.bf16 %v2351, %v2348
    %v2468 = vpack.c.bf16 %v2359, %v2356
    %v2469 = vpack.c.bf16 %v2367, %v2364
    %v2470 = vpack.c.bf16 %v2375, %v2372
    %v2471 = vpack.c.bf16 %v2383, %v2380
    %v2472 = vpack.c.bf16 %v2391, %v2388
    %v2473 = vpack.c.bf16 %v2399, %v2396
    %v2474 = vpack.c.bf16 %v2407, %v2404
    %v2475 = vpack.c.bf16 %v2415, %v2412
    %v2476 = vpack.c.bf16 %v2423, %v2420
    %v2477 = vpack.c.bf16 %v2431, %v2428
    %v2478 = vpack.c.bf16 %v2439, %v2436
    %v2479 = vpack.c.bf16 %v2447, %v2444
    %v2480 = vpack.c.bf16 %v2455, %v2452
    %v2481 = vpack.c.bf16 %v2463, %v2460
    %v2498 = vunpack.c.l.b16 %v2466
    %v2499 = vunpack.c.h.b16 %v2466
    %v2500 = vunpack.c.l.b16 %v2467
    %v2501 = vunpack.c.h.b16 %v2467
    %v2502 = vunpack.c.l.b16 %v2468
    %v2503 = vunpack.c.h.b16 %v2468
    %v2504 = vunpack.c.l.b16 %v2469
    %v2505 = vunpack.c.h.b16 %v2469
    %v2506 = vunpack.c.l.b16 %v2470
    %v2507 = vunpack.c.h.b16 %v2470
    %v2508 = vunpack.c.l.b16 %v2471
    %v2509 = vunpack.c.h.b16 %v2471
    %v2510 = vunpack.c.l.b16 %v2472
    %v2511 = vunpack.c.h.b16 %v2472
    %v2512 = vunpack.c.l.b16 %v2473
    %v2513 = vunpack.c.h.b16 %v2473
    %v2514 = vunpack.c.l.b16 %v2474
    %v2515 = vunpack.c.h.b16 %v2474
    %v2516 = vunpack.c.l.b16 %v2475
    %v2517 = vunpack.c.h.b16 %v2475
    %v2518 = vunpack.c.l.b16 %v2476
    %v2519 = vunpack.c.h.b16 %v2476
    %v2520 = vunpack.c.l.b16 %v2477
    %v2521 = vunpack.c.h.b16 %v2477
    %v2522 = vunpack.c.l.b16 %v2478
    %v2523 = vunpack.c.h.b16 %v2478
    %v2524 = vunpack.c.l.b16 %v2479
    %v2525 = vunpack.c.h.b16 %v2479
    %v2526 = vunpack.c.l.b16 %v2480
    %v2527 = vunpack.c.h.b16 %v2480
    %v2528 = vunpack.c.l.b16 %v2481
    %v2529 = vunpack.c.h.b16 %v2481
    %v2530 = vpack.c.b16 %v2498, %v2498
    %v2531 = vpack.c.b16 %v2499, %v2499
    %v2532 = vpack.c.b16 %v2500, %v2500
    %v2533 = vpack.c.b16 %v2501, %v2501
    %v2534 = vpack.c.b16 %v2502, %v2502
    %v2535 = vpack.c.b16 %v2503, %v2503
    %v2536 = vpack.c.b16 %v2504, %v2504
    %v2537 = vpack.c.b16 %v2505, %v2505
    %v2538 = vpack.c.b16 %v2506, %v2506
    %v2539 = vpack.c.b16 %v2507, %v2507
    %v2540 = vpack.c.b16 %v2508, %v2508
    %v2541 = vpack.c.b16 %v2509, %v2509
    %v2542 = vpack.c.b16 %v2510, %v2510
    %v2543 = vpack.c.b16 %v2511, %v2511
    %v2544 = vpack.c.b16 %v2512, %v2512
    %v2545 = vpack.c.b16 %v2513, %v2513
    %v2546 = vpack.c.b16 %v2514, %v2514
    %v2547 = vpack.c.b16 %v2515, %v2515
    %v2548 = vpack.c.b16 %v2516, %v2516
    %v2549 = vpack.c.b16 %v2517, %v2517
    %v2550 = vpack.c.b16 %v2518, %v2518
    %v2551 = vpack.c.b16 %v2519, %v2519
    %v2552 = vpack.c.b16 %v2520, %v2520
    %v2553 = vpack.c.b16 %v2521, %v2521
    %v2554 = vpack.c.b16 %v2522, %v2522
    %v2555 = vpack.c.b16 %v2523, %v2523
    %v2556 = vpack.c.b16 %v2524, %v2524
    %v2557 = vpack.c.b16 %v2525, %v2525
    %v2558 = vpack.c.b16 %v2526, %v2526
    %v2559 = vpack.c.b16 %v2527, %v2527
    %v2560 = vpack.c.b16 %v2528, %v2528
    %v2561 = vpack.c.b16 %v2529, %v2529
    %2594 = vst [vmem:[#allocation7] sm:$0xf] %v2530
    %2595 = vst [vmem:[#allocation7 + $0x4] sm:$0xf] %v2531
    %2596 = vst [vmem:[#allocation7 + $0x8] sm:$0xf] %v2532
    %2597 = vst [vmem:[#allocation7 + $0xc] sm:$0xf] %v2533
    %2598 = vst [vmem:[#allocation7 + $0x10] sm:$0xf] %v2534
    %2599 = vst [vmem:[#allocation7 + $0x14] sm:$0xf] %v2535
    %2600 = vst [vmem:[#allocation7 + $0x18] sm:$0xf] %v2536
    %2601 = vst [vmem:[#allocation7 + $0x1c] sm:$0xf] %v2537
    %2602 = vst [vmem:[#allocation7 + $0x20] sm:$0xf] %v2538
    %2603 = vst [vmem:[#allocation7 + $0x24] sm:$0xf] %v2539
    %2604 = vst [vmem:[#allocation7 + $0x28] sm:$0xf] %v2540
    %2605 = vst [vmem:[#allocation7 + $0x2c] sm:$0xf] %v2541
    %2606 = vst [vmem:[#allocation7 + $0x30] sm:$0xf] %v2542
    %2607 = vst [vmem:[#allocation7 + $0x34] sm:$0xf] %v2543
    %2608 = vst [vmem:[#allocation7 + $0x38] sm:$0xf] %v2544
    %2609 = vst [vmem:[#allocation7 + $0x3c] sm:$0xf] %v2545
    %2610 = vst [vmem:[#allocation7 + $0x40] sm:$0xf] %v2546
    %2611 = vst [vmem:[#allocation7 + $0x44] sm:$0xf] %v2547
    %2612 = vst [vmem:[#allocation7 + $0x48] sm:$0xf] %v2548
    %2613 = vst [vmem:[#allocation7 + $0x4c] sm:$0xf] %v2549
    %2614 = vst [vmem:[#allocation7 + $0x50] sm:$0xf] %v2550
    %2615 = vst [vmem:[#allocation7 + $0x54] sm:$0xf] %v2551
    %2616 = vst [vmem:[#allocation7 + $0x58] sm:$0xf] %v2552
    %2617 = vst [vmem:[#allocation7 + $0x5c] sm:$0xf] %v2553
    %2618 = vst [vmem:[#allocation7 + $0x60] sm:$0xf] %v2554
    %2619 = vst [vmem:[#allocation7 + $0x64] sm:$0xf] %v2555
    %2620 = vst [vmem:[#allocation7 + $0x68] sm:$0xf] %v2556
    %2621 = vst [vmem:[#allocation7 + $0x6c] sm:$0xf] %v2557
    %2622 = vst [vmem:[#allocation7 + $0x70] sm:$0xf] %v2558
    %2623 = vst [vmem:[#allocation7 + $0x74] sm:$0xf] %v2559
    %2624 = vst [vmem:[#allocation7 + $0x78] sm:$0xf] %v2560
    %2625 = vst [vmem:[#allocation7 + $0x7c] sm:$0xf] %v2561
    // Predicated region
    $region46: #{tpu_custom_call.1} parent=1 // pred_check
      _
    $region47: #{tpu_custom_call.1} parent=1 // pred_check_branch
      %2627 = sbr.rel (0) target = $region49
    $region48: #{tpu_custom_call.1} parent=1 // pred_region
      %s2629 = ssub.s32 2048, 2048
      %2630 = vsyncadd [#allocation4], %s2629
      %s2631 = sshll.u32 [#allocation7], 4
      %s2632 = int_to_ptr.vmem [resolvable:$true] %s2631
      %2637 = dma.vmem_to_hbm [thread:$0]  %s2632, 2048, %s9, [#allocation4], 64, 64, 4
    $region49: #{tpu_custom_call.1} parent=1 // pred_fallthru
      _
    // Predicated region
    $region50: #{tpu_custom_call.1} parent=1 // pred_check
      _
    $region51: #{tpu_custom_call.1} parent=1 // pred_check_branch
      %2639 = sbr.rel (0) target = $region53
    $region52: #{tpu_custom_call.1} parent=1 // pred_region
      %2640 = dma.done [#allocation4], 2048
    $region53: #{tpu_custom_call.1} parent=1 // pred_fallthru
      _
    %2641 = vsyncpa [#allocation3], 1
    %2642 = vsyncpa [#allocation6], 1
    %2643 = vsyncpa [#allocation4], 1

// kernel: tpu_custom_call.1
$region0: #{tpu_custom_call.1}
  #allocation0 [shape = 'u32[]', space=smem, size = 0x4, offset = 0x4, fixed_abs, tag = 'smem constant byte address 0x4 - core index']
  #allocation1 [shape = 'u32[144,128]{1,0:T(1,128)}', space=vmem, size = 0x12000, scoped, tag = 'internal scratch']
  %s0 = inlined_call_operand.vmem [shape: f32[256,64], index: 0, kind: input, shape index: {}]
  %s1 = inlined_call_operand.hbm [shape: bf16[64,256], index: 1, kind: input, shape index: {}]
  %s2 = inlined_call_operand.vmem [shape: f32[1,256], index: 2, kind: input, shape index: {}]
  %s3 = inlined_call_operand.vmem [shape: bf16[256,256], index: 3, kind: input, shape index: {}]
  %s4 = inlined_call_operand.vmem [shape: f32[1,256], index: 4, kind: input, shape index: {}]
  %s5 = inlined_call_operand.hbm [shape: bf16[256,256], index: 5, kind: input, shape index: {}]
  %s6 = inlined_call_operand.vmem [shape: f32[1,256], index: 6, kind: input, shape index: {}]
  %s7 = inlined_call_operand.vmem [shape: bf16[256,128], index: 7, kind: input, shape index: {}]
  %s8 = inlined_call_operand.vmem [shape: f32[1,128], index: 8, kind: input, shape index: {}]
  %s9 = inlined_call_operand.hbm [shape: bf16[256,128], index: 9, kind: output, shape index: {}]
  %s10 = sld [smem:[#allocation0]]
  $region54: #{tpu_custom_call.1} parent=0
    _
  %s12 = ssub.s32 1, %s10
  %s13 = scalar_select 0, %s12, %s10
  $region1: #{tpu_custom_call.1} parent=0
    #allocation2 [shape = 'u8[32768]{0}', space=vmem, size = 0x8000, scoped, tag = 'input window, operand 1, single buffered']
    #allocation3 [shape = 's32[1]{0}', space=sflag, size = 0x4, scoped, tag = 'scoped memory for tpu_custom_call.1']
    #allocation4 [shape = 's32[1]{0}', space=sflag, size = 0x4, scoped, tag = 'scoped memory for tpu_custom_call.1']
    #allocation5 [shape = 'u8[131072]{0}', space=vmem, size = 0x20000, scoped, tag = 'input window, operand 5, single buffered']
    #allocation6 [shape = 's32[1]{0}', space=sflag, size = 0x4, scoped, tag = 'scoped memory for tpu_custom_call.1']
    #allocation7 [shape = 'u8[65536]{0}', space=vmem, size = 0x10000, scoped, tag = 'output window, operand 0, single buffered']
    %14 = vsyncpa [#allocation3], 0
    %15 = vsyncpa [#allocation6], 0
    %16 = vsyncpa [#allocation4], 0
    // Predicated region
    $region2: #{tpu_custom_call.1} parent=1 // pred_check
      _
    $region3: #{tpu_custom_call.1} parent=1 // pred_check_branch
      %18 = sbr.rel (0) target = $region5
    $region4: #{tpu_custom_call.1} parent=1 // pred_region
      _
    $region5: #{tpu_custom_call.1} parent=1 // pred_fallthru
      _
    // Predicated region
    $region6: #{tpu_custom_call.1} parent=1 // pred_check
      _
    $region7: #{tpu_custom_call.1} parent=1 // pred_check_branch
      %20 = sbr.rel (0) target = $region9
    $region8: #{tpu_custom_call.1} parent=1 // pred_region
      %s22 = ssub.s32 1024, 1024
      %23 = vsyncadd [#allocation3], %s22
      %s24 = sshll.u32 [#allocation2], 4
      %s25 = int_to_ptr.vmem [resolvable:$true] %s24
      %30 = dma.hbm_to_vmem [thread:$0]  %s1, 1024, %s25, [#allocation3], 128, 128, 8
    $region9: #{tpu_custom_call.1} parent=1 // pred_fallthru
      _
    // Predicated region
    $region10: #{tpu_custom_call.1} parent=1 // pred_check
      _
    $region11: #{tpu_custom_call.1} parent=1 // pred_check_branch
      %32 = sbr.rel (0) target = $region13
    $region12: #{tpu_custom_call.1} parent=1 // pred_region
      _
    $region13: #{tpu_custom_call.1} parent=1 // pred_fallthru
      _
    // Predicated region
    $region14: #{tpu_custom_call.1} parent=1 // pred_check
      _
    $region15: #{tpu_custom_call.1} parent=1 // pred_check_branch
      %34 = sbr.rel (0) target = $region17
    $region16: #{tpu_custom_call.1} parent=1 // pred_region
      _
    $region17: #{tpu_custom_call.1} parent=1 // pred_fallthru
      _
    // Predicated region
    $region18: #{tpu_custom_call.1} parent=1 // pred_check
      _
    $region19: #{tpu_custom_call.1} parent=1 // pred_check_branch
      %36 = sbr.rel (0) target = $region21
    $region20: #{tpu_custom_call.1} parent=1 // pred_region
      _
    $region21: #{tpu_custom_call.1} parent=1 // pred_fallthru
      _
    // Predicated region
    $region22: #{tpu_custom_call.1} parent=1 // pred_check
      _
    $region23: #{tpu_custom_call.1} parent=1 // pred_check_branch
      %38 = sbr.rel (0) target = $region25
    $region24: #{tpu_custom_call.1} parent=1 // pred_region
      %s40 = ssub.s32 4096, 4096
      %41 = vsyncadd [#allocation6], %s40
      %s42 = sshll.u32 [#allocation5], 4
      %s43 = int_to_ptr.vmem [resolvable:$true] %s42
      %48 = dma.hbm_to_vmem [thread:$0]  %s5, 4096, %s43, [#allocation6], 128, 128, 8
    $region25: #{tpu_custom_call.1} parent=1 // pred_fallthru
      _
    // Predicated region
    $region26: #{tpu_custom_call.1} parent=1 // pred_check
      _
    $region27: #{tpu_custom_call.1} parent=1 // pred_check_branch
      %50 = sbr.rel (0) target = $region29
    $region28: #{tpu_custom_call.1} parent=1 // pred_region
      _
    $region29: #{tpu_custom_call.1} parent=1 // pred_fallthru
      _
    // Predicated region
    $region30: #{tpu_custom_call.1} parent=1 // pred_check
      _
    $region31: #{tpu_custom_call.1} parent=1 // pred_check_branch
      %52 = sbr.rel (0) target = $region33
    $region32: #{tpu_custom_call.1} parent=1 // pred_region
      _
    $region33: #{tpu_custom_call.1} parent=1 // pred_fallthru
      _
    // Predicated region
    $region34: #{tpu_custom_call.1} parent=1 // pred_check
      _
    $region35: #{tpu_custom_call.1} parent=1 // pred_check_branch
      %54 = sbr.rel (0) target = $region37
    $region36: #{tpu_custom_call.1} parent=1 // pred_region
      _
    $region37: #{tpu_custom_call.1} parent=1 // pred_fallthru
      _
    // Predicated region
    $region38: #{tpu_custom_call.1} parent=1 // pred_check
      _
    $region39: #{tpu_custom_call.1} parent=1 // pred_check_branch
      %56 = sbr.rel (0) target = $region41
    $region40: #{tpu_custom_call.1} parent=1 // pred_region
      %57 = dma.done [#allocation3], 1024
    $region41: #{tpu_custom_call.1} parent=1 // pred_fallthru
      _
    // Predicated region
    $region42: #{tpu_custom_call.1} parent=1 // pred_check
      _
    $region43: #{tpu_custom_call.1} parent=1 // pred_check_branch
      %59 = sbr.rel (0) target = $region45
    $region44: #{tpu_custom_call.1} parent=1 // pred_region
      %60 = dma.done [#allocation6], 4096
    $region45: #{tpu_custom_call.1} parent=1 // pred_fallthru
      _
    %v66 = vld [vmem:[%s0] sm:$0xff]
    %v67 = vld [vmem:[%s0 + $0x8] sm:$0xff]
    %v68 = vld [vmem:[%s0 + $0x10] sm:$0xff]
    %v69 = vld [vmem:[%s0 + $0x18] sm:$0xff]
    %v70 = vld [vmem:[%s0 + $0x20] sm:$0xff]
    %v71 = vld [vmem:[%s0 + $0x28] sm:$0xff]
    %v72 = vld [vmem:[%s0 + $0x30] sm:$0xff]
    %v73 = vld [vmem:[%s0 + $0x38] sm:$0xff]
    %v74 = vld [vmem:[%s0 + $0x40] sm:$0xff]
    %v75 = vld [vmem:[%s0 + $0x48] sm:$0xff]
    %v76 = vld [vmem:[%s0 + $0x50] sm:$0xff]
    %v77 = vld [vmem:[%s0 + $0x58] sm:$0xff]
    %v78 = vld [vmem:[%s0 + $0x60] sm:$0xff]
    %v79 = vld [vmem:[%s0 + $0x68] sm:$0xff]
    %v80 = vld [vmem:[%s0 + $0x70] sm:$0xff]
    %v81 = vld [vmem:[%s0 + $0x78] sm:$0xff]
    %v82 = vld [vmem:[%s0 + $0x80] sm:$0xff]
    %v83 = vld [vmem:[%s0 + $0x88] sm:$0xff]
    %v84 = vld [vmem:[%s0 + $0x90] sm:$0xff]
    %v85 = vld [vmem:[%s0 + $0x98] sm:$0xff]
    %v86 = vld [vmem:[%s0 + $0xa0] sm:$0xff]
    %v87 = vld [vmem:[%s0 + $0xa8] sm:$0xff]
    %v88 = vld [vmem:[%s0 + $0xb0] sm:$0xff]
    %v89 = vld [vmem:[%s0 + $0xb8] sm:$0xff]
    %v90 = vld [vmem:[%s0 + $0xc0] sm:$0xff]
    %v91 = vld [vmem:[%s0 + $0xc8] sm:$0xff]
    %v92 = vld [vmem:[%s0 + $0xd0] sm:$0xff]
    %v93 = vld [vmem:[%s0 + $0xd8] sm:$0xff]
    %v94 = vld [vmem:[%s0 + $0xe0] sm:$0xff]
    %v95 = vld [vmem:[%s0 + $0xe8] sm:$0xff]
    %v96 = vld [vmem:[%s0 + $0xf0] sm:$0xff]
    %v97 = vld [vmem:[%s0 + $0xf8] sm:$0xff]
    %v98 = vpack.c.bf16 %v67, %v66
    %v99 = vpack.c.bf16 %v69, %v68
    %v100 = vpack.c.bf16 %v71, %v70
    %v101 = vpack.c.bf16 %v73, %v72
    %v102 = vpack.c.bf16 %v75, %v74
    %v103 = vpack.c.bf16 %v77, %v76
    %v104 = vpack.c.bf16 %v79, %v78
    %v105 = vpack.c.bf16 %v81, %v80
    %v106 = vpack.c.bf16 %v83, %v82
    %v107 = vpack.c.bf16 %v85, %v84
    %v108 = vpack.c.bf16 %v87, %v86
    %v109 = vpack.c.bf16 %v89, %v88
    %v110 = vpack.c.bf16 %v91, %v90
    %v111 = vpack.c.bf16 %v93, %v92
    %v112 = vpack.c.bf16 %v95, %v94
    %v113 = vpack.c.bf16 %v97, %v96
    %v114 = vld [vmem:[#allocation2] sm:$0xff]
    %v115 = vld [vmem:[#allocation2 + $0x8] sm:$0xff]
    %v116 = vld [vmem:[#allocation2 + $0x10] sm:$0xff]
    %v117 = vld [vmem:[#allocation2 + $0x18] sm:$0xff]
    %v118 = vld [vmem:[#allocation2 + $0x20] sm:$0xff]
    %v119 = vld [vmem:[#allocation2 + $0x28] sm:$0xff]
    %v120 = vld [vmem:[#allocation2 + $0x30] sm:$0xff]
    %v121 = vld [vmem:[#allocation2 + $0x38] sm:$0xff]
    %v122 = vld [vmem:[%s2] sm:$0x3]
    %v124 = vlaneseq
    %v125 = vshrl.u32 %v124, 7
    %v126 = vsub.s32 0, %v125
    %v127 = vrot.slane %v122, %v126
    %v128 = vlaneseq
    %v129 = vshrl.u32 %v128, 7
    %v130 = vsub.s32 1, %v129
    %v131 = vrot.slane %v122, %v130
    %v142 = vunpack.c.l.b16 %v114
    %v143 = vunpack.c.h.b16 %v114
    %v144 = vunpack.c.l.b16 %v115
    %v145 = vunpack.c.h.b16 %v115
    %v146 = vunpack.c.l.b16 %v116
    %v147 = vunpack.c.h.b16 %v116
    %v148 = vunpack.c.l.b16 %v117
    %v149 = vunpack.c.h.b16 %v117
    %v150 = vunpack.c.l.b16 %v118
    %v151 = vunpack.c.h.b16 %v118
    %v152 = vunpack.c.l.b16 %v119
    %v153 = vunpack.c.h.b16 %v119
    %v154 = vunpack.c.l.b16 %v120
    %v155 = vunpack.c.h.b16 %v120
    %v156 = vunpack.c.l.b16 %v121
    %v157 = vunpack.c.h.b16 %v121
    %v158 = vpack.c.b16 %v144, %v142
    %v159 = vpack.c.b16 %v145, %v143
    %v160 = vpack.c.b16 %v148, %v146
    %v161 = vpack.c.b16 %v149, %v147
    %v162 = vpack.c.b16 %v152, %v150
    %v163 = vpack.c.b16 %v153, %v151
    %v164 = vpack.c.b16 %v156, %v154
    %v165 = vpack.c.b16 %v157, %v155
    %vm174 = vcmask 523264
    %v176 = vsel %vm174, %v98, 0
    %v179 = vsel %vm174, %v99, 0
    %v182 = vsel %vm174, %v100, 0
    %v185 = vsel %vm174, %v101, 0
    %v188 = vsel %vm174, %v102, 0
    %v191 = vsel %vm174, %v103, 0
    %v194 = vsel %vm174, %v104, 0
    %v197 = vsel %vm174, %v105, 0
    %v200 = vsel %vm174, %v106, 0
    %v203 = vsel %vm174, %v107, 0
    %v206 = vsel %vm174, %v108, 0
    %v209 = vsel %vm174, %v109, 0
    %v212 = vsel %vm174, %v110, 0
    %v215 = vsel %vm174, %v111, 0
    %v218 = vsel %vm174, %v112, 0
    %v221 = vsel %vm174, %v113, 0
    %223 = vmatprep.subr.bf16.mxu0 %v159
    %224 = vmatpush1.bf16.msra.mxu0 %v158
    %225 = vmatprep.subr.bf16.mxu0 %v161
    %226 = vmatpush1.bf16.msra.mxu0 %v160
    %227 = vmatprep.subr.bf16.mxu0 %v163
    %228 = vmatpush1.bf16.msra.mxu0 %v162
    %229 = vmatprep.subr.bf16.mxu0 %v165
    %230 = vmatpush1.bf16.msra.mxu0 %v164
    %231 = vmatprep.subr.bf16.mxu0 0
    %232 = vmatpush1.bf16.msra.mxu0 0
    %233 = vmatprep.subr.bf16.mxu0 0
    %234 = vmatpush1.bf16.msra.mxu0 0
    %235 = vmatprep.subr.bf16.mxu0 0
    %236 = vmatpush1.bf16.msra.mxu0 0
    %237 = vmatprep.subr.bf16.mxu0 0
    %238 = vmatpush1.bf16.msra.mxu0 0
    %239 = vmatprep.subr.bf16.mxu0 0
    %240 = vmatpush1.bf16.msra.mxu0 0
    %241 = vmatprep.subr.bf16.mxu0 0
    %242 = vmatpush1.bf16.msra.mxu0 0
    %243 = vmatprep.subr.bf16.mxu0 0
    %244 = vmatpush1.bf16.msra.mxu0 0
    %245 = vmatprep.subr.bf16.mxu0 0
    %246 = vmatpush1.bf16.msra.mxu0 0
    %247 = vmatprep.subr.bf16.mxu0 0
    %248 = vmatpush1.bf16.msra.mxu0 0
    %249 = vmatprep.subr.bf16.mxu0 0
    %250 = vmatpush1.bf16.msra.mxu0 0
    %251 = vmatprep.subr.bf16.mxu0 0
    %252 = vmatpush1.bf16.msra.mxu0 0
    %253 = vmatprep.subr.bf16.mxu0 0
    %254 = vmatpush1.bf16.msra.mxu0 0
    %255 = vmatprep.mubr.bf16.mxu0 0
    %256 = vmatmul.mubr.bf16.gmra.mrb[0].mxu0 %v176
    %v257 = vpop.f32.mrb[0].mxu0
    %v258 = vadd.f32 %v127, %v257
    %v259 = vpop.f32.mrb[0].mxu0
    %v260 = vadd.f32 %v131, %v259
    %v261 = vpop.f32.mrb[0].mxu0
    %v262 = vadd.f32 %v127, %v261
    %v263 = vpop.f32.mrb[0].mxu0
    %v264 = vadd.f32 %v131, %v263
    %265 = vmatprep.mubr.bf16.mxu0 0
    %266 = vmatmul.mubr.bf16.gmra.mrb[0].mxu0 %v179
    %v267 = vpop.f32.mrb[0].mxu0
    %v268 = vadd.f32 %v127, %v267
    %v269 = vpop.f32.mrb[0].mxu0
    %v270 = vadd.f32 %v131, %v269
    %v271 = vpop.f32.mrb[0].mxu0
    %v272 = vadd.f32 %v127, %v271
    %v273 = vpop.f32.mrb[0].mxu0
    %v274 = vadd.f32 %v131, %v273
    %275 = vmatprep.mubr.bf16.mxu0 0
    %276 = vmatmul.mubr.bf16.gmra.mrb[0].mxu0 %v182
    %v277 = vpop.f32.mrb[0].mxu0
    %v278 = vadd.f32 %v127, %v277
    %v279 = vpop.f32.mrb[0].mxu0
    %v280 = vadd.f32 %v131, %v279
    %v281 = vpop.f32.mrb[0].mxu0
    %v282 = vadd.f32 %v127, %v281
    %v283 = vpop.f32.mrb[0].mxu0
    %v284 = vadd.f32 %v131, %v283
    %285 = vmatprep.mubr.bf16.mxu0 0
    %286 = vmatmul.mubr.bf16.gmra.mrb[0].mxu0 %v185
    %v287 = vpop.f32.mrb[0].mxu0
    %v288 = vadd.f32 %v127, %v287
    %v289 = vpop.f32.mrb[0].mxu0
    %v290 = vadd.f32 %v131, %v289
    %v291 = vpop.f32.mrb[0].mxu0
    %v292 = vadd.f32 %v127, %v291
    %v293 = vpop.f32.mrb[0].mxu0
    %v294 = vadd.f32 %v131, %v293
    %295 = vmatprep.mubr.bf16.mxu0 0
    %296 = vmatmul.mubr.bf16.gmra.mrb[0].mxu0 %v188
    %v297 = vpop.f32.mrb[0].mxu0
    %v298 = vadd.f32 %v127, %v297
    %v299 = vpop.f32.mrb[0].mxu0
    %v300 = vadd.f32 %v131, %v299
    %v301 = vpop.f32.mrb[0].mxu0
    %v302 = vadd.f32 %v127, %v301
    %v303 = vpop.f32.mrb[0].mxu0
    %v304 = vadd.f32 %v131, %v303
    %305 = vmatprep.mubr.bf16.mxu0 0
    %306 = vmatmul.mubr.bf16.gmra.mrb[0].mxu0 %v191
    %v307 = vpop.f32.mrb[0].mxu0
    %v308 = vadd.f32 %v127, %v307
    %v309 = vpop.f32.mrb[0].mxu0
    %v310 = vadd.f32 %v131, %v309
    %v311 = vpop.f32.mrb[0].mxu0
    %v312 = vadd.f32 %v127, %v311
    %v313 = vpop.f32.mrb[0].mxu0
    %v314 = vadd.f32 %v131, %v313
    %315 = vmatprep.mubr.bf16.mxu0 0
    %316 = vmatmul.mubr.bf16.gmra.mrb[0].mxu0 %v194
    %v317 = vpop.f32.mrb[0].mxu0
    %v318 = vadd.f32 %v127, %v317
    %v319 = vpop.f32.mrb[0].mxu0
    %v320 = vadd.f32 %v131, %v319
    %v321 = vpop.f32.mrb[0].mxu0
    %v322 = vadd.f32 %v127, %v321
    %v323 = vpop.f32.mrb[0].mxu0
    %v324 = vadd.f32 %v131, %v323
    %325 = vmatprep.mubr.bf16.mxu0 0
    %326 = vmatmul.mubr.bf16.gmra.mrb[0].mxu0 %v197
    %v327 = vpop.f32.mrb[0].mxu0
    %v328 = vadd.f32 %v127, %v327
    %v329 = vpop.f32.mrb[0].mxu0
    %v330 = vadd.f32 %v131, %v329
    %v331 = vpop.f32.mrb[0].mxu0
    %v332 = vadd.f32 %v127, %v331
    %v333 = vpop.f32.mrb[0].mxu0
    %v334 = vadd.f32 %v131, %v333
    %335 = vmatprep.mubr.bf16.mxu0 0
    %336 = vmatmul.mubr.bf16.gmra.mrb[0].mxu0 %v200
    %v337 = vpop.f32.mrb[0].mxu0
    %v338 = vadd.f32 %v127, %v337
    %v339 = vpop.f32.mrb[0].mxu0
    %v340 = vadd.f32 %v131, %v339
    %v341 = vpop.f32.mrb[0].mxu0
    %v342 = vadd.f32 %v127, %v341
    %v343 = vpop.f32.mrb[0].mxu0
    %v344 = vadd.f32 %v131, %v343
    %345 = vmatprep.mubr.bf16.mxu0 0
    %346 = vmatmul.mubr.bf16.gmra.mrb[0].mxu0 %v203
    %v347 = vpop.f32.mrb[0].mxu0
    %v348 = vadd.f32 %v127, %v347
    %v349 = vpop.f32.mrb[0].mxu0
    %v350 = vadd.f32 %v131, %v349
    %v351 = vpop.f32.mrb[0].mxu0
    %v352 = vadd.f32 %v127, %v351
    %v353 = vpop.f32.mrb[0].mxu0
    %v354 = vadd.f32 %v131, %v353
    %355 = vmatprep.mubr.bf16.mxu0 0
    %356 = vmatmul.mubr.bf16.gmra.mrb[0].mxu0 %v206
    %v357 = vpop.f32.mrb[0].mxu0
    %v358 = vadd.f32 %v127, %v357
    %v359 = vpop.f32.mrb[0].mxu0
    %v360 = vadd.f32 %v131, %v359
    %v361 = vpop.f32.mrb[0].mxu0
    %v362 = vadd.f32 %v127, %v361
    %v363 = vpop.f32.mrb[0].mxu0
    %v364 = vadd.f32 %v131, %v363
    %365 = vmatprep.mubr.bf16.mxu0 0
    %366 = vmatmul.mubr.bf16.gmra.mrb[0].mxu0 %v209
    %v367 = vpop.f32.mrb[0].mxu0
    %v368 = vadd.f32 %v127, %v367
    %v369 = vpop.f32.mrb[0].mxu0
    %v370 = vadd.f32 %v131, %v369
    %v371 = vpop.f32.mrb[0].mxu0
    %v372 = vadd.f32 %v127, %v371
    %v373 = vpop.f32.mrb[0].mxu0
    %v374 = vadd.f32 %v131, %v373
    %375 = vmatprep.mubr.bf16.mxu0 0
    %376 = vmatmul.mubr.bf16.gmra.mrb[0].mxu0 %v212
    %v377 = vpop.f32.mrb[0].mxu0
    %v378 = vadd.f32 %v127, %v377
    %v379 = vpop.f32.mrb[0].mxu0
    %v380 = vadd.f32 %v131, %v379
    %v381 = vpop.f32.mrb[0].mxu0
    %v382 = vadd.f32 %v127, %v381
    %v383 = vpop.f32.mrb[0].mxu0
    %v384 = vadd.f32 %v131, %v383
    %385 = vmatprep.mubr.bf16.mxu0 0
    %386 = vmatmul.mubr.bf16.gmra.mrb[0].mxu0 %v215
    %v387 = vpop.f32.mrb[0].mxu0
    %v388 = vadd.f32 %v127, %v387
    %v389 = vpop.f32.mrb[0].mxu0
    %v390 = vadd.f32 %v131, %v389
    %v391 = vpop.f32.mrb[0].mxu0
    %v392 = vadd.f32 %v127, %v391
    %v393 = vpop.f32.mrb[0].mxu0
    %v394 = vadd.f32 %v131, %v393
    %395 = vmatprep.mubr.bf16.mxu0 0
    %396 = vmatmul.mubr.bf16.gmra.mrb[0].mxu0 %v218
    %v397 = vpop.f32.mrb[0].mxu0
    %v398 = vadd.f32 %v127, %v397
    %v399 = vpop.f32.mrb[0].mxu0
    %v400 = vadd.f32 %v131, %v399
    %v401 = vpop.f32.mrb[0].mxu0
    %v402 = vadd.f32 %v127, %v401
    %v403 = vpop.f32.mrb[0].mxu0
    %v404 = vadd.f32 %v131, %v403
    %405 = vmatprep.mubr.bf16.mxu0 0
    %406 = vmatmul.mubr.bf16.gmra.mrb[0].mxu0 %v221
    %v407 = vpop.f32.mrb[0].mxu0
    %v408 = vadd.f32 %v127, %v407
    %v409 = vpop.f32.mrb[0].mxu0
    %v410 = vadd.f32 %v131, %v409
    %v411 = vpop.f32.mrb[0].mxu0
    %v412 = vadd.f32 %v127, %v411
    %v413 = vpop.f32.mrb[0].mxu0
    %v414 = vadd.f32 %v131, %v413
    %415 = vdwg.mxu0
    %v416 = vpack.c.bf16 %v262, %v258
    %v417 = vpack.c.bf16 %v264, %v260
    %v418 = vpack.c.bf16 %v272, %v268
    %v419 = vpack.c.bf16 %v274, %v270
    %v420 = vpack.c.bf16 %v282, %v278
    %v421 = vpack.c.bf16 %v284, %v280
    %v422 = vpack.c.bf16 %v292, %v288
    %v423 = vpack.c.bf16 %v294, %v290
    %v424 = vpack.c.bf16 %v302, %v298
    %v425 = vpack.c.bf16 %v304, %v300
    %v426 = vpack.c.bf16 %v312, %v308
    %v427 = vpack.c.bf16 %v314, %v310
    %v428 = vpack.c.bf16 %v322, %v318
    %v429 = vpack.c.bf16 %v324, %v320
    %v430 = vpack.c.bf16 %v332, %v328
    %v431 = vpack.c.bf16 %v334, %v330
    %v432 = vpack.c.bf16 %v342, %v338
    %v433 = vpack.c.bf16 %v344, %v340
    %v434 = vpack.c.bf16 %v352, %v348
    %v435 = vpack.c.bf16 %v354, %v350
    %v436 = vpack.c.bf16 %v362, %v358
    %v437 = vpack.c.bf16 %v364, %v360
    %v438 = vpack.c.bf16 %v372, %v368
    %v439 = vpack.c.bf16 %v374, %v370
    %v440 = vpack.c.bf16 %v382, %v378
    %v441 = vpack.c.bf16 %v384, %v380
    %v442 = vpack.c.bf16 %v392, %v388
    %v443 = vpack.c.bf16 %v394, %v390
    %v444 = vpack.c.bf16 %v402, %v398
    %v445 = vpack.c.bf16 %v404, %v400
    %v446 = vpack.c.bf16 %v412, %v408
    %v447 = vpack.c.bf16 %v414, %v410
    %v448 = vmul.bf16 %v416, 1056980736
    %v449 = vmul.bf16 %v417, 1056980736
    %v450 = vmul.bf16 %v418, 1056980736
    %v451 = vmul.bf16 %v419, 1056980736
    %v452 = vmul.bf16 %v420, 1056980736
    %v453 = vmul.bf16 %v421, 1056980736
    %v454 = vmul.bf16 %v422, 1056980736
    %v455 = vmul.bf16 %v423, 1056980736
    %v456 = vmul.bf16 %v424, 1056980736
    %v457 = vmul.bf16 %v425, 1056980736
    %v458 = vmul.bf16 %v426, 1056980736
    %v459 = vmul.bf16 %v427, 1056980736
    %v460 = vmul.bf16 %v428, 1056980736
    %v461 = vmul.bf16 %v429, 1056980736
    %v462 = vmul.bf16 %v430, 1056980736
    %v463 = vmul.bf16 %v431, 1056980736
    %v464 = vmul.bf16 %v432, 1056980736
    %v465 = vmul.bf16 %v433, 1056980736
    %v466 = vmul.bf16 %v434, 1056980736
    %v467 = vmul.bf16 %v435, 1056980736
    %v468 = vmul.bf16 %v436, 1056980736
    %v469 = vmul.bf16 %v437, 1056980736
    %v470 = vmul.bf16 %v438, 1056980736
    %v471 = vmul.bf16 %v439, 1056980736
    %v472 = vmul.bf16 %v440, 1056980736
    %v473 = vmul.bf16 %v441, 1056980736
    %v474 = vmul.bf16 %v442, 1056980736
    %v475 = vmul.bf16 %v443, 1056980736
    %v476 = vmul.bf16 %v444, 1056980736
    %v477 = vmul.bf16 %v445, 1056980736
    %v478 = vmul.bf16 %v446, 1056980736
    %v479 = vmul.bf16 %v447, 1056980736
    %v480 = vmul.bf16 %v416, 1027030327
    %v481 = vmul.bf16 %v417, 1027030327
    %v482 = vmul.bf16 %v418, 1027030327
    %v483 = vmul.bf16 %v419, 1027030327
    %v484 = vmul.bf16 %v420, 1027030327
    %v485 = vmul.bf16 %v421, 1027030327
    %v486 = vmul.bf16 %v422, 1027030327
    %v487 = vmul.bf16 %v423, 1027030327
    %v488 = vmul.bf16 %v424, 1027030327
    %v489 = vmul.bf16 %v425, 1027030327
    %v490 = vmul.bf16 %v426, 1027030327
    %v491 = vmul.bf16 %v427, 1027030327
    %v492 = vmul.bf16 %v428, 1027030327
    %v493 = vmul.bf16 %v429, 1027030327
    %v494 = vmul.bf16 %v430, 1027030327
    %v495 = vmul.bf16 %v431, 1027030327
    %v496 = vmul.bf16 %v432, 1027030327
    %v497 = vmul.bf16 %v433, 1027030327
    %v498 = vmul.bf16 %v434, 1027030327
    %v499 = vmul.bf16 %v435, 1027030327
    %v500 = vmul.bf16 %v436, 1027030327
    %v501 = vmul.bf16 %v437, 1027030327
    %v502 = vmul.bf16 %v438, 1027030327
    %v503 = vmul.bf16 %v439, 1027030327
    %v504 = vmul.bf16 %v440, 1027030327
    %v505 = vmul.bf16 %v441, 1027030327
    %v506 = vmul.bf16 %v442, 1027030327
    %v507 = vmul.bf16 %v443, 1027030327
    %v508 = vmul.bf16 %v444, 1027030327
    %v509 = vmul.bf16 %v445, 1027030327
    %v510 = vmul.bf16 %v446, 1027030327
    %v511 = vmul.bf16 %v447, 1027030327
    %v512 = vmul.bf16 %v480, %v416
    %v513 = vmul.bf16 %v481, %v417
    %v514 = vmul.bf16 %v482, %v418
    %v515 = vmul.bf16 %v483, %v419
    %v516 = vmul.bf16 %v484, %v420
    %v517 = vmul.bf16 %v485, %v421
    %v518 = vmul.bf16 %v486, %v422
    %v519 = vmul.bf16 %v487, %v423
    %v520 = vmul.bf16 %v488, %v424
    %v521 = vmul.bf16 %v489, %v425
    %v522 = vmul.bf16 %v490, %v426
    %v523 = vmul.bf16 %v491, %v427
    %v524 = vmul.bf16 %v492, %v428
    %v525 = vmul.bf16 %v493, %v429
    %v526 = vmul.bf16 %v494, %v430
    %v527 = vmul.bf16 %v495, %v431
    %v528 = vmul.bf16 %v496, %v432
    %v529 = vmul.bf16 %v497, %v433
    %v530 = vmul.bf16 %v498, %v434
    %v531 = vmul.bf16 %v499, %v435
    %v532 = vmul.bf16 %v500, %v436
    %v533 = vmul.bf16 %v501, %v437
    %v534 = vmul.bf16 %v502, %v438
    %v535 = vmul.bf16 %v503, %v439
    %v536 = vmul.bf16 %v504, %v440
    %v537 = vmul.bf16 %v505, %v441
    %v538 = vmul.bf16 %v506, %v442
    %v539 = vmul.bf16 %v507, %v443
    %v540 = vmul.bf16 %v508, %v444
    %v541 = vmul.bf16 %v509, %v445
    %v542 = vmul.bf16 %v510, %v446
    %v543 = vmul.bf16 %v511, %v447
    %v544 = vmul.bf16 %v512, %v416
    %v545 = vmul.bf16 %v513, %v417
    %v546 = vmul.bf16 %v514, %v418
    %v547 = vmul.bf16 %v515, %v419
    %v548 = vmul.bf16 %v516, %v420
    %v549 = vmul.bf16 %v517, %v421
    %v550 = vmul.bf16 %v518, %v422
    %v551 = vmul.bf16 %v519, %v423
    %v552 = vmul.bf16 %v520, %v424
    %v553 = vmul.bf16 %v521, %v425
    %v554 = vmul.bf16 %v522, %v426
    %v555 = vmul.bf16 %v523, %v427
    %v556 = vmul.bf16 %v524, %v428
    %v557 = vmul.bf16 %v525, %v429
    %v558 = vmul.bf16 %v526, %v430
    %v559 = vmul.bf16 %v527, %v431
    %v560 = vmul.bf16 %v528, %v432
    %v561 = vmul.bf16 %v529, %v433
    %v562 = vmul.bf16 %v530, %v434
    %v563 = vmul.bf16 %v531, %v435
    %v564 = vmul.bf16 %v532, %v436
    %v565 = vmul.bf16 %v533, %v437
    %v566 = vmul.bf16 %v534, %v438
    %v567 = vmul.bf16 %v535, %v439
    %v568 = vmul.bf16 %v536, %v440
    %v569 = vmul.bf16 %v537, %v441
    %v570 = vmul.bf16 %v538, %v442
    %v571 = vmul.bf16 %v539, %v443
    %v572 = vmul.bf16 %v540, %v444
    %v573 = vmul.bf16 %v541, %v445
    %v574 = vmul.bf16 %v542, %v446
    %v575 = vmul.bf16 %v543, %v447
    %v576 = vadd.bf16 %v416, %v544
    %v577 = vadd.bf16 %v417, %v545
    %v578 = vadd.bf16 %v418, %v546
    %v579 = vadd.bf16 %v419, %v547
    %v580 = vadd.bf16 %v420, %v548
    %v581 = vadd.bf16 %v421, %v549
    %v582 = vadd.bf16 %v422, %v550
    %v583 = vadd.bf16 %v423, %v551
    %v584 = vadd.bf16 %v424, %v552
    %v585 = vadd.bf16 %v425, %v553
    %v586 = vadd.bf16 %v426, %v554
    %v587 = vadd.bf16 %v427, %v555
    %v588 = vadd.bf16 %v428, %v556
    %v589 = vadd.bf16 %v429, %v557
    %v590 = vadd.bf16 %v430, %v558
    %v591 = vadd.bf16 %v431, %v559
    %v592 = vadd.bf16 %v432, %v560
    %v593 = vadd.bf16 %v433, %v561
    %v594 = vadd.bf16 %v434, %v562
    %v595 = vadd.bf16 %v435, %v563
    %v596 = vadd.bf16 %v436, %v564
    %v597 = vadd.bf16 %v437, %v565
    %v598 = vadd.bf16 %v438, %v566
    %v599 = vadd.bf16 %v439, %v567
    %v600 = vadd.bf16 %v440, %v568
    %v601 = vadd.bf16 %v441, %v569
    %v602 = vadd.bf16 %v442, %v570
    %v603 = vadd.bf16 %v443, %v571
    %v604 = vadd.bf16 %v444, %v572
    %v605 = vadd.bf16 %v445, %v573
    %v606 = vadd.bf16 %v446, %v574
    %v607 = vadd.bf16 %v447, %v575
    %v608 = vmul.bf16 %v576, 1061961548
    %v609 = vmul.bf16 %v577, 1061961548
    %v610 = vmul.bf16 %v578, 1061961548
    %v611 = vmul.bf16 %v579, 1061961548
    %v612 = vmul.bf16 %v580, 1061961548
    %v613 = vmul.bf16 %v581, 1061961548
    %v614 = vmul.bf16 %v582, 1061961548
    %v615 = vmul.bf16 %v583, 1061961548
    %v616 = vmul.bf16 %v584, 1061961548
    %v617 = vmul.bf16 %v585, 1061961548
    %v618 = vmul.bf16 %v586, 1061961548
    %v619 = vmul.bf16 %v587, 1061961548
    %v620 = vmul.bf16 %v588, 1061961548
    %v621 = vmul.bf16 %v589, 1061961548
    %v622 = vmul.bf16 %v590, 1061961548
    %v623 = vmul.bf16 %v591, 1061961548
    %v624 = vmul.bf16 %v592, 1061961548
    %v625 = vmul.bf16 %v593, 1061961548
    %v626 = vmul.bf16 %v594, 1061961548
    %v627 = vmul.bf16 %v595, 1061961548
    %v628 = vmul.bf16 %v596, 1061961548
    %v629 = vmul.bf16 %v597, 1061961548
    %v630 = vmul.bf16 %v598, 1061961548
    %v631 = vmul.bf16 %v599, 1061961548
    %v632 = vmul.bf16 %v600, 1061961548
    %v633 = vmul.bf16 %v601, 1061961548
    %v634 = vmul.bf16 %v602, 1061961548
    %v635 = vmul.bf16 %v603, 1061961548
    %v636 = vmul.bf16 %v604, 1061961548
    %v637 = vmul.bf16 %v605, 1061961548
    %v638 = vmul.bf16 %v606, 1061961548
    %v639 = vmul.bf16 %v607, 1061961548
    %v640 = vtanh.bf16.pop %v608
    %v641 = vtanh.bf16.pop %v609
    %v642 = vtanh.bf16.pop %v610
    %v643 = vtanh.bf16.pop %v611
    %v644 = vtanh.bf16.pop %v612
    %v645 = vtanh.bf16.pop %v613
    %v646 = vtanh.bf16.pop %v614
    %v647 = vtanh.bf16.pop %v615
    %v648 = vtanh.bf16.pop %v616
    %v649 = vtanh.bf16.pop %v617
    %v650 = vtanh.bf16.pop %v618
    %v651 = vtanh.bf16.pop %v619
    %v652 = vtanh.bf16.pop %v620
    %v653 = vtanh.bf16.pop %v621
    %v654 = vtanh.bf16.pop %v622
    %v655 = vtanh.bf16.pop %v623
    %v656 = vtanh.bf16.pop %v624
    %v657 = vtanh.bf16.pop %v625
    %v658 = vtanh.bf16.pop %v626
    %v659 = vtanh.bf16.pop %v627
    %v660 = vtanh.bf16.pop %v628
    %v661 = vtanh.bf16.pop %v629
    %v662 = vtanh.bf16.pop %v630
    %v663 = vtanh.bf16.pop %v631
    %v664 = vtanh.bf16.pop %v632
    %v665 = vtanh.bf16.pop %v633
    %v666 = vtanh.bf16.pop %v634
    %v667 = vtanh.bf16.pop %v635
    %v668 = vtanh.bf16.pop %v636
    %v669 = vtanh.bf16.pop %v637
    %v670 = vtanh.bf16.pop %v638
    %v671 = vtanh.bf16.pop %v639
    %v672 = vadd.bf16 %v640, 1065369472
    %v673 = vadd.bf16 %v641, 1065369472
    %v674 = vadd.bf16 %v642, 1065369472
    %v675 = vadd.bf16 %v643, 1065369472
    %v676 = vadd.bf16 %v644, 1065369472
    %v677 = vadd.bf16 %v645, 1065369472
    %v678 = vadd.bf16 %v646, 1065369472
    %v679 = vadd.bf16 %v647, 1065369472
    %v680 = vadd.bf16 %v648, 1065369472
    %v681 = vadd.bf16 %v649, 1065369472
    %v682 = vadd.bf16 %v650, 1065369472
    %v683 = vadd.bf16 %v651, 1065369472
    %v684 = vadd.bf16 %v652, 1065369472
    %v685 = vadd.bf16 %v653, 1065369472
    %v686 = vadd.bf16 %v654, 1065369472
    %v687 = vadd.bf16 %v655, 1065369472
    %v688 = vadd.bf16 %v656, 1065369472
    %v689 = vadd.bf16 %v657, 1065369472
    %v690 = vadd.bf16 %v658, 1065369472
    %v691 = vadd.bf16 %v659, 1065369472
    %v692 = vadd.bf16 %v660, 1065369472
    %v693 = vadd.bf16 %v661, 1065369472
    %v694 = vadd.bf16 %v662, 1065369472
    %v695 = vadd.bf16 %v663, 1065369472
    %v696 = vadd.bf16 %v664, 1065369472
    %v697 = vadd.bf16 %v665, 1065369472
    %v698 = vadd.bf16 %v666, 1065369472
    %v699 = vadd.bf16 %v667, 1065369472
    %v700 = vadd.bf16 %v668, 1065369472
    %v701 = vadd.bf16 %v669, 1065369472
    %v702 = vadd.bf16 %v670, 1065369472
    %v703 = vadd.bf16 %v671, 1065369472
    %v704 = vmul.bf16 %v448, %v672
    %v705 = vmul.bf16 %v449, %v673
    %v706 = vmul.bf16 %v450, %v674
    %v707 = vmul.bf16 %v451, %v675
    %v708 = vmul.bf16 %v452, %v676
    %v709 = vmul.bf16 %v453, %v677
    %v710 = vmul.bf16 %v454, %v678
    %v711 = vmul.bf16 %v455, %v679
    %v712 = vmul.bf16 %v456, %v680
    %v713 = vmul.bf16 %v457, %v681
    %v714 = vmul.bf16 %v458, %v682
    %v715 = vmul.bf16 %v459, %v683
    %v716 = vmul.bf16 %v460, %v684
    %v717 = vmul.bf16 %v461, %v685
    %v718 = vmul.bf16 %v462, %v686
    %v719 = vmul.bf16 %v463, %v687
    %v720 = vmul.bf16 %v464, %v688
    %v721 = vmul.bf16 %v465, %v689
    %v722 = vmul.bf16 %v466, %v690
    %v723 = vmul.bf16 %v467, %v691
    %v724 = vmul.bf16 %v468, %v692
    %v725 = vmul.bf16 %v469, %v693
    %v726 = vmul.bf16 %v470, %v694
    %v727 = vmul.bf16 %v471, %v695
    %v728 = vmul.bf16 %v472, %v696
    %v729 = vmul.bf16 %v473, %v697
    %v730 = vmul.bf16 %v474, %v698
    %v731 = vmul.bf16 %v475, %v699
    %v732 = vmul.bf16 %v476, %v700
    %v733 = vmul.bf16 %v477, %v701
    %v734 = vmul.bf16 %v478, %v702
    %v735 = vmul.bf16 %v479, %v703
    %v736 = vld [vmem:[%s3] sm:$0xff]
    %v737 = vld [vmem:[%s3 + $0x8] sm:$0xff]
    %v738 = vld [vmem:[%s3 + $0x10] sm:$0xff]
    %v739 = vld [vmem:[%s3 + $0x18] sm:$0xff]
    %v740 = vld [vmem:[%s3 + $0x20] sm:$0xff]
    %v741 = vld [vmem:[%s3 + $0x28] sm:$0xff]
    %v742 = vld [vmem:[%s3 + $0x30] sm:$0xff]
    %v743 = vld [vmem:[%s3 + $0x38] sm:$0xff]
    %v744 = vld [vmem:[%s3 + $0x40] sm:$0xff]
    %v745 = vld [vmem:[%s3 + $0x48] sm:$0xff]
    %v746 = vld [vmem:[%s3 + $0x50] sm:$0xff]
    %v747 = vld [vmem:[%s3 + $0x58] sm:$0xff]
    %v748 = vld [vmem:[%s3 + $0x60] sm:$0xff]
    %v749 = vld [vmem:[%s3 + $0x68] sm:$0xff]
    %v750 = vld [vmem:[%s3 + $0x70] sm:$0xff]
    %v751 = vld [vmem:[%s3 + $0x78] sm:$0xff]
    %v752 = vld [vmem:[%s3 + $0x80] sm:$0xff]
    %v753 = vld [vmem:[%s3 + $0x88] sm:$0xff]
    %v754 = vld [vmem:[%s3 + $0x90] sm:$0xff]
    %v755 = vld [vmem:[%s3 + $0x98] sm:$0xff]
    %v756 = vld [vmem:[%s3 + $0xa0] sm:$0xff]
    %v757 = vld [vmem:[%s3 + $0xa8] sm:$0xff]
    %v758 = vld [vmem:[%s3 + $0xb0] sm:$0xff]
    %v759 = vld [vmem:[%s3 + $0xb8] sm:$0xff]
    %v760 = vld [vmem:[%s3 + $0xc0] sm:$0xff]
    %v761 = vld [vmem:[%s3 + $0xc8] sm:$0xff]
    %v762 = vld [vmem:[%s3 + $0xd0] sm:$0xff]
    %v763 = vld [vmem:[%s3 + $0xd8] sm:$0xff]
    %v764 = vld [vmem:[%s3 + $0xe0] sm:$0xff]
    %v765 = vld [vmem:[%s3 + $0xe8] sm:$0xff]
    %v766 = vld [vmem:[%s3 + $0xf0] sm:$0xff]
    %v767 = vld [vmem:[%s3 + $0xf8] sm:$0xff]
    %v768 = vld [vmem:[%s4] sm:$0x3]
    %v770 = vlaneseq
    %v771 = vshrl.u32 %v770, 7
    %v772 = vsub.s32 0, %v771
    %v773 = vrot.slane %v768, %v772
    %v774 = vlaneseq
    %v775 = vshrl.u32 %v774, 7
    %v776 = vsub.s32 1, %v775
    %v777 = vrot.slane %v768, %v776
    %v812 = vunpack.c.l.b16 %v736
    %v813 = vunpack.c.h.b16 %v736
    %v814 = vunpack.c.l.b16 %v737
    %v815 = vunpack.c.h.b16 %v737
    %v816 = vunpack.c.l.b16 %v738
    %v817 = vunpack.c.h.b16 %v738
    %v818 = vunpack.c.l.b16 %v739
    %v819 = vunpack.c.h.b16 %v739
    %v820 = vunpack.c.l.b16 %v740
    %v821 = vunpack.c.h.b16 %v740
    %v822 = vunpack.c.l.b16 %v741
    %v823 = vunpack.c.h.b16 %v741
    %v824 = vunpack.c.l.b16 %v742
    %v825 = vunpack.c.h.b16 %v742
    %v826 = vunpack.c.l.b16 %v743
    %v827 = vunpack.c.h.b16 %v743
    %v828 = vunpack.c.l.b16 %v744
    %v829 = vunpack.c.h.b16 %v744
    %v830 = vunpack.c.l.b16 %v745
    %v831 = vunpack.c.h.b16 %v745
    %v832 = vunpack.c.l.b16 %v746
    %v833 = vunpack.c.h.b16 %v746
    %v834 = vunpack.c.l.b16 %v747
    %v835 = vunpack.c.h.b16 %v747
    %v836 = vunpack.c.l.b16 %v748
    %v837 = vunpack.c.h.b16 %v748
    %v838 = vunpack.c.l.b16 %v749
    %v839 = vunpack.c.h.b16 %v749
    %v840 = vunpack.c.l.b16 %v750
    %v841 = vunpack.c.h.b16 %v750
    %v842 = vunpack.c.l.b16 %v751
    %v843 = vunpack.c.h.b16 %v751
    %v844 = vunpack.c.l.b16 %v752
    %v845 = vunpack.c.h.b16 %v752
    %v846 = vunpack.c.l.b16 %v753
    %v847 = vunpack.c.h.b16 %v753
    %v848 = vunpack.c.l.b16 %v754
    %v849 = vunpack.c.h.b16 %v754
    %v850 = vunpack.c.l.b16 %v755
    %v851 = vunpack.c.h.b16 %v755
    %v852 = vunpack.c.l.b16 %v756
    %v853 = vunpack.c.h.b16 %v756
    %v854 = vunpack.c.l.b16 %v757
    %v855 = vunpack.c.h.b16 %v757
    %v856 = vunpack.c.l.b16 %v758
    %v857 = vunpack.c.h.b16 %v758
    %v858 = vunpack.c.l.b16 %v759
    %v859 = vunpack.c.h.b16 %v759
    %v860 = vunpack.c.l.b16 %v760
    %v861 = vunpack.c.h.b16 %v760
    %v862 = vunpack.c.l.b16 %v761
    %v863 = vunpack.c.h.b16 %v761
    %v864 = vunpack.c.l.b16 %v762
    %v865 = vunpack.c.h.b16 %v762
    %v866 = vunpack.c.l.b16 %v763
    %v867 = vunpack.c.h.b16 %v763
    %v868 = vunpack.c.l.b16 %v764
    %v869 = vunpack.c.h.b16 %v764
    %v870 = vunpack.c.l.b16 %v765
    %v871 = vunpack.c.h.b16 %v765
    %v872 = vunpack.c.l.b16 %v766
    %v873 = vunpack.c.h.b16 %v766
    %v874 = vunpack.c.l.b16 %v767
    %v875 = vunpack.c.h.b16 %v767
    %v876 = vpack.c.b16 %v814, %v812
    %v877 = vpack.c.b16 %v815, %v813
    %v878 = vpack.c.b16 %v818, %v816
    %v879 = vpack.c.b16 %v819, %v817
    %v880 = vpack.c.b16 %v822, %v820
    %v881 = vpack.c.b16 %v823, %v821
    %v882 = vpack.c.b16 %v826, %v824
    %v883 = vpack.c.b16 %v827, %v825
    %v884 = vpack.c.b16 %v830, %v828
    %v885 = vpack.c.b16 %v831, %v829
    %v886 = vpack.c.b16 %v834, %v832
    %v887 = vpack.c.b16 %v835, %v833
    %v888 = vpack.c.b16 %v838, %v836
    %v889 = vpack.c.b16 %v839, %v837
    %v890 = vpack.c.b16 %v842, %v840
    %v891 = vpack.c.b16 %v843, %v841
    %v892 = vpack.c.b16 %v846, %v844
    %v893 = vpack.c.b16 %v847, %v845
    %v894 = vpack.c.b16 %v850, %v848
    %v895 = vpack.c.b16 %v851, %v849
    %v896 = vpack.c.b16 %v854, %v852
    %v897 = vpack.c.b16 %v855, %v853
    %v898 = vpack.c.b16 %v858, %v856
    %v899 = vpack.c.b16 %v859, %v857
    %v900 = vpack.c.b16 %v862, %v860
    %v901 = vpack.c.b16 %v863, %v861
    %v902 = vpack.c.b16 %v866, %v864
    %v903 = vpack.c.b16 %v867, %v865
    %v904 = vpack.c.b16 %v870, %v868
    %v905 = vpack.c.b16 %v871, %v869
    %v906 = vpack.c.b16 %v874, %v872
    %v907 = vpack.c.b16 %v875, %v873
    %940 = vmatprep.subr.bf16.mxu0 %v877
    %941 = vmatpush1.bf16.msra.mxu0 %v876
    %942 = vmatprep.subr.bf16.mxu0 %v879
    %943 = vmatpush1.bf16.msra.mxu0 %v878
    %944 = vmatprep.subr.bf16.mxu0 %v881
    %945 = vmatpush1.bf16.msra.mxu0 %v880
    %946 = vmatprep.subr.bf16.mxu0 %v883
    %947 = vmatpush1.bf16.msra.mxu0 %v882
    %948 = vmatprep.subr.bf16.mxu0 %v885
    %949 = vmatpush1.bf16.msra.mxu0 %v884
    %950 = vmatprep.subr.bf16.mxu0 %v887
    %951 = vmatpush1.bf16.msra.mxu0 %v886
    %952 = vmatprep.subr.bf16.mxu0 %v889
    %953 = vmatpush1.bf16.msra.mxu0 %v888
    %954 = vmatprep.subr.bf16.mxu0 %v891
    %955 = vmatpush1.bf16.msra.mxu0 %v890
    %956 = vmatprep.subr.bf16.mxu0 %v893
    %957 = vmatpush1.bf16.msra.mxu0 %v892
    %958 = vmatprep.subr.bf16.mxu0 %v895
    %959 = vmatpush1.bf16.msra.mxu0 %v894
    %960 = vmatprep.subr.bf16.mxu0 %v897
    %961 = vmatpush1.bf16.msra.mxu0 %v896
    %962 = vmatprep.subr.bf16.mxu0 %v899
    %963 = vmatpush1.bf16.msra.mxu0 %v898
    %964 = vmatprep.subr.bf16.mxu0 %v901
    %965 = vmatpush1.bf16.msra.mxu0 %v900
    %966 = vmatprep.subr.bf16.mxu0 %v903
    %967 = vmatpush1.bf16.msra.mxu0 %v902
    %968 = vmatprep.subr.bf16.mxu0 %v905
    %969 = vmatpush1.bf16.msra.mxu0 %v904
    %970 = vmatprep.subr.bf16.mxu0 %v907
    %971 = vmatpush1.bf16.msra.mxu0 %v906
    %972 = vmatprep.mubr.bf16.mxu0 %v705
    %973 = vmatmul.mubr.bf16.gmra.mrb[0].mxu0 %v704
    %v974 = vpop.f32.mrb[0].mxu0
    %v975 = vadd.f32 %v773, %v974
    %v976 = vpop.f32.mrb[0].mxu0
    %v977 = vadd.f32 %v777, %v976
    %v978 = vpop.f32.mrb[0].mxu0
    %v979 = vadd.f32 %v773, %v978
    %v980 = vpop.f32.mrb[0].mxu0
    %v981 = vadd.f32 %v777, %v980
    %982 = vmatprep.mubr.bf16.mxu0 %v707
    %983 = vmatmul.mubr.bf16.gmra.mrb[0].mxu0 %v706
    %v984 = vpop.f32.mrb[0].mxu0
    %v985 = vadd.f32 %v773, %v984
    %v986 = vpop.f32.mrb[0].mxu0
    %v987 = vadd.f32 %v777, %v986
    %v988 = vpop.f32.mrb[0].mxu0
    %v989 = vadd.f32 %v773, %v988
    %v990 = vpop.f32.mrb[0].mxu0
    %v991 = vadd.f32 %v777, %v990
    %992 = vmatprep.mubr.bf16.mxu0 %v709
    %993 = vmatmul.mubr.bf16.gmra.mrb[0].mxu0 %v708
    %v994 = vpop.f32.mrb[0].mxu0
    %v995 = vadd.f32 %v773, %v994
    %v996 = vpop.f32.mrb[0].mxu0
    %v997 = vadd.f32 %v777, %v996
    %v998 = vpop.f32.mrb[0].mxu0
    %v999 = vadd.f32 %v773, %v998
    %v1000 = vpop.f32.mrb[0].mxu0
    %v1001 = vadd.f32 %v777, %v1000
    %1002 = vmatprep.mubr.bf16.mxu0 %v711
    %1003 = vmatmul.mubr.bf16.gmra.mrb[0].mxu0 %v710
    %v1004 = vpop.f32.mrb[0].mxu0
    %v1005 = vadd.f32 %v773, %v1004
    %v1006 = vpop.f32.mrb[0].mxu0
    %v1007 = vadd.f32 %v777, %v1006
    %v1008 = vpop.f32.mrb[0].mxu0
    %v1009 = vadd.f32 %v773, %v1008
    %v1010 = vpop.f32.mrb[0].mxu0
    %v1011 = vadd.f32 %v777, %v1010
    %1012 = vmatprep.mubr.bf16.mxu0 %v713
    %1013 = vmatmul.mubr.bf16.gmra.mrb[0].mxu0 %v712
    %v1014 = vpop.f32.mrb[0].mxu0
    %v1015 = vadd.f32 %v773, %v1014
    %v1016 = vpop.f32.mrb[0].mxu0
    %v1017 = vadd.f32 %v777, %v1016
    %v1018 = vpop.f32.mrb[0].mxu0
    %v1019 = vadd.f32 %v773, %v1018
    %v1020 = vpop.f32.mrb[0].mxu0
    %v1021 = vadd.f32 %v777, %v1020
    %1022 = vmatprep.mubr.bf16.mxu0 %v715
    %1023 = vmatmul.mubr.bf16.gmra.mrb[0].mxu0 %v714
    %v1024 = vpop.f32.mrb[0].mxu0
    %v1025 = vadd.f32 %v773, %v1024
    %v1026 = vpop.f32.mrb[0].mxu0
    %v1027 = vadd.f32 %v777, %v1026
    %v1028 = vpop.f32.mrb[0].mxu0
    %v1029 = vadd.f32 %v773, %v1028
    %v1030 = vpop.f32.mrb[0].mxu0
    %v1031 = vadd.f32 %v777, %v1030
    %1032 = vmatprep.mubr.bf16.mxu0 %v717
    %1033 = vmatmul.mubr.bf16.gmra.mrb[0].mxu0 %v716
    %v1034 = vpop.f32.mrb[0].mxu0
    %v1035 = vadd.f32 %v773, %v1034
    %v1036 = vpop.f32.mrb[0].mxu0
    %v1037 = vadd.f32 %v777, %v1036
    %v1038 = vpop.f32.mrb[0].mxu0
    %v1039 = vadd.f32 %v773, %v1038
    %v1040 = vpop.f32.mrb[0].mxu0
    %v1041 = vadd.f32 %v777, %v1040
    %1042 = vmatprep.mubr.bf16.mxu0 %v719
    %1043 = vmatmul.mubr.bf16.gmra.mrb[0].mxu0 %v718
    %v1044 = vpop.f32.mrb[0].mxu0
    %v1045 = vadd.f32 %v773, %v1044
    %v1046 = vpop.f32.mrb[0].mxu0
    %v1047 = vadd.f32 %v777, %v1046
    %v1048 = vpop.f32.mrb[0].mxu0
    %v1049 = vadd.f32 %v773, %v1048
    %v1050 = vpop.f32.mrb[0].mxu0
    %v1051 = vadd.f32 %v777, %v1050
    %1052 = vmatprep.mubr.bf16.mxu0 %v721
    %1053 = vmatmul.mubr.bf16.gmra.mrb[0].mxu0 %v720
    %v1054 = vpop.f32.mrb[0].mxu0
    %v1055 = vadd.f32 %v773, %v1054
    %v1056 = vpop.f32.mrb[0].mxu0
    %v1057 = vadd.f32 %v777, %v1056
    %v1058 = vpop.f32.mrb[0].mxu0
    %v1059 = vadd.f32 %v773, %v1058
    %v1060 = vpop.f32.mrb[0].mxu0
    %v1061 = vadd.f32 %v777, %v1060
    %1062 = vmatprep.mubr.bf16.mxu0 %v723
    %1063 = vmatmul.mubr.bf16.gmra.mrb[0].mxu0 %v722
    %v1064 = vpop.f32.mrb[0].mxu0
    %v1065 = vadd.f32 %v773, %v1064
    %v1066 = vpop.f32.mrb[0].mxu0
    %v1067 = vadd.f32 %v777, %v1066
    %v1068 = vpop.f32.mrb[0].mxu0
    %v1069 = vadd.f32 %v773, %v1068
    %v1070 = vpop.f32.mrb[0].mxu0
    %v1071 = vadd.f32 %v777, %v1070
    %1072 = vmatprep.mubr.bf16.mxu0 %v725
    %1073 = vmatmul.mubr.bf16.gmra.mrb[0].mxu0 %v724
    %v1074 = vpop.f32.mrb[0].mxu0
    %v1075 = vadd.f32 %v773, %v1074
    %v1076 = vpop.f32.mrb[0].mxu0
    %v1077 = vadd.f32 %v777, %v1076
    %v1078 = vpop.f32.mrb[0].mxu0
    %v1079 = vadd.f32 %v773, %v1078
    %v1080 = vpop.f32.mrb[0].mxu0
    %v1081 = vadd.f32 %v777, %v1080
    %1082 = vmatprep.mubr.bf16.mxu0 %v727
    %1083 = vmatmul.mubr.bf16.gmra.mrb[0].mxu0 %v726
    %v1084 = vpop.f32.mrb[0].mxu0
    %v1085 = vadd.f32 %v773, %v1084
    %v1086 = vpop.f32.mrb[0].mxu0
    %v1087 = vadd.f32 %v777, %v1086
    %v1088 = vpop.f32.mrb[0].mxu0
    %v1089 = vadd.f32 %v773, %v1088
    %v1090 = vpop.f32.mrb[0].mxu0
    %v1091 = vadd.f32 %v777, %v1090
    %1092 = vmatprep.mubr.bf16.mxu0 %v729
    %1093 = vmatmul.mubr.bf16.gmra.mrb[0].mxu0 %v728
    %v1094 = vpop.f32.mrb[0].mxu0
    %v1095 = vadd.f32 %v773, %v1094
    %v1096 = vpop.f32.mrb[0].mxu0
    %v1097 = vadd.f32 %v777, %v1096
    %v1098 = vpop.f32.mrb[0].mxu0
    %v1099 = vadd.f32 %v773, %v1098
    %v1100 = vpop.f32.mrb[0].mxu0
    %v1101 = vadd.f32 %v777, %v1100
    %1102 = vmatprep.mubr.bf16.mxu0 %v731
    %1103 = vmatmul.mubr.bf16.gmra.mrb[0].mxu0 %v730
    %v1104 = vpop.f32.mrb[0].mxu0
    %v1105 = vadd.f32 %v773, %v1104
    %v1106 = vpop.f32.mrb[0].mxu0
    %v1107 = vadd.f32 %v777, %v1106
    %v1108 = vpop.f32.mrb[0].mxu0
    %v1109 = vadd.f32 %v773, %v1108
    %v1110 = vpop.f32.mrb[0].mxu0
    %v1111 = vadd.f32 %v777, %v1110
    %1112 = vmatprep.mubr.bf16.mxu0 %v733
    %1113 = vmatmul.mubr.bf16.gmra.mrb[0].mxu0 %v732
    %v1114 = vpop.f32.mrb[0].mxu0
    %v1115 = vadd.f32 %v773, %v1114
    %v1116 = vpop.f32.mrb[0].mxu0
    %v1117 = vadd.f32 %v777, %v1116
    %v1118 = vpop.f32.mrb[0].mxu0
    %v1119 = vadd.f32 %v773, %v1118
    %v1120 = vpop.f32.mrb[0].mxu0
    %v1121 = vadd.f32 %v777, %v1120
    %1122 = vmatprep.mubr.bf16.mxu0 %v735
    %1123 = vmatmul.mubr.bf16.gmra.mrb[0].mxu0 %v734
    %v1124 = vpop.f32.mrb[0].mxu0
    %v1125 = vadd.f32 %v773, %v1124
    %v1126 = vpop.f32.mrb[0].mxu0
    %v1127 = vadd.f32 %v777, %v1126
    %v1128 = vpop.f32.mrb[0].mxu0
    %v1129 = vadd.f32 %v773, %v1128
    %v1130 = vpop.f32.mrb[0].mxu0
    %v1131 = vadd.f32 %v777, %v1130
    %1132 = vdwg.mxu0
    %v1133 = vpack.c.bf16 %v979, %v975
    %v1134 = vpack.c.bf16 %v981, %v977
    %v1135 = vpack.c.bf16 %v989, %v985
    %v1136 = vpack.c.bf16 %v991, %v987
    %v1137 = vpack.c.bf16 %v999, %v995
    %v1138 = vpack.c.bf16 %v1001, %v997
    %v1139 = vpack.c.bf16 %v1009, %v1005
    %v1140 = vpack.c.bf16 %v1011, %v1007
    %v1141 = vpack.c.bf16 %v1019, %v1015
    %v1142 = vpack.c.bf16 %v1021, %v1017
    %v1143 = vpack.c.bf16 %v1029, %v1025
    %v1144 = vpack.c.bf16 %v1031, %v1027
    %v1145 = vpack.c.bf16 %v1039, %v1035
    %v1146 = vpack.c.bf16 %v1041, %v1037
    %v1147 = vpack.c.bf16 %v1049, %v1045
    %v1148 = vpack.c.bf16 %v1051, %v1047
    %v1149 = vpack.c.bf16 %v1059, %v1055
    %v1150 = vpack.c.bf16 %v1061, %v1057
    %v1151 = vpack.c.bf16 %v1069, %v1065
    %v1152 = vpack.c.bf16 %v1071, %v1067
    %v1153 = vpack.c.bf16 %v1079, %v1075
    %v1154 = vpack.c.bf16 %v1081, %v1077
    %v1155 = vpack.c.bf16 %v1089, %v1085
    %v1156 = vpack.c.bf16 %v1091, %v1087
    %v1157 = vpack.c.bf16 %v1099, %v1095
    %v1158 = vpack.c.bf16 %v1101, %v1097
    %v1159 = vpack.c.bf16 %v1109, %v1105
    %v1160 = vpack.c.bf16 %v1111, %v1107
    %v1161 = vpack.c.bf16 %v1119, %v1115
    %v1162 = vpack.c.bf16 %v1121, %v1117
    %v1163 = vpack.c.bf16 %v1129, %v1125
    %v1164 = vpack.c.bf16 %v1131, %v1127
    %v1165 = vmul.bf16 %v1133, 1056980736
    %v1166 = vmul.bf16 %v1134, 1056980736
    %v1167 = vmul.bf16 %v1135, 1056980736
    %v1168 = vmul.bf16 %v1136, 1056980736
    %v1169 = vmul.bf16 %v1137, 1056980736
    %v1170 = vmul.bf16 %v1138, 1056980736
    %v1171 = vmul.bf16 %v1139, 1056980736
    %v1172 = vmul.bf16 %v1140, 1056980736
    %v1173 = vmul.bf16 %v1141, 1056980736
    %v1174 = vmul.bf16 %v1142, 1056980736
    %v1175 = vmul.bf16 %v1143, 1056980736
    %v1176 = vmul.bf16 %v1144, 1056980736
    %v1177 = vmul.bf16 %v1145, 1056980736
    %v1178 = vmul.bf16 %v1146, 1056980736
    %v1179 = vmul.bf16 %v1147, 1056980736
    %v1180 = vmul.bf16 %v1148, 1056980736
    %v1181 = vmul.bf16 %v1149, 1056980736
    %v1182 = vmul.bf16 %v1150, 1056980736
    %v1183 = vmul.bf16 %v1151, 1056980736
    %v1184 = vmul.bf16 %v1152, 1056980736
    %v1185 = vmul.bf16 %v1153, 1056980736
    %v1186 = vmul.bf16 %v1154, 1056980736
    %v1187 = vmul.bf16 %v1155, 1056980736
    %v1188 = vmul.bf16 %v1156, 1056980736
    %v1189 = vmul.bf16 %v1157, 1056980736
    %v1190 = vmul.bf16 %v1158, 1056980736
    %v1191 = vmul.bf16 %v1159, 1056980736
    %v1192 = vmul.bf16 %v1160, 1056980736
    %v1193 = vmul.bf16 %v1161, 1056980736
    %v1194 = vmul.bf16 %v1162, 1056980736
    %v1195 = vmul.bf16 %v1163, 1056980736
    %v1196 = vmul.bf16 %v1164, 1056980736
    %v1197 = vmul.bf16 %v1133, 1027030327
    %v1198 = vmul.bf16 %v1134, 1027030327
    %v1199 = vmul.bf16 %v1135, 1027030327
    %v1200 = vmul.bf16 %v1136, 1027030327
    %v1201 = vmul.bf16 %v1137, 1027030327
    %v1202 = vmul.bf16 %v1138, 1027030327
    %v1203 = vmul.bf16 %v1139, 1027030327
    %v1204 = vmul.bf16 %v1140, 1027030327
    %v1205 = vmul.bf16 %v1141, 1027030327
    %v1206 = vmul.bf16 %v1142, 1027030327
    %v1207 = vmul.bf16 %v1143, 1027030327
    %v1208 = vmul.bf16 %v1144, 1027030327
    %v1209 = vmul.bf16 %v1145, 1027030327
    %v1210 = vmul.bf16 %v1146, 1027030327
    %v1211 = vmul.bf16 %v1147, 1027030327
    %v1212 = vmul.bf16 %v1148, 1027030327
    %v1213 = vmul.bf16 %v1149, 1027030327
    %v1214 = vmul.bf16 %v1150, 1027030327
    %v1215 = vmul.bf16 %v1151, 1027030327
    %v1216 = vmul.bf16 %v1152, 1027030327
    %v1217 = vmul.bf16 %v1153, 1027030327
    %v1218 = vmul.bf16 %v1154, 1027030327
    %v1219 = vmul.bf16 %v1155, 1027030327
    %v1220 = vmul.bf16 %v1156, 1027030327
    %v1221 = vmul.bf16 %v1157, 1027030327
    %v1222 = vmul.bf16 %v1158, 1027030327
    %v1223 = vmul.bf16 %v1159, 1027030327
    %v1224 = vmul.bf16 %v1160, 1027030327
    %v1225 = vmul.bf16 %v1161, 1027030327
    %v1226 = vmul.bf16 %v1162, 1027030327
    %v1227 = vmul.bf16 %v1163, 1027030327
    %v1228 = vmul.bf16 %v1164, 1027030327
    %v1229 = vmul.bf16 %v1197, %v1133
    %v1230 = vmul.bf16 %v1198, %v1134
    %v1231 = vmul.bf16 %v1199, %v1135
    %v1232 = vmul.bf16 %v1200, %v1136
    %v1233 = vmul.bf16 %v1201, %v1137
    %v1234 = vmul.bf16 %v1202, %v1138
    %v1235 = vmul.bf16 %v1203, %v1139
    %v1236 = vmul.bf16 %v1204, %v1140
    %v1237 = vmul.bf16 %v1205, %v1141
    %v1238 = vmul.bf16 %v1206, %v1142
    %v1239 = vmul.bf16 %v1207, %v1143
    %v1240 = vmul.bf16 %v1208, %v1144
    %v1241 = vmul.bf16 %v1209, %v1145
    %v1242 = vmul.bf16 %v1210, %v1146
    %v1243 = vmul.bf16 %v1211, %v1147
    %v1244 = vmul.bf16 %v1212, %v1148
    %v1245 = vmul.bf16 %v1213, %v1149
    %v1246 = vmul.bf16 %v1214, %v1150
    %v1247 = vmul.bf16 %v1215, %v1151
    %v1248 = vmul.bf16 %v1216, %v1152
    %v1249 = vmul.bf16 %v1217, %v1153
    %v1250 = vmul.bf16 %v1218, %v1154
    %v1251 = vmul.bf16 %v1219, %v1155
    %v1252 = vmul.bf16 %v1220, %v1156
    %v1253 = vmul.bf16 %v1221, %v1157
    %v1254 = vmul.bf16 %v1222, %v1158
    %v1255 = vmul.bf16 %v1223, %v1159
    %v1256 = vmul.bf16 %v1224, %v1160
    %v1257 = vmul.bf16 %v1225, %v1161
    %v1258 = vmul.bf16 %v1226, %v1162
    %v1259 = vmul.bf16 %v1227, %v1163
    %v1260 = vmul.bf16 %v1228, %v1164
    %v1261 = vmul.bf16 %v1229, %v1133
    %v1262 = vmul.bf16 %v1230, %v1134
    %v1263 = vmul.bf16 %v1231, %v1135
    %v1264 = vmul.bf16 %v1232, %v1136
    %v1265 = vmul.bf16 %v1233, %v1137
    %v1266 = vmul.bf16 %v1234, %v1138
    %v1267 = vmul.bf16 %v1235, %v1139
    %v1268 = vmul.bf16 %v1236, %v1140
    %v1269 = vmul.bf16 %v1237, %v1141
    %v1270 = vmul.bf16 %v1238, %v1142
    %v1271 = vmul.bf16 %v1239, %v1143
    %v1272 = vmul.bf16 %v1240, %v1144
    %v1273 = vmul.bf16 %v1241, %v1145
    %v1274 = vmul.bf16 %v1242, %v1146
    %v1275 = vmul.bf16 %v1243, %v1147
    %v1276 = vmul.bf16 %v1244, %v1148
    %v1277 = vmul.bf16 %v1245, %v1149
    %v1278 = vmul.bf16 %v1246, %v1150
    %v1279 = vmul.bf16 %v1247, %v1151
    %v1280 = vmul.bf16 %v1248, %v1152
    %v1281 = vmul.bf16 %v1249, %v1153
    %v1282 = vmul.bf16 %v1250, %v1154
    %v1283 = vmul.bf16 %v1251, %v1155
    %v1284 = vmul.bf16 %v1252, %v1156
    %v1285 = vmul.bf16 %v1253, %v1157
    %v1286 = vmul.bf16 %v1254, %v1158
    %v1287 = vmul.bf16 %v1255, %v1159
    %v1288 = vmul.bf16 %v1256, %v1160
    %v1289 = vmul.bf16 %v1257, %v1161
    %v1290 = vmul.bf16 %v1258, %v1162
    %v1291 = vmul.bf16 %v1259, %v1163
    %v1292 = vmul.bf16 %v1260, %v1164
    %v1293 = vadd.bf16 %v1133, %v1261
    %v1294 = vadd.bf16 %v1134, %v1262
    %v1295 = vadd.bf16 %v1135, %v1263
    %v1296 = vadd.bf16 %v1136, %v1264
    %v1297 = vadd.bf16 %v1137, %v1265
    %v1298 = vadd.bf16 %v1138, %v1266
    %v1299 = vadd.bf16 %v1139, %v1267
    %v1300 = vadd.bf16 %v1140, %v1268
    %v1301 = vadd.bf16 %v1141, %v1269
    %v1302 = vadd.bf16 %v1142, %v1270
    %v1303 = vadd.bf16 %v1143, %v1271
    %v1304 = vadd.bf16 %v1144, %v1272
    %v1305 = vadd.bf16 %v1145, %v1273
    %v1306 = vadd.bf16 %v1146, %v1274
    %v1307 = vadd.bf16 %v1147, %v1275
    %v1308 = vadd.bf16 %v1148, %v1276
    %v1309 = vadd.bf16 %v1149, %v1277
    %v1310 = vadd.bf16 %v1150, %v1278
    %v1311 = vadd.bf16 %v1151, %v1279
    %v1312 = vadd.bf16 %v1152, %v1280
    %v1313 = vadd.bf16 %v1153, %v1281
    %v1314 = vadd.bf16 %v1154, %v1282
    %v1315 = vadd.bf16 %v1155, %v1283
    %v1316 = vadd.bf16 %v1156, %v1284
    %v1317 = vadd.bf16 %v1157, %v1285
    %v1318 = vadd.bf16 %v1158, %v1286
    %v1319 = vadd.bf16 %v1159, %v1287
    %v1320 = vadd.bf16 %v1160, %v1288
    %v1321 = vadd.bf16 %v1161, %v1289
    %v1322 = vadd.bf16 %v1162, %v1290
    %v1323 = vadd.bf16 %v1163, %v1291
    %v1324 = vadd.bf16 %v1164, %v1292
    %v1325 = vmul.bf16 %v1293, 1061961548
    %v1326 = vmul.bf16 %v1294, 1061961548
    %v1327 = vmul.bf16 %v1295, 1061961548
    %v1328 = vmul.bf16 %v1296, 1061961548
    %v1329 = vmul.bf16 %v1297, 1061961548
    %v1330 = vmul.bf16 %v1298, 1061961548
    %v1331 = vmul.bf16 %v1299, 1061961548
    %v1332 = vmul.bf16 %v1300, 1061961548
    %v1333 = vmul.bf16 %v1301, 1061961548
    %v1334 = vmul.bf16 %v1302, 1061961548
    %v1335 = vmul.bf16 %v1303, 1061961548
    %v1336 = vmul.bf16 %v1304, 1061961548
    %v1337 = vmul.bf16 %v1305, 1061961548
    %v1338 = vmul.bf16 %v1306, 1061961548
    %v1339 = vmul.bf16 %v1307, 1061961548
    %v1340 = vmul.bf16 %v1308, 1061961548
    %v1341 = vmul.bf16 %v1309, 1061961548
    %v1342 = vmul.bf16 %v1310, 1061961548
    %v1343 = vmul.bf16 %v1311, 1061961548
    %v1344 = vmul.bf16 %v1312, 1061961548
    %v1345 = vmul.bf16 %v1313, 1061961548
    %v1346 = vmul.bf16 %v1314, 1061961548
    %v1347 = vmul.bf16 %v1315, 1061961548
    %v1348 = vmul.bf16 %v1316, 1061961548
    %v1349 = vmul.bf16 %v1317, 1061961548
    %v1350 = vmul.bf16 %v1318, 1061961548
    %v1351 = vmul.bf16 %v1319, 1061961548
    %v1352 = vmul.bf16 %v1320, 1061961548
    %v1353 = vmul.bf16 %v1321, 1061961548
    %v1354 = vmul.bf16 %v1322, 1061961548
    %v1355 = vmul.bf16 %v1323, 1061961548
    %v1356 = vmul.bf16 %v1324, 1061961548
    %v1357 = vtanh.bf16.pop %v1325
    %v1358 = vtanh.bf16.pop %v1326
    %v1359 = vtanh.bf16.pop %v1327
    %v1360 = vtanh.bf16.pop %v1328
    %v1361 = vtanh.bf16.pop %v1329
    %v1362 = vtanh.bf16.pop %v1330
    %v1363 = vtanh.bf16.pop %v1331
    %v1364 = vtanh.bf16.pop %v1332
    %v1365 = vtanh.bf16.pop %v1333
    %v1366 = vtanh.bf16.pop %v1334
    %v1367 = vtanh.bf16.pop %v1335
    %v1368 = vtanh.bf16.pop %v1336
    %v1369 = vtanh.bf16.pop %v1337
    %v1370 = vtanh.bf16.pop %v1338
    %v1371 = vtanh.bf16.pop %v1339
    %v1372 = vtanh.bf16.pop %v1340
    %v1373 = vtanh.bf16.pop %v1341
    %v1374 = vtanh.bf16.pop %v1342
    %v1375 = vtanh.bf16.pop %v1343
    %v1376 = vtanh.bf16.pop %v1344
    %v1377 = vtanh.bf16.pop %v1345
    %v1378 = vtanh.bf16.pop %v1346
    %v1379 = vtanh.bf16.pop %v1347
    %v1380 = vtanh.bf16.pop %v1348
    %v1381 = vtanh.bf16.pop %v1349
    %v1382 = vtanh.bf16.pop %v1350
    %v1383 = vtanh.bf16.pop %v1351
    %v1384 = vtanh.bf16.pop %v1352
    %v1385 = vtanh.bf16.pop %v1353
    %v1386 = vtanh.bf16.pop %v1354
    %v1387 = vtanh.bf16.pop %v1355
    %v1388 = vtanh.bf16.pop %v1356
    %v1389 = vadd.bf16 %v1357, 1065369472
    %v1390 = vadd.bf16 %v1358, 1065369472
    %v1391 = vadd.bf16 %v1359, 1065369472
    %v1392 = vadd.bf16 %v1360, 1065369472
    %v1393 = vadd.bf16 %v1361, 1065369472
    %v1394 = vadd.bf16 %v1362, 1065369472
    %v1395 = vadd.bf16 %v1363, 1065369472
    %v1396 = vadd.bf16 %v1364, 1065369472
    %v1397 = vadd.bf16 %v1365, 1065369472
    %v1398 = vadd.bf16 %v1366, 1065369472
    %v1399 = vadd.bf16 %v1367, 1065369472
    %v1400 = vadd.bf16 %v1368, 1065369472
    %v1401 = vadd.bf16 %v1369, 1065369472
    %v1402 = vadd.bf16 %v1370, 1065369472
    %v1403 = vadd.bf16 %v1371, 1065369472
    %v1404 = vadd.bf16 %v1372, 1065369472
    %v1405 = vadd.bf16 %v1373, 1065369472
    %v1406 = vadd.bf16 %v1374, 1065369472
    %v1407 = vadd.bf16 %v1375, 1065369472
    %v1408 = vadd.bf16 %v1376, 1065369472
    %v1409 = vadd.bf16 %v1377, 1065369472
    %v1410 = vadd.bf16 %v1378, 1065369472
    %v1411 = vadd.bf16 %v1379, 1065369472
    %v1412 = vadd.bf16 %v1380, 1065369472
    %v1413 = vadd.bf16 %v1381, 1065369472
    %v1414 = vadd.bf16 %v1382, 1065369472
    %v1415 = vadd.bf16 %v1383, 1065369472
    %v1416 = vadd.bf16 %v1384, 1065369472
    %v1417 = vadd.bf16 %v1385, 1065369472
    %v1418 = vadd.bf16 %v1386, 1065369472
    %v1419 = vadd.bf16 %v1387, 1065369472
    %v1420 = vadd.bf16 %v1388, 1065369472
    %v1421 = vmul.bf16 %v1165, %v1389
    %v1422 = vmul.bf16 %v1166, %v1390
    %v1423 = vmul.bf16 %v1167, %v1391
    %v1424 = vmul.bf16 %v1168, %v1392
    %v1425 = vmul.bf16 %v1169, %v1393
    %v1426 = vmul.bf16 %v1170, %v1394
    %v1427 = vmul.bf16 %v1171, %v1395
    %v1428 = vmul.bf16 %v1172, %v1396
    %v1429 = vmul.bf16 %v1173, %v1397
    %v1430 = vmul.bf16 %v1174, %v1398
    %v1431 = vmul.bf16 %v1175, %v1399
    %v1432 = vmul.bf16 %v1176, %v1400
    %v1433 = vmul.bf16 %v1177, %v1401
    %v1434 = vmul.bf16 %v1178, %v1402
    %v1435 = vmul.bf16 %v1179, %v1403
    %v1436 = vmul.bf16 %v1180, %v1404
    %v1437 = vmul.bf16 %v1181, %v1405
    %v1438 = vmul.bf16 %v1182, %v1406
    %v1439 = vmul.bf16 %v1183, %v1407
    %v1440 = vmul.bf16 %v1184, %v1408
    %v1441 = vmul.bf16 %v1185, %v1409
    %v1442 = vmul.bf16 %v1186, %v1410
    %v1443 = vmul.bf16 %v1187, %v1411
    %v1444 = vmul.bf16 %v1188, %v1412
    %v1445 = vmul.bf16 %v1189, %v1413
    %v1446 = vmul.bf16 %v1190, %v1414
    %v1447 = vmul.bf16 %v1191, %v1415
    %v1448 = vmul.bf16 %v1192, %v1416
    %v1449 = vmul.bf16 %v1193, %v1417
    %v1450 = vmul.bf16 %v1194, %v1418
    %v1451 = vmul.bf16 %v1195, %v1419
    %v1452 = vmul.bf16 %v1196, %v1420
    %v1453 = vld [vmem:[#allocation5] sm:$0xff]
    %v1454 = vld [vmem:[#allocation5 + $0x8] sm:$0xff]
    %v1455 = vld [vmem:[#allocation5 + $0x10] sm:$0xff]
    %v1456 = vld [vmem:[#allocation5 + $0x18] sm:$0xff]
    %v1457 = vld [vmem:[#allocation5 + $0x20] sm:$0xff]
    %v1458 = vld [vmem:[#allocation5 + $0x28] sm:$0xff]
    %v1459 = vld [vmem:[#allocation5 + $0x30] sm:$0xff]
    %v1460 = vld [vmem:[#allocation5 + $0x38] sm:$0xff]
    %v1461 = vld [vmem:[#allocation5 + $0x40] sm:$0xff]
    %v1462 = vld [vmem:[#allocation5 + $0x48] sm:$0xff]
    %v1463 = vld [vmem:[#allocation5 + $0x50] sm:$0xff]
    %v1464 = vld [vmem:[#allocation5 + $0x58] sm:$0xff]
    %v1465 = vld [vmem:[#allocation5 + $0x60] sm:$0xff]
    %v1466 = vld [vmem:[#allocation5 + $0x68] sm:$0xff]
    %v1467 = vld [vmem:[#allocation5 + $0x70] sm:$0xff]
    %v1468 = vld [vmem:[#allocation5 + $0x78] sm:$0xff]
    %v1469 = vld [vmem:[#allocation5 + $0x80] sm:$0xff]
    %v1470 = vld [vmem:[#allocation5 + $0x88] sm:$0xff]
    %v1471 = vld [vmem:[#allocation5 + $0x90] sm:$0xff]
    %v1472 = vld [vmem:[#allocation5 + $0x98] sm:$0xff]
    %v1473 = vld [vmem:[#allocation5 + $0xa0] sm:$0xff]
    %v1474 = vld [vmem:[#allocation5 + $0xa8] sm:$0xff]
    %v1475 = vld [vmem:[#allocation5 + $0xb0] sm:$0xff]
    %v1476 = vld [vmem:[#allocation5 + $0xb8] sm:$0xff]
    %v1477 = vld [vmem:[#allocation5 + $0xc0] sm:$0xff]
    %v1478 = vld [vmem:[#allocation5 + $0xc8] sm:$0xff]
    %v1479 = vld [vmem:[#allocation5 + $0xd0] sm:$0xff]
    %v1480 = vld [vmem:[#allocation5 + $0xd8] sm:$0xff]
    %v1481 = vld [vmem:[#allocation5 + $0xe0] sm:$0xff]
    %v1482 = vld [vmem:[#allocation5 + $0xe8] sm:$0xff]
    %v1483 = vld [vmem:[#allocation5 + $0xf0] sm:$0xff]
    %v1484 = vld [vmem:[#allocation5 + $0xf8] sm:$0xff]
    %v1485 = vld [vmem:[%s6] sm:$0x3]
    %v1487 = vlaneseq
    %v1488 = vshrl.u32 %v1487, 7
    %v1489 = vsub.s32 0, %v1488
    %v1490 = vrot.slane %v1485, %v1489
    %v1491 = vlaneseq
    %v1492 = vshrl.u32 %v1491, 7
    %v1493 = vsub.s32 1, %v1492
    %v1494 = vrot.slane %v1485, %v1493
    %v1529 = vunpack.c.l.b16 %v1453
    %v1530 = vunpack.c.h.b16 %v1453
    %v1531 = vunpack.c.l.b16 %v1454
    %v1532 = vunpack.c.h.b16 %v1454
    %v1533 = vunpack.c.l.b16 %v1455
    %v1534 = vunpack.c.h.b16 %v1455
    %v1535 = vunpack.c.l.b16 %v1456
    %v1536 = vunpack.c.h.b16 %v1456
    %v1537 = vunpack.c.l.b16 %v1457
    %v1538 = vunpack.c.h.b16 %v1457
    %v1539 = vunpack.c.l.b16 %v1458
    %v1540 = vunpack.c.h.b16 %v1458
    %v1541 = vunpack.c.l.b16 %v1459
    %v1542 = vunpack.c.h.b16 %v1459
    %v1543 = vunpack.c.l.b16 %v1460
    %v1544 = vunpack.c.h.b16 %v1460
    %v1545 = vunpack.c.l.b16 %v1461
    %v1546 = vunpack.c.h.b16 %v1461
    %v1547 = vunpack.c.l.b16 %v1462
    %v1548 = vunpack.c.h.b16 %v1462
    %v1549 = vunpack.c.l.b16 %v1463
    %v1550 = vunpack.c.h.b16 %v1463
    %v1551 = vunpack.c.l.b16 %v1464
    %v1552 = vunpack.c.h.b16 %v1464
    %v1553 = vunpack.c.l.b16 %v1465
    %v1554 = vunpack.c.h.b16 %v1465
    %v1555 = vunpack.c.l.b16 %v1466
    %v1556 = vunpack.c.h.b16 %v1466
    %v1557 = vunpack.c.l.b16 %v1467
    %v1558 = vunpack.c.h.b16 %v1467
    %v1559 = vunpack.c.l.b16 %v1468
    %v1560 = vunpack.c.h.b16 %v1468
    %v1561 = vunpack.c.l.b16 %v1469
    %v1562 = vunpack.c.h.b16 %v1469
    %v1563 = vunpack.c.l.b16 %v1470
    %v1564 = vunpack.c.h.b16 %v1470
    %v1565 = vunpack.c.l.b16 %v1471
    %v1566 = vunpack.c.h.b16 %v1471
    %v1567 = vunpack.c.l.b16 %v1472
    %v1568 = vunpack.c.h.b16 %v1472
    %v1569 = vunpack.c.l.b16 %v1473
    %v1570 = vunpack.c.h.b16 %v1473
    %v1571 = vunpack.c.l.b16 %v1474
    %v1572 = vunpack.c.h.b16 %v1474
    %v1573 = vunpack.c.l.b16 %v1475
    %v1574 = vunpack.c.h.b16 %v1475
    %v1575 = vunpack.c.l.b16 %v1476
    %v1576 = vunpack.c.h.b16 %v1476
    %v1577 = vunpack.c.l.b16 %v1477
    %v1578 = vunpack.c.h.b16 %v1477
    %v1579 = vunpack.c.l.b16 %v1478
    %v1580 = vunpack.c.h.b16 %v1478
    %v1581 = vunpack.c.l.b16 %v1479
    %v1582 = vunpack.c.h.b16 %v1479
    %v1583 = vunpack.c.l.b16 %v1480
    %v1584 = vunpack.c.h.b16 %v1480
    %v1585 = vunpack.c.l.b16 %v1481
    %v1586 = vunpack.c.h.b16 %v1481
    %v1587 = vunpack.c.l.b16 %v1482
    %v1588 = vunpack.c.h.b16 %v1482
    %v1589 = vunpack.c.l.b16 %v1483
    %v1590 = vunpack.c.h.b16 %v1483
    %v1591 = vunpack.c.l.b16 %v1484
    %v1592 = vunpack.c.h.b16 %v1484
    %v1593 = vpack.c.b16 %v1531, %v1529
    %v1594 = vpack.c.b16 %v1532, %v1530
    %v1595 = vpack.c.b16 %v1535, %v1533
    %v1596 = vpack.c.b16 %v1536, %v1534
    %v1597 = vpack.c.b16 %v1539, %v1537
    %v1598 = vpack.c.b16 %v1540, %v1538
    %v1599 = vpack.c.b16 %v1543, %v1541
    %v1600 = vpack.c.b16 %v1544, %v1542
    %v1601 = vpack.c.b16 %v1547, %v1545
    %v1602 = vpack.c.b16 %v1548, %v1546
    %v1603 = vpack.c.b16 %v1551, %v1549
    %v1604 = vpack.c.b16 %v1552, %v1550
    %v1605 = vpack.c.b16 %v1555, %v1553
    %v1606 = vpack.c.b16 %v1556, %v1554
    %v1607 = vpack.c.b16 %v1559, %v1557
    %v1608 = vpack.c.b16 %v1560, %v1558
    %v1609 = vpack.c.b16 %v1563, %v1561
    %v1610 = vpack.c.b16 %v1564, %v1562
    %v1611 = vpack.c.b16 %v1567, %v1565
    %v1612 = vpack.c.b16 %v1568, %v1566
    %v1613 = vpack.c.b16 %v1571, %v1569
    %v1614 = vpack.c.b16 %v1572, %v1570
    %v1615 = vpack.c.b16 %v1575, %v1573
    %v1616 = vpack.c.b16 %v1576, %v1574
    %v1617 = vpack.c.b16 %v1579, %v1577
    %v1618 = vpack.c.b16 %v1580, %v1578
    %v1619 = vpack.c.b16 %v1583, %v1581
    %v1620 = vpack.c.b16 %v1584, %v1582
    %v1621 = vpack.c.b16 %v1587, %v1585
    %v1622 = vpack.c.b16 %v1588, %v1586
    %v1623 = vpack.c.b16 %v1591, %v1589
    %v1624 = vpack.c.b16 %v1592, %v1590
    %1657 = vmatprep.subr.bf16.mxu0 %v1594
    %1658 = vmatpush1.bf16.msra.mxu0 %v1593
    %1659 = vmatprep.subr.bf16.mxu0 %v1596
    %1660 = vmatpush1.bf16.msra.mxu0 %v1595
    %1661 = vmatprep.subr.bf16.mxu0 %v1598
    %1662 = vmatpush1.bf16.msra.mxu0 %v1597
    %1663 = vmatprep.subr.bf16.mxu0 %v1600
    %1664 = vmatpush1.bf16.msra.mxu0 %v1599
    %1665 = vmatprep.subr.bf16.mxu0 %v1602
    %1666 = vmatpush1.bf16.msra.mxu0 %v1601
    %1667 = vmatprep.subr.bf16.mxu0 %v1604
    %1668 = vmatpush1.bf16.msra.mxu0 %v1603
    %1669 = vmatprep.subr.bf16.mxu0 %v1606
    %1670 = vmatpush1.bf16.msra.mxu0 %v1605
    %1671 = vmatprep.subr.bf16.mxu0 %v1608
    %1672 = vmatpush1.bf16.msra.mxu0 %v1607
    %1673 = vmatprep.subr.bf16.mxu0 %v1610
    %1674 = vmatpush1.bf16.msra.mxu0 %v1609
    %1675 = vmatprep.subr.bf16.mxu0 %v1612
    %1676 = vmatpush1.bf16.msra.mxu0 %v1611
    %1677 = vmatprep.subr.bf16.mxu0 %v1614
    %1678 = vmatpush1.bf16.msra.mxu0 %v1613
    %1679 = vmatprep.subr.bf16.mxu0 %v1616
    %1680 = vmatpush1.bf16.msra.mxu0 %v1615
    %1681 = vmatprep.subr.bf16.mxu0 %v1618
    %1682 = vmatpush1.bf16.msra.mxu0 %v1617
    %1683 = vmatprep.subr.bf16.mxu0 %v1620
    %1684 = vmatpush1.bf16.msra.mxu0 %v1619
    %1685 = vmatprep.subr.bf16.mxu0 %v1622
    %1686 = vmatpush1.bf16.msra.mxu0 %v1621
    %1687 = vmatprep.subr.bf16.mxu0 %v1624
    %1688 = vmatpush1.bf16.msra.mxu0 %v1623
    %1689 = vmatprep.mubr.bf16.mxu0 %v1422
    %1690 = vmatmul.mubr.bf16.gmra.mrb[0].mxu0 %v1421
    %v1691 = vpop.f32.mrb[0].mxu0
    %v1692 = vadd.f32 %v1490, %v1691
    %v1693 = vpop.f32.mrb[0].mxu0
    %v1694 = vadd.f32 %v1494, %v1693
    %v1695 = vpop.f32.mrb[0].mxu0
    %v1696 = vadd.f32 %v1490, %v1695
    %v1697 = vpop.f32.mrb[0].mxu0
    %v1698 = vadd.f32 %v1494, %v1697
    %1699 = vmatprep.mubr.bf16.mxu0 %v1424
    %1700 = vmatmul.mubr.bf16.gmra.mrb[0].mxu0 %v1423
    %v1701 = vpop.f32.mrb[0].mxu0
    %v1702 = vadd.f32 %v1490, %v1701
    %v1703 = vpop.f32.mrb[0].mxu0
    %v1704 = vadd.f32 %v1494, %v1703
    %v1705 = vpop.f32.mrb[0].mxu0
    %v1706 = vadd.f32 %v1490, %v1705
    %v1707 = vpop.f32.mrb[0].mxu0
    %v1708 = vadd.f32 %v1494, %v1707
    %1709 = vmatprep.mubr.bf16.mxu0 %v1426
    %1710 = vmatmul.mubr.bf16.gmra.mrb[0].mxu0 %v1425
    %v1711 = vpop.f32.mrb[0].mxu0
    %v1712 = vadd.f32 %v1490, %v1711
    %v1713 = vpop.f32.mrb[0].mxu0
    %v1714 = vadd.f32 %v1494, %v1713
    %v1715 = vpop.f32.mrb[0].mxu0
    %v1716 = vadd.f32 %v1490, %v1715
    %v1717 = vpop.f32.mrb[0].mxu0
    %v1718 = vadd.f32 %v1494, %v1717
    %1719 = vmatprep.mubr.bf16.mxu0 %v1428
    %1720 = vmatmul.mubr.bf16.gmra.mrb[0].mxu0 %v1427
    %v1721 = vpop.f32.mrb[0].mxu0
    %v1722 = vadd.f32 %v1490, %v1721
    %v1723 = vpop.f32.mrb[0].mxu0
    %v1724 = vadd.f32 %v1494, %v1723
    %v1725 = vpop.f32.mrb[0].mxu0
    %v1726 = vadd.f32 %v1490, %v1725
    %v1727 = vpop.f32.mrb[0].mxu0
    %v1728 = vadd.f32 %v1494, %v1727
    %1729 = vmatprep.mubr.bf16.mxu0 %v1430
    %1730 = vmatmul.mubr.bf16.gmra.mrb[0].mxu0 %v1429
    %v1731 = vpop.f32.mrb[0].mxu0
    %v1732 = vadd.f32 %v1490, %v1731
    %v1733 = vpop.f32.mrb[0].mxu0
    %v1734 = vadd.f32 %v1494, %v1733
    %v1735 = vpop.f32.mrb[0].mxu0
    %v1736 = vadd.f32 %v1490, %v1735
    %v1737 = vpop.f32.mrb[0].mxu0
    %v1738 = vadd.f32 %v1494, %v1737
    %1739 = vmatprep.mubr.bf16.mxu0 %v1432
    %1740 = vmatmul.mubr.bf16.gmra.mrb[0].mxu0 %v1431
    %v1741 = vpop.f32.mrb[0].mxu0
    %v1742 = vadd.f32 %v1490, %v1741
    %v1743 = vpop.f32.mrb[0].mxu0
    %v1744 = vadd.f32 %v1494, %v1743
    %v1745 = vpop.f32.mrb[0].mxu0
    %v1746 = vadd.f32 %v1490, %v1745
    %v1747 = vpop.f32.mrb[0].mxu0
    %v1748 = vadd.f32 %v1494, %v1747
    %1749 = vmatprep.mubr.bf16.mxu0 %v1434
    %1750 = vmatmul.mubr.bf16.gmra.mrb[0].mxu0 %v1433
    %v1751 = vpop.f32.mrb[0].mxu0
    %v1752 = vadd.f32 %v1490, %v1751
    %v1753 = vpop.f32.mrb[0].mxu0
    %v1754 = vadd.f32 %v1494, %v1753
    %v1755 = vpop.f32.mrb[0].mxu0
    %v1756 = vadd.f32 %v1490, %v1755
    %v1757 = vpop.f32.mrb[0].mxu0
    %v1758 = vadd.f32 %v1494, %v1757
    %1759 = vmatprep.mubr.bf16.mxu0 %v1436
    %1760 = vmatmul.mubr.bf16.gmra.mrb[0].mxu0 %v1435
    %v1761 = vpop.f32.mrb[0].mxu0
    %v1762 = vadd.f32 %v1490, %v1761
    %v1763 = vpop.f32.mrb[0].mxu0
    %v1764 = vadd.f32 %v1494, %v1763
    %v1765 = vpop.f32.mrb[0].mxu0
    %v1766 = vadd.f32 %v1490, %v1765
    %v1767 = vpop.f32.mrb[0].mxu0
    %v1768 = vadd.f32 %v1494, %v1767
    %1769 = vmatprep.mubr.bf16.mxu0 %v1438
    %1770 = vmatmul.mubr.bf16.gmra.mrb[0].mxu0 %v1437
    %v1771 = vpop.f32.mrb[0].mxu0
    %v1772 = vadd.f32 %v1490, %v1771
    %v1773 = vpop.f32.mrb[0].mxu0
    %v1774 = vadd.f32 %v1494, %v1773
    %v1775 = vpop.f32.mrb[0].mxu0
    %v1776 = vadd.f32 %v1490, %v1775
    %v1777 = vpop.f32.mrb[0].mxu0
    %v1778 = vadd.f32 %v1494, %v1777
    %1779 = vmatprep.mubr.bf16.mxu0 %v1440
    %1780 = vmatmul.mubr.bf16.gmra.mrb[0].mxu0 %v1439
    %v1781 = vpop.f32.mrb[0].mxu0
    %v1782 = vadd.f32 %v1490, %v1781
    %v1783 = vpop.f32.mrb[0].mxu0
    %v1784 = vadd.f32 %v1494, %v1783
    %v1785 = vpop.f32.mrb[0].mxu0
    %v1786 = vadd.f32 %v1490, %v1785
    %v1787 = vpop.f32.mrb[0].mxu0
    %v1788 = vadd.f32 %v1494, %v1787
    %1789 = vmatprep.mubr.bf16.mxu0 %v1442
    %1790 = vmatmul.mubr.bf16.gmra.mrb[0].mxu0 %v1441
    %v1791 = vpop.f32.mrb[0].mxu0
    %v1792 = vadd.f32 %v1490, %v1791
    %v1793 = vpop.f32.mrb[0].mxu0
    %v1794 = vadd.f32 %v1494, %v1793
    %v1795 = vpop.f32.mrb[0].mxu0
    %v1796 = vadd.f32 %v1490, %v1795
    %v1797 = vpop.f32.mrb[0].mxu0
    %v1798 = vadd.f32 %v1494, %v1797
    %1799 = vmatprep.mubr.bf16.mxu0 %v1444
    %1800 = vmatmul.mubr.bf16.gmra.mrb[0].mxu0 %v1443
    %v1801 = vpop.f32.mrb[0].mxu0
    %v1802 = vadd.f32 %v1490, %v1801
    %v1803 = vpop.f32.mrb[0].mxu0
    %v1804 = vadd.f32 %v1494, %v1803
    %v1805 = vpop.f32.mrb[0].mxu0
    %v1806 = vadd.f32 %v1490, %v1805
    %v1807 = vpop.f32.mrb[0].mxu0
    %v1808 = vadd.f32 %v1494, %v1807
    %1809 = vmatprep.mubr.bf16.mxu0 %v1446
    %1810 = vmatmul.mubr.bf16.gmra.mrb[0].mxu0 %v1445
    %v1811 = vpop.f32.mrb[0].mxu0
    %v1812 = vadd.f32 %v1490, %v1811
    %v1813 = vpop.f32.mrb[0].mxu0
    %v1814 = vadd.f32 %v1494, %v1813
    %v1815 = vpop.f32.mrb[0].mxu0
    %v1816 = vadd.f32 %v1490, %v1815
    %v1817 = vpop.f32.mrb[0].mxu0
    %v1818 = vadd.f32 %v1494, %v1817
    %1819 = vmatprep.mubr.bf16.mxu0 %v1448
    %1820 = vmatmul.mubr.bf16.gmra.mrb[0].mxu0 %v1447
    %v1821 = vpop.f32.mrb[0].mxu0
    %v1822 = vadd.f32 %v1490, %v1821
    %v1823 = vpop.f32.mrb[0].mxu0
    %v1824 = vadd.f32 %v1494, %v1823
    %v1825 = vpop.f32.mrb[0].mxu0
    %v1826 = vadd.f32 %v1490, %v1825
    %v1827 = vpop.f32.mrb[0].mxu0
    %v1828 = vadd.f32 %v1494, %v1827
    %1829 = vmatprep.mubr.bf16.mxu0 %v1450
    %1830 = vmatmul.mubr.bf16.gmra.mrb[0].mxu0 %v1449
    %v1831 = vpop.f32.mrb[0].mxu0
    %v1832 = vadd.f32 %v1490, %v1831
    %v1833 = vpop.f32.mrb[0].mxu0
    %v1834 = vadd.f32 %v1494, %v1833
    %v1835 = vpop.f32.mrb[0].mxu0
    %v1836 = vadd.f32 %v1490, %v1835
    %v1837 = vpop.f32.mrb[0].mxu0
    %v1838 = vadd.f32 %v1494, %v1837
    %1839 = vmatprep.mubr.bf16.mxu0 %v1452
    %1840 = vmatmul.mubr.bf16.gmra.mrb[0].mxu0 %v1451
    %v1841 = vpop.f32.mrb[0].mxu0
    %v1842 = vadd.f32 %v1490, %v1841
    %v1843 = vpop.f32.mrb[0].mxu0
    %v1844 = vadd.f32 %v1494, %v1843
    %v1845 = vpop.f32.mrb[0].mxu0
    %v1846 = vadd.f32 %v1490, %v1845
    %v1847 = vpop.f32.mrb[0].mxu0
    %v1848 = vadd.f32 %v1494, %v1847
    %1849 = vdwg.mxu0
    %v1850 = vpack.c.bf16 %v1696, %v1692
    %v1851 = vpack.c.bf16 %v1698, %v1694
    %v1852 = vpack.c.bf16 %v1706, %v1702
    %v1853 = vpack.c.bf16 %v1708, %v1704
    %v1854 = vpack.c.bf16 %v1716, %v1712
    %v1855 = vpack.c.bf16 %v1718, %v1714
    %v1856 = vpack.c.bf16 %v1726, %v1722
    %v1857 = vpack.c.bf16 %v1728, %v1724
    %v1858 = vpack.c.bf16 %v1736, %v1732
    %v1859 = vpack.c.bf16 %v1738, %v1734
    %v1860 = vpack.c.bf16 %v1746, %v1742
    %v1861 = vpack.c.bf16 %v1748, %v1744
    %v1862 = vpack.c.bf16 %v1756, %v1752
    %v1863 = vpack.c.bf16 %v1758, %v1754
    %v1864 = vpack.c.bf16 %v1766, %v1762
    %v1865 = vpack.c.bf16 %v1768, %v1764
    %v1866 = vpack.c.bf16 %v1776, %v1772
    %v1867 = vpack.c.bf16 %v1778, %v1774
    %v1868 = vpack.c.bf16 %v1786, %v1782
    %v1869 = vpack.c.bf16 %v1788, %v1784
    %v1870 = vpack.c.bf16 %v1796, %v1792
    %v1871 = vpack.c.bf16 %v1798, %v1794
    %v1872 = vpack.c.bf16 %v1806, %v1802
    %v1873 = vpack.c.bf16 %v1808, %v1804
    %v1874 = vpack.c.bf16 %v1816, %v1812
    %v1875 = vpack.c.bf16 %v1818, %v1814
    %v1876 = vpack.c.bf16 %v1826, %v1822
    %v1877 = vpack.c.bf16 %v1828, %v1824
    %v1878 = vpack.c.bf16 %v1836, %v1832
    %v1879 = vpack.c.bf16 %v1838, %v1834
    %v1880 = vpack.c.bf16 %v1846, %v1842
    %v1881 = vpack.c.bf16 %v1848, %v1844
    %v1882 = vmul.bf16 %v1850, 1056980736
    %v1883 = vmul.bf16 %v1851, 1056980736
    %v1884 = vmul.bf16 %v1852, 1056980736
    %v1885 = vmul.bf16 %v1853, 1056980736
    %v1886 = vmul.bf16 %v1854, 1056980736
    %v1887 = vmul.bf16 %v1855, 1056980736
    %v1888 = vmul.bf16 %v1856, 1056980736
    %v1889 = vmul.bf16 %v1857, 1056980736
    %v1890 = vmul.bf16 %v1858, 1056980736
    %v1891 = vmul.bf16 %v1859, 1056980736
    %v1892 = vmul.bf16 %v1860, 1056980736
    %v1893 = vmul.bf16 %v1861, 1056980736
    %v1894 = vmul.bf16 %v1862, 1056980736
    %v1895 = vmul.bf16 %v1863, 1056980736
    %v1896 = vmul.bf16 %v1864, 1056980736
    %v1897 = vmul.bf16 %v1865, 1056980736
    %v1898 = vmul.bf16 %v1866, 1056980736
    %v1899 = vmul.bf16 %v1867, 1056980736
    %v1900 = vmul.bf16 %v1868, 1056980736
    %v1901 = vmul.bf16 %v1869, 1056980736
    %v1902 = vmul.bf16 %v1870, 1056980736
    %v1903 = vmul.bf16 %v1871, 1056980736
    %v1904 = vmul.bf16 %v1872, 1056980736
    %v1905 = vmul.bf16 %v1873, 1056980736
    %v1906 = vmul.bf16 %v1874, 1056980736
    %v1907 = vmul.bf16 %v1875, 1056980736
    %v1908 = vmul.bf16 %v1876, 1056980736
    %v1909 = vmul.bf16 %v1877, 1056980736
    %v1910 = vmul.bf16 %v1878, 1056980736
    %v1911 = vmul.bf16 %v1879, 1056980736
    %v1912 = vmul.bf16 %v1880, 1056980736
    %v1913 = vmul.bf16 %v1881, 1056980736
    %v1914 = vmul.bf16 %v1850, 1027030327
    %v1915 = vmul.bf16 %v1851, 1027030327
    %v1916 = vmul.bf16 %v1852, 1027030327
    %v1917 = vmul.bf16 %v1853, 1027030327
    %v1918 = vmul.bf16 %v1854, 1027030327
    %v1919 = vmul.bf16 %v1855, 1027030327
    %v1920 = vmul.bf16 %v1856, 1027030327
    %v1921 = vmul.bf16 %v1857, 1027030327
    %v1922 = vmul.bf16 %v1858, 1027030327
    %v1923 = vmul.bf16 %v1859, 1027030327
    %v1924 = vmul.bf16 %v1860, 1027030327
    %v1925 = vmul.bf16 %v1861, 1027030327
    %v1926 = vmul.bf16 %v1862, 1027030327
    %v1927 = vmul.bf16 %v1863, 1027030327
    %v1928 = vmul.bf16 %v1864, 1027030327
    %v1929 = vmul.bf16 %v1865, 1027030327
    %v1930 = vmul.bf16 %v1866, 1027030327
    %v1931 = vmul.bf16 %v1867, 1027030327
    %v1932 = vmul.bf16 %v1868, 1027030327
    %v1933 = vmul.bf16 %v1869, 1027030327
    %v1934 = vmul.bf16 %v1870, 1027030327
    %v1935 = vmul.bf16 %v1871, 1027030327
    %v1936 = vmul.bf16 %v1872, 1027030327
    %v1937 = vmul.bf16 %v1873, 1027030327
    %v1938 = vmul.bf16 %v1874, 1027030327
    %v1939 = vmul.bf16 %v1875, 1027030327
    %v1940 = vmul.bf16 %v1876, 1027030327
    %v1941 = vmul.bf16 %v1877, 1027030327
    %v1942 = vmul.bf16 %v1878, 1027030327
    %v1943 = vmul.bf16 %v1879, 1027030327
    %v1944 = vmul.bf16 %v1880, 1027030327
    %v1945 = vmul.bf16 %v1881, 1027030327
    %v1946 = vmul.bf16 %v1914, %v1850
    %v1947 = vmul.bf16 %v1915, %v1851
    %v1948 = vmul.bf16 %v1916, %v1852
    %v1949 = vmul.bf16 %v1917, %v1853
    %v1950 = vmul.bf16 %v1918, %v1854
    %v1951 = vmul.bf16 %v1919, %v1855
    %v1952 = vmul.bf16 %v1920, %v1856
    %v1953 = vmul.bf16 %v1921, %v1857
    %v1954 = vmul.bf16 %v1922, %v1858
    %v1955 = vmul.bf16 %v1923, %v1859
    %v1956 = vmul.bf16 %v1924, %v1860
    %v1957 = vmul.bf16 %v1925, %v1861
    %v1958 = vmul.bf16 %v1926, %v1862
    %v1959 = vmul.bf16 %v1927, %v1863
    %v1960 = vmul.bf16 %v1928, %v1864
    %v1961 = vmul.bf16 %v1929, %v1865
    %v1962 = vmul.bf16 %v1930, %v1866
    %v1963 = vmul.bf16 %v1931, %v1867
    %v1964 = vmul.bf16 %v1932, %v1868
    %v1965 = vmul.bf16 %v1933, %v1869
    %v1966 = vmul.bf16 %v1934, %v1870
    %v1967 = vmul.bf16 %v1935, %v1871
    %v1968 = vmul.bf16 %v1936, %v1872
    %v1969 = vmul.bf16 %v1937, %v1873
    %v1970 = vmul.bf16 %v1938, %v1874
    %v1971 = vmul.bf16 %v1939, %v1875
    %v1972 = vmul.bf16 %v1940, %v1876
    %v1973 = vmul.bf16 %v1941, %v1877
    %v1974 = vmul.bf16 %v1942, %v1878
    %v1975 = vmul.bf16 %v1943, %v1879
    %v1976 = vmul.bf16 %v1944, %v1880
    %v1977 = vmul.bf16 %v1945, %v1881
    %v1978 = vmul.bf16 %v1946, %v1850
    %v1979 = vmul.bf16 %v1947, %v1851
    %v1980 = vmul.bf16 %v1948, %v1852
    %v1981 = vmul.bf16 %v1949, %v1853
    %v1982 = vmul.bf16 %v1950, %v1854
    %v1983 = vmul.bf16 %v1951, %v1855
    %v1984 = vmul.bf16 %v1952, %v1856
    %v1985 = vmul.bf16 %v1953, %v1857
    %v1986 = vmul.bf16 %v1954, %v1858
    %v1987 = vmul.bf16 %v1955, %v1859
    %v1988 = vmul.bf16 %v1956, %v1860
    %v1989 = vmul.bf16 %v1957, %v1861
    %v1990 = vmul.bf16 %v1958, %v1862
    %v1991 = vmul.bf16 %v1959, %v1863
    %v1992 = vmul.bf16 %v1960, %v1864
    %v1993 = vmul.bf16 %v1961, %v1865
    %v1994 = vmul.bf16 %v1962, %v1866
    %v1995 = vmul.bf16 %v1963, %v1867
    %v1996 = vmul.bf16 %v1964, %v1868
    %v1997 = vmul.bf16 %v1965, %v1869
    %v1998 = vmul.bf16 %v1966, %v1870
    %v1999 = vmul.bf16 %v1967, %v1871
    %v2000 = vmul.bf16 %v1968, %v1872
    %v2001 = vmul.bf16 %v1969, %v1873
    %v2002 = vmul.bf16 %v1970, %v1874
    %v2003 = vmul.bf16 %v1971, %v1875
    %v2004 = vmul.bf16 %v1972, %v1876
    %v2005 = vmul.bf16 %v1973, %v1877
    %v2006 = vmul.bf16 %v1974, %v1878
    %v2007 = vmul.bf16 %v1975, %v1879
    %v2008 = vmul.bf16 %v1976, %v1880
    %v2009 = vmul.bf16 %v1977, %v1881
    %v2010 = vadd.bf16 %v1850, %v1978
    %v2011 = vadd.bf16 %v1851, %v1979
    %v2012 = vadd.bf16 %v1852, %v1980
    %v2013 = vadd.bf16 %v1853, %v1981
    %v2014 = vadd.bf16 %v1854, %v1982
    %v2015 = vadd.bf16 %v1855, %v1983
    %v2016 = vadd.bf16 %v1856, %v1984
    %v2017 = vadd.bf16 %v1857, %v1985
    %v2018 = vadd.bf16 %v1858, %v1986
    %v2019 = vadd.bf16 %v1859, %v1987
    %v2020 = vadd.bf16 %v1860, %v1988
    %v2021 = vadd.bf16 %v1861, %v1989
    %v2022 = vadd.bf16 %v1862, %v1990
    %v2023 = vadd.bf16 %v1863, %v1991
    %v2024 = vadd.bf16 %v1864, %v1992
    %v2025 = vadd.bf16 %v1865, %v1993
    %v2026 = vadd.bf16 %v1866, %v1994
    %v2027 = vadd.bf16 %v1867, %v1995
    %v2028 = vadd.bf16 %v1868, %v1996
    %v2029 = vadd.bf16 %v1869, %v1997
    %v2030 = vadd.bf16 %v1870, %v1998
    %v2031 = vadd.bf16 %v1871, %v1999
    %v2032 = vadd.bf16 %v1872, %v2000
    %v2033 = vadd.bf16 %v1873, %v2001
    %v2034 = vadd.bf16 %v1874, %v2002
    %v2035 = vadd.bf16 %v1875, %v2003
    %v2036 = vadd.bf16 %v1876, %v2004
    %v2037 = vadd.bf16 %v1877, %v2005
    %v2038 = vadd.bf16 %v1878, %v2006
    %v2039 = vadd.bf16 %v1879, %v2007
    %v2040 = vadd.bf16 %v1880, %v2008
    %v2041 = vadd.bf16 %v1881, %v2009
    %v2042 = vmul.bf16 %v2010, 1061961548
    %v2043 = vmul.bf16 %v2011, 1061961548
    %v2044 = vmul.bf16 %v2012, 1061961548
    %v2045 = vmul.bf16 %v2013, 1061961548
    %v2046 = vmul.bf16 %v2014, 1061961548
    %v2047 = vmul.bf16 %v2015, 1061961548
    %v2048 = vmul.bf16 %v2016, 1061961548
    %v2049 = vmul.bf16 %v2017, 1061961548
    %v2050 = vmul.bf16 %v2018, 1061961548
    %v2051 = vmul.bf16 %v2019, 1061961548
    %v2052 = vmul.bf16 %v2020, 1061961548
    %v2053 = vmul.bf16 %v2021, 1061961548
    %v2054 = vmul.bf16 %v2022, 1061961548
    %v2055 = vmul.bf16 %v2023, 1061961548
    %v2056 = vmul.bf16 %v2024, 1061961548
    %v2057 = vmul.bf16 %v2025, 1061961548
    %v2058 = vmul.bf16 %v2026, 1061961548
    %v2059 = vmul.bf16 %v2027, 1061961548
    %v2060 = vmul.bf16 %v2028, 1061961548
    %v2061 = vmul.bf16 %v2029, 1061961548
    %v2062 = vmul.bf16 %v2030, 1061961548
    %v2063 = vmul.bf16 %v2031, 1061961548
    %v2064 = vmul.bf16 %v2032, 1061961548
    %v2065 = vmul.bf16 %v2033, 1061961548
    %v2066 = vmul.bf16 %v2034, 1061961548
    %v2067 = vmul.bf16 %v2035, 1061961548
    %v2068 = vmul.bf16 %v2036, 1061961548
    %v2069 = vmul.bf16 %v2037, 1061961548
    %v2070 = vmul.bf16 %v2038, 1061961548
    %v2071 = vmul.bf16 %v2039, 1061961548
    %v2072 = vmul.bf16 %v2040, 1061961548
    %v2073 = vmul.bf16 %v2041, 1061961548
    %v2074 = vtanh.bf16.pop %v2042
    %v2075 = vtanh.bf16.pop %v2043
    %v2076 = vtanh.bf16.pop %v2044
    %v2077 = vtanh.bf16.pop %v2045
    %v2078 = vtanh.bf16.pop %v2046
    %v2079 = vtanh.bf16.pop %v2047
    %v2080 = vtanh.bf16.pop %v2048
    %v2081 = vtanh.bf16.pop %v2049
    %v2082 = vtanh.bf16.pop %v2050
    %v2083 = vtanh.bf16.pop %v2051
    %v2084 = vtanh.bf16.pop %v2052
    %v2085 = vtanh.bf16.pop %v2053
    %v2086 = vtanh.bf16.pop %v2054
    %v2087 = vtanh.bf16.pop %v2055
    %v2088 = vtanh.bf16.pop %v2056
    %v2089 = vtanh.bf16.pop %v2057
    %v2090 = vtanh.bf16.pop %v2058
    %v2091 = vtanh.bf16.pop %v2059
    %v2092 = vtanh.bf16.pop %v2060
    %v2093 = vtanh.bf16.pop %v2061
    %v2094 = vtanh.bf16.pop %v2062
    %v2095 = vtanh.bf16.pop %v2063
    %v2096 = vtanh.bf16.pop %v2064
    %v2097 = vtanh.bf16.pop %v2065
    %v2098 = vtanh.bf16.pop %v2066
    %v2099 = vtanh.bf16.pop %v2067
    %v2100 = vtanh.bf16.pop %v2068
    %v2101 = vtanh.bf16.pop %v2069
    %v2102 = vtanh.bf16.pop %v2070
    %v2103 = vtanh.bf16.pop %v2071
    %v2104 = vtanh.bf16.pop %v2072
    %v2105 = vtanh.bf16.pop %v2073
    %v2106 = vadd.bf16 %v2074, 1065369472
    %v2107 = vadd.bf16 %v2075, 1065369472
    %v2108 = vadd.bf16 %v2076, 1065369472
    %v2109 = vadd.bf16 %v2077, 1065369472
    %v2110 = vadd.bf16 %v2078, 1065369472
    %v2111 = vadd.bf16 %v2079, 1065369472
    %v2112 = vadd.bf16 %v2080, 1065369472
    %v2113 = vadd.bf16 %v2081, 1065369472
    %v2114 = vadd.bf16 %v2082, 1065369472
    %v2115 = vadd.bf16 %v2083, 1065369472
    %v2116 = vadd.bf16 %v2084, 1065369472
    %v2117 = vadd.bf16 %v2085, 1065369472
    %v2118 = vadd.bf16 %v2086, 1065369472
    %v2119 = vadd.bf16 %v2087, 1065369472
    %v2120 = vadd.bf16 %v2088, 1065369472
    %v2121 = vadd.bf16 %v2089, 1065369472
    %v2122 = vadd.bf16 %v2090, 1065369472
    %v2123 = vadd.bf16 %v2091, 1065369472
    %v2124 = vadd.bf16 %v2092, 1065369472
    %v2125 = vadd.bf16 %v2093, 1065369472
    %v2126 = vadd.bf16 %v2094, 1065369472
    %v2127 = vadd.bf16 %v2095, 1065369472
    %v2128 = vadd.bf16 %v2096, 1065369472
    %v2129 = vadd.bf16 %v2097, 1065369472
    %v2130 = vadd.bf16 %v2098, 1065369472
    %v2131 = vadd.bf16 %v2099, 1065369472
    %v2132 = vadd.bf16 %v2100, 1065369472
    %v2133 = vadd.bf16 %v2101, 1065369472
    %v2134 = vadd.bf16 %v2102, 1065369472
    %v2135 = vadd.bf16 %v2103, 1065369472
    %v2136 = vadd.bf16 %v2104, 1065369472
    %v2137 = vadd.bf16 %v2105, 1065369472
    %v2138 = vmul.bf16 %v1882, %v2106
    %v2139 = vmul.bf16 %v1883, %v2107
    %v2140 = vmul.bf16 %v1884, %v2108
    %v2141 = vmul.bf16 %v1885, %v2109
    %v2142 = vmul.bf16 %v1886, %v2110
    %v2143 = vmul.bf16 %v1887, %v2111
    %v2144 = vmul.bf16 %v1888, %v2112
    %v2145 = vmul.bf16 %v1889, %v2113
    %v2146 = vmul.bf16 %v1890, %v2114
    %v2147 = vmul.bf16 %v1891, %v2115
    %v2148 = vmul.bf16 %v1892, %v2116
    %v2149 = vmul.bf16 %v1893, %v2117
    %v2150 = vmul.bf16 %v1894, %v2118
    %v2151 = vmul.bf16 %v1895, %v2119
    %v2152 = vmul.bf16 %v1896, %v2120
    %v2153 = vmul.bf16 %v1897, %v2121
    %v2154 = vmul.bf16 %v1898, %v2122
    %v2155 = vmul.bf16 %v1899, %v2123
    %v2156 = vmul.bf16 %v1900, %v2124
    %v2157 = vmul.bf16 %v1901, %v2125
    %v2158 = vmul.bf16 %v1902, %v2126
    %v2159 = vmul.bf16 %v1903, %v2127
    %v2160 = vmul.bf16 %v1904, %v2128
    %v2161 = vmul.bf16 %v1905, %v2129
    %v2162 = vmul.bf16 %v1906, %v2130
    %v2163 = vmul.bf16 %v1907, %v2131
    %v2164 = vmul.bf16 %v1908, %v2132
    %v2165 = vmul.bf16 %v1909, %v2133
    %v2166 = vmul.bf16 %v1910, %v2134
    %v2167 = vmul.bf16 %v1911, %v2135
    %v2168 = vmul.bf16 %v1912, %v2136
    %v2169 = vmul.bf16 %v1913, %v2137
    %v2170 = vld [vmem:[%s7] sm:$0xf]
    %v2171 = vld [vmem:[%s7 + $0x4] sm:$0xf]
    %v2172 = vld [vmem:[%s7 + $0x8] sm:$0xf]
    %v2173 = vld [vmem:[%s7 + $0xc] sm:$0xf]
    %v2174 = vld [vmem:[%s7 + $0x10] sm:$0xf]
    %v2175 = vld [vmem:[%s7 + $0x14] sm:$0xf]
    %v2176 = vld [vmem:[%s7 + $0x18] sm:$0xf]
    %v2177 = vld [vmem:[%s7 + $0x1c] sm:$0xf]
    %v2178 = vld [vmem:[%s7 + $0x20] sm:$0xf]
    %v2179 = vld [vmem:[%s7 + $0x24] sm:$0xf]
    %v2180 = vld [vmem:[%s7 + $0x28] sm:$0xf]
    %v2181 = vld [vmem:[%s7 + $0x2c] sm:$0xf]
    %v2182 = vld [vmem:[%s7 + $0x30] sm:$0xf]
    %v2183 = vld [vmem:[%s7 + $0x34] sm:$0xf]
    %v2184 = vld [vmem:[%s7 + $0x38] sm:$0xf]
    %v2185 = vld [vmem:[%s7 + $0x3c] sm:$0xf]
    %v2186 = vld [vmem:[%s7 + $0x40] sm:$0xf]
    %v2187 = vld [vmem:[%s7 + $0x44] sm:$0xf]
    %v2188 = vld [vmem:[%s7 + $0x48] sm:$0xf]
    %v2189 = vld [vmem:[%s7 + $0x4c] sm:$0xf]
    %v2190 = vld [vmem:[%s7 + $0x50] sm:$0xf]
    %v2191 = vld [vmem:[%s7 + $0x54] sm:$0xf]
    %v2192 = vld [vmem:[%s7 + $0x58] sm:$0xf]
    %v2193 = vld [vmem:[%s7 + $0x5c] sm:$0xf]
    %v2194 = vld [vmem:[%s7 + $0x60] sm:$0xf]
    %v2195 = vld [vmem:[%s7 + $0x64] sm:$0xf]
    %v2196 = vld [vmem:[%s7 + $0x68] sm:$0xf]
    %v2197 = vld [vmem:[%s7 + $0x6c] sm:$0xf]
    %v2198 = vld [vmem:[%s7 + $0x70] sm:$0xf]
    %v2199 = vld [vmem:[%s7 + $0x74] sm:$0xf]
    %v2200 = vld [vmem:[%s7 + $0x78] sm:$0xf]
    %v2201 = vld [vmem:[%s7 + $0x7c] sm:$0xf]
    %v2202 = vld [vmem:[%s8] sm:$0x1]
    %v2204 = vlaneseq
    %v2205 = vshrl.u32 %v2204, 7
    %v2206 = vsub.s32 0, %v2205
    %v2207 = vrot.slane %v2202, %v2206
    %v2241 = vunpack.c.l.b16 %v2170
    %v2242 = vunpack.c.l.b16 %v2171
    %v2243 = vunpack.c.l.b16 %v2172
    %v2244 = vunpack.c.l.b16 %v2173
    %v2245 = vunpack.c.l.b16 %v2174
    %v2246 = vunpack.c.l.b16 %v2175
    %v2247 = vunpack.c.l.b16 %v2176
    %v2248 = vunpack.c.l.b16 %v2177
    %v2249 = vunpack.c.l.b16 %v2178
    %v2250 = vunpack.c.l.b16 %v2179
    %v2251 = vunpack.c.l.b16 %v2180
    %v2252 = vunpack.c.l.b16 %v2181
    %v2253 = vunpack.c.l.b16 %v2182
    %v2254 = vunpack.c.l.b16 %v2183
    %v2255 = vunpack.c.l.b16 %v2184
    %v2256 = vunpack.c.l.b16 %v2185
    %v2257 = vunpack.c.l.b16 %v2186
    %v2258 = vunpack.c.l.b16 %v2187
    %v2259 = vunpack.c.l.b16 %v2188
    %v2260 = vunpack.c.l.b16 %v2189
    %v2261 = vunpack.c.l.b16 %v2190
    %v2262 = vunpack.c.l.b16 %v2191
    %v2263 = vunpack.c.l.b16 %v2192
    %v2264 = vunpack.c.l.b16 %v2193
    %v2265 = vunpack.c.l.b16 %v2194
    %v2266 = vunpack.c.l.b16 %v2195
    %v2267 = vunpack.c.l.b16 %v2196
    %v2268 = vunpack.c.l.b16 %v2197
    %v2269 = vunpack.c.l.b16 %v2198
    %v2270 = vunpack.c.l.b16 %v2199
    %v2271 = vunpack.c.l.b16 %v2200
    %v2272 = vunpack.c.l.b16 %v2201
    %v2273 = vpack.c.b16 %v2242, %v2241
    %v2274 = vpack.c.b16 %v2244, %v2243
    %v2275 = vpack.c.b16 %v2246, %v2245
    %v2276 = vpack.c.b16 %v2248, %v2247
    %v2277 = vpack.c.b16 %v2250, %v2249
    %v2278 = vpack.c.b16 %v2252, %v2251
    %v2279 = vpack.c.b16 %v2254, %v2253
    %v2280 = vpack.c.b16 %v2256, %v2255
    %v2281 = vpack.c.b16 %v2258, %v2257
    %v2282 = vpack.c.b16 %v2260, %v2259
    %v2283 = vpack.c.b16 %v2262, %v2261
    %v2284 = vpack.c.b16 %v2264, %v2263
    %v2285 = vpack.c.b16 %v2266, %v2265
    %v2286 = vpack.c.b16 %v2268, %v2267
    %v2287 = vpack.c.b16 %v2270, %v2269
    %v2288 = vpack.c.b16 %v2272, %v2271
    %2305 = vmatprep.subr.bf16.mxu0 0
    %2306 = vmatpush1.bf16.msra.mxu0 %v2273
    %2307 = vmatprep.subr.bf16.mxu0 0
    %2308 = vmatpush1.bf16.msra.mxu0 %v2274
    %2309 = vmatprep.subr.bf16.mxu0 0
    %2310 = vmatpush1.bf16.msra.mxu0 %v2275
    %2311 = vmatprep.subr.bf16.mxu0 0
    %2312 = vmatpush1.bf16.msra.mxu0 %v2276
    %2313 = vmatprep.subr.bf16.mxu0 0
    %2314 = vmatpush1.bf16.msra.mxu0 %v2277
    %2315 = vmatprep.subr.bf16.mxu0 0
    %2316 = vmatpush1.bf16.msra.mxu0 %v2278
    %2317 = vmatprep.subr.bf16.mxu0 0
    %2318 = vmatpush1.bf16.msra.mxu0 %v2279
    %2319 = vmatprep.subr.bf16.mxu0 0
    %2320 = vmatpush1.bf16.msra.mxu0 %v2280
    %2321 = vmatprep.subr.bf16.mxu0 0
    %2322 = vmatpush1.bf16.msra.mxu0 %v2281
    %2323 = vmatprep.subr.bf16.mxu0 0
    %2324 = vmatpush1.bf16.msra.mxu0 %v2282
    %2325 = vmatprep.subr.bf16.mxu0 0
    %2326 = vmatpush1.bf16.msra.mxu0 %v2283
    %2327 = vmatprep.subr.bf16.mxu0 0
    %2328 = vmatpush1.bf16.msra.mxu0 %v2284
    %2329 = vmatprep.subr.bf16.mxu0 0
    %2330 = vmatpush1.bf16.msra.mxu0 %v2285
    %2331 = vmatprep.subr.bf16.mxu0 0
    %2332 = vmatpush1.bf16.msra.mxu0 %v2286
    %2333 = vmatprep.subr.bf16.mxu0 0
    %2334 = vmatpush1.bf16.msra.mxu0 %v2287
    %2335 = vmatprep.subr.bf16.mxu0 0
    %2336 = vmatpush1.bf16.msra.mxu0 %v2288
    %2337 = vmatprep.mubr.bf16.mxu0 %v2139
    %2338 = vmatmul.mubr.bf16.gmra.mrb[0].mxu0 %v2138
    %v2339 = vpop.f32.mrb[0].mxu0
    %v2340 = vadd.f32 %v2207, %v2339
    %v2341 = vpop.f32.mrb[0].mxu0
    %v2342 = vpop.f32.mrb[0].mxu0
    %v2343 = vadd.f32 %v2207, %v2342
    %v2344 = vpop.f32.mrb[0].mxu0
    %2345 = vmatprep.mubr.bf16.mxu0 %v2141
    %2346 = vmatmul.mubr.bf16.gmra.mrb[0].mxu0 %v2140
    %v2347 = vpop.f32.mrb[0].mxu0
    %v2348 = vadd.f32 %v2207, %v2347
    %v2349 = vpop.f32.mrb[0].mxu0
    %v2350 = vpop.f32.mrb[0].mxu0
    %v2351 = vadd.f32 %v2207, %v2350
    %v2352 = vpop.f32.mrb[0].mxu0
    %2353 = vmatprep.mubr.bf16.mxu0 %v2143
    %2354 = vmatmul.mubr.bf16.gmra.mrb[0].mxu0 %v2142
    %v2355 = vpop.f32.mrb[0].mxu0
    %v2356 = vadd.f32 %v2207, %v2355
    %v2357 = vpop.f32.mrb[0].mxu0
    %v2358 = vpop.f32.mrb[0].mxu0
    %v2359 = vadd.f32 %v2207, %v2358
    %v2360 = vpop.f32.mrb[0].mxu0
    %2361 = vmatprep.mubr.bf16.mxu0 %v2145
    %2362 = vmatmul.mubr.bf16.gmra.mrb[0].mxu0 %v2144
    %v2363 = vpop.f32.mrb[0].mxu0
    %v2364 = vadd.f32 %v2207, %v2363
    %v2365 = vpop.f32.mrb[0].mxu0
    %v2366 = vpop.f32.mrb[0].mxu0
    %v2367 = vadd.f32 %v2207, %v2366
    %v2368 = vpop.f32.mrb[0].mxu0
    %2369 = vmatprep.mubr.bf16.mxu0 %v2147
    %2370 = vmatmul.mubr.bf16.gmra.mrb[0].mxu0 %v2146
    %v2371 = vpop.f32.mrb[0].mxu0
    %v2372 = vadd.f32 %v2207, %v2371
    %v2373 = vpop.f32.mrb[0].mxu0
    %v2374 = vpop.f32.mrb[0].mxu0
    %v2375 = vadd.f32 %v2207, %v2374
    %v2376 = vpop.f32.mrb[0].mxu0
    %2377 = vmatprep.mubr.bf16.mxu0 %v2149
    %2378 = vmatmul.mubr.bf16.gmra.mrb[0].mxu0 %v2148
    %v2379 = vpop.f32.mrb[0].mxu0
    %v2380 = vadd.f32 %v2207, %v2379
    %v2381 = vpop.f32.mrb[0].mxu0
    %v2382 = vpop.f32.mrb[0].mxu0
    %v2383 = vadd.f32 %v2207, %v2382
    %v2384 = vpop.f32.mrb[0].mxu0
    %2385 = vmatprep.mubr.bf16.mxu0 %v2151
    %2386 = vmatmul.mubr.bf16.gmra.mrb[0].mxu0 %v2150
    %v2387 = vpop.f32.mrb[0].mxu0
    %v2388 = vadd.f32 %v2207, %v2387
    %v2389 = vpop.f32.mrb[0].mxu0
    %v2390 = vpop.f32.mrb[0].mxu0
    %v2391 = vadd.f32 %v2207, %v2390
    %v2392 = vpop.f32.mrb[0].mxu0
    %2393 = vmatprep.mubr.bf16.mxu0 %v2153
    %2394 = vmatmul.mubr.bf16.gmra.mrb[0].mxu0 %v2152
    %v2395 = vpop.f32.mrb[0].mxu0
    %v2396 = vadd.f32 %v2207, %v2395
    %v2397 = vpop.f32.mrb[0].mxu0
    %v2398 = vpop.f32.mrb[0].mxu0
    %v2399 = vadd.f32 %v2207, %v2398
    %v2400 = vpop.f32.mrb[0].mxu0
    %2401 = vmatprep.mubr.bf16.mxu0 %v2155
    %2402 = vmatmul.mubr.bf16.gmra.mrb[0].mxu0 %v2154
    %v2403 = vpop.f32.mrb[0].mxu0
    %v2404 = vadd.f32 %v2207, %v2403
    %v2405 = vpop.f32.mrb[0].mxu0
    %v2406 = vpop.f32.mrb[0].mxu0
    %v2407 = vadd.f32 %v2207, %v2406
    %v2408 = vpop.f32.mrb[0].mxu0
    %2409 = vmatprep.mubr.bf16.mxu0 %v2157
    %2410 = vmatmul.mubr.bf16.gmra.mrb[0].mxu0 %v2156
    %v2411 = vpop.f32.mrb[0].mxu0
    %v2412 = vadd.f32 %v2207, %v2411
    %v2413 = vpop.f32.mrb[0].mxu0
    %v2414 = vpop.f32.mrb[0].mxu0
    %v2415 = vadd.f32 %v2207, %v2414
    %v2416 = vpop.f32.mrb[0].mxu0
    %2417 = vmatprep.mubr.bf16.mxu0 %v2159
    %2418 = vmatmul.mubr.bf16.gmra.mrb[0].mxu0 %v2158
    %v2419 = vpop.f32.mrb[0].mxu0
    %v2420 = vadd.f32 %v2207, %v2419
    %v2421 = vpop.f32.mrb[0].mxu0
    %v2422 = vpop.f32.mrb[0].mxu0
    %v2423 = vadd.f32 %v2207, %v2422
    %v2424 = vpop.f32.mrb[0].mxu0
    %2425 = vmatprep.mubr.bf16.mxu0 %v2161
    %2426 = vmatmul.mubr.bf16.gmra.mrb[0].mxu0 %v2160
    %v2427 = vpop.f32.mrb[0].mxu0
    %v2428 = vadd.f32 %v2207, %v2427
    %v2429 = vpop.f32.mrb[0].mxu0
    %v2430 = vpop.f32.mrb[0].mxu0
    %v2431 = vadd.f32 %v2207, %v2430
    %v2432 = vpop.f32.mrb[0].mxu0
    %2433 = vmatprep.mubr.bf16.mxu0 %v2163
    %2434 = vmatmul.mubr.bf16.gmra.mrb[0].mxu0 %v2162
    %v2435 = vpop.f32.mrb[0].mxu0
    %v2436 = vadd.f32 %v2207, %v2435
    %v2437 = vpop.f32.mrb[0].mxu0
    %v2438 = vpop.f32.mrb[0].mxu0
    %v2439 = vadd.f32 %v2207, %v2438
    %v2440 = vpop.f32.mrb[0].mxu0
    %2441 = vmatprep.mubr.bf16.mxu0 %v2165
    %2442 = vmatmul.mubr.bf16.gmra.mrb[0].mxu0 %v2164
    %v2443 = vpop.f32.mrb[0].mxu0
    %v2444 = vadd.f32 %v2207, %v2443
    %v2445 = vpop.f32.mrb[0].mxu0
    %v2446 = vpop.f32.mrb[0].mxu0
    %v2447 = vadd.f32 %v2207, %v2446
    %v2448 = vpop.f32.mrb[0].mxu0
    %2449 = vmatprep.mubr.bf16.mxu0 %v2167
    %2450 = vmatmul.mubr.bf16.gmra.mrb[0].mxu0 %v2166
    %v2451 = vpop.f32.mrb[0].mxu0
    %v2452 = vadd.f32 %v2207, %v2451
    %v2453 = vpop.f32.mrb[0].mxu0
    %v2454 = vpop.f32.mrb[0].mxu0
    %v2455 = vadd.f32 %v2207, %v2454
    %v2456 = vpop.f32.mrb[0].mxu0
    %2457 = vmatprep.mubr.bf16.mxu0 %v2169
    %2458 = vmatmul.mubr.bf16.gmra.mrb[0].mxu0 %v2168
    %v2459 = vpop.f32.mrb[0].mxu0
    %v2460 = vadd.f32 %v2207, %v2459
    %v2461 = vpop.f32.mrb[0].mxu0
    %v2462 = vpop.f32.mrb[0].mxu0
    %v2463 = vadd.f32 %v2207, %v2462
    %v2464 = vpop.f32.mrb[0].mxu0
    %2465 = vdwg.mxu0
    %v2466 = vpack.c.bf16 %v2343, %v2340
    %v2467 = vpack.c.bf16 %v2351, %v2348
    %v2468 = vpack.c.bf16 %v2359, %v2356
    %v2469 = vpack.c.bf16 %v2367, %v2364
    %v2470 = vpack.c.bf16 %v2375, %v2372
    %v2471 = vpack.c.bf16 %v2383, %v2380
    %v2472 = vpack.c.bf16 %v2391, %v2388
    %v2473 = vpack.c.bf16 %v2399, %v2396
    %v2474 = vpack.c.bf16 %v2407, %v2404
    %v2475 = vpack.c.bf16 %v2415, %v2412
    %v2476 = vpack.c.bf16 %v2423, %v2420
    %v2477 = vpack.c.bf16 %v2431, %v2428
    %v2478 = vpack.c.bf16 %v2439, %v2436
    %v2479 = vpack.c.bf16 %v2447, %v2444
    %v2480 = vpack.c.bf16 %v2455, %v2452
    %v2481 = vpack.c.bf16 %v2463, %v2460
    %v2498 = vunpack.c.l.b16 %v2466
    %v2499 = vunpack.c.h.b16 %v2466
    %v2500 = vunpack.c.l.b16 %v2467
    %v2501 = vunpack.c.h.b16 %v2467
    %v2502 = vunpack.c.l.b16 %v2468
    %v2503 = vunpack.c.h.b16 %v2468
    %v2504 = vunpack.c.l.b16 %v2469
    %v2505 = vunpack.c.h.b16 %v2469
    %v2506 = vunpack.c.l.b16 %v2470
    %v2507 = vunpack.c.h.b16 %v2470
    %v2508 = vunpack.c.l.b16 %v2471
    %v2509 = vunpack.c.h.b16 %v2471
    %v2510 = vunpack.c.l.b16 %v2472
    %v2511 = vunpack.c.h.b16 %v2472
    %v2512 = vunpack.c.l.b16 %v2473
    %v2513 = vunpack.c.h.b16 %v2473
    %v2514 = vunpack.c.l.b16 %v2474
    %v2515 = vunpack.c.h.b16 %v2474
    %v2516 = vunpack.c.l.b16 %v2475
    %v2517 = vunpack.c.h.b16 %v2475
    %v2518 = vunpack.c.l.b16 %v2476
    %v2519 = vunpack.c.h.b16 %v2476
    %v2520 = vunpack.c.l.b16 %v2477
    %v2521 = vunpack.c.h.b16 %v2477
    %v2522 = vunpack.c.l.b16 %v2478
    %v2523 = vunpack.c.h.b16 %v2478
    %v2524 = vunpack.c.l.b16 %v2479
    %v2525 = vunpack.c.h.b16 %v2479
    %v2526 = vunpack.c.l.b16 %v2480
    %v2527 = vunpack.c.h.b16 %v2480
    %v2528 = vunpack.c.l.b16 %v2481
    %v2529 = vunpack.c.h.b16 %v2481
    %v2530 = vpack.c.b16 %v2498, %v2498
    %v2531 = vpack.c.b16 %v2499, %v2499
    %v2532 = vpack.c.b16 %v2500, %v2500
    %v2533 = vpack.c.b16 %v2501, %v2501
    %v2534 = vpack.c.b16 %v2502, %v2502
    %v2535 = vpack.c.b16 %v2503, %v2503
    %v2536 = vpack.c.b16 %v2504, %v2504
    %v2537 = vpack.c.b16 %v2505, %v2505
    %v2538 = vpack.c.b16 %v2506, %v2506
    %v2539 = vpack.c.b16 %v2507, %v2507
    %v2540 = vpack.c.b16 %v2508, %v2508
    %v2541 = vpack.c.b16 %v2509, %v2509
    %v2542 = vpack.c.b16 %v2510, %v2510
    %v2543 = vpack.c.b16 %v2511, %v2511
    %v2544 = vpack.c.b16 %v2512, %v2512
    %v2545 = vpack.c.b16 %v2513, %v2513
    %v2546 = vpack.c.b16 %v2514, %v2514
    %v2547 = vpack.c.b16 %v2515, %v2515
    %v2548 = vpack.c.b16 %v2516, %v2516
    %v2549 = vpack.c.b16 %v2517, %v2517
    %v2550 = vpack.c.b16 %v2518, %v2518
    %v2551 = vpack.c.b16 %v2519, %v2519
    %v2552 = vpack.c.b16 %v2520, %v2520
    %v2553 = vpack.c.b16 %v2521, %v2521
    %v2554 = vpack.c.b16 %v2522, %v2522
    %v2555 = vpack.c.b16 %v2523, %v2523
    %v2556 = vpack.c.b16 %v2524, %v2524
    %v2557 = vpack.c.b16 %v2525, %v2525
    %v2558 = vpack.c.b16 %v2526, %v2526
    %v2559 = vpack.c.b16 %v2527, %v2527
    %v2560 = vpack.c.b16 %v2528, %v2528
    %v2561 = vpack.c.b16 %v2529, %v2529
    %2594 = vst [vmem:[#allocation7] sm:$0xf] %v2530
    %2595 = vst [vmem:[#allocation7 + $0x4] sm:$0xf] %v2531
    %2596 = vst [vmem:[#allocation7 + $0x8] sm:$0xf] %v2532
    %2597 = vst [vmem:[#allocation7 + $0xc] sm:$0xf] %v2533
    %2598 = vst [vmem:[#allocation7 + $0x10] sm:$0xf] %v2534
    %2599 = vst [vmem:[#allocation7 + $0x14] sm:$0xf] %v2535
    %2600 = vst [vmem:[#allocation7 + $0x18] sm:$0xf] %v2536
    %2601 = vst [vmem:[#allocation7 + $0x1c] sm:$0xf] %v2537
    %2602 = vst [vmem:[#allocation7 + $0x20] sm:$0xf] %v2538
    %2603 = vst [vmem:[#allocation7 + $0x24] sm:$0xf] %v2539
    %2604 = vst [vmem:[#allocation7 + $0x28] sm:$0xf] %v2540
    %2605 = vst [vmem:[#allocation7 + $0x2c] sm:$0xf] %v2541
    %2606 = vst [vmem:[#allocation7 + $0x30] sm:$0xf] %v2542
    %2607 = vst [vmem:[#allocation7 + $0x34] sm:$0xf] %v2543
    %2608 = vst [vmem:[#allocation7 + $0x38] sm:$0xf] %v2544
    %2609 = vst [vmem:[#allocation7 + $0x3c] sm:$0xf] %v2545
    %2610 = vst [vmem:[#allocation7 + $0x40] sm:$0xf] %v2546
    %2611 = vst [vmem:[#allocation7 + $0x44] sm:$0xf] %v2547
    %2612 = vst [vmem:[#allocation7 + $0x48] sm:$0xf] %v2548
    %2613 = vst [vmem:[#allocation7 + $0x4c] sm:$0xf] %v2549
    %2614 = vst [vmem:[#allocation7 + $0x50] sm:$0xf] %v2550
    %2615 = vst [vmem:[#allocation7 + $0x54] sm:$0xf] %v2551
    %2616 = vst [vmem:[#allocation7 + $0x58] sm:$0xf] %v2552
    %2617 = vst [vmem:[#allocation7 + $0x5c] sm:$0xf] %v2553
    %2618 = vst [vmem:[#allocation7 + $0x60] sm:$0xf] %v2554
    %2619 = vst [vmem:[#allocation7 + $0x64] sm:$0xf] %v2555
    %2620 = vst [vmem:[#allocation7 + $0x68] sm:$0xf] %v2556
    %2621 = vst [vmem:[#allocation7 + $0x6c] sm:$0xf] %v2557
    %2622 = vst [vmem:[#allocation7 + $0x70] sm:$0xf] %v2558
    %2623 = vst [vmem:[#allocation7 + $0x74] sm:$0xf] %v2559
    %2624 = vst [vmem:[#allocation7 + $0x78] sm:$0xf] %v2560
    %2625 = vst [vmem:[#allocation7 + $0x7c] sm:$0xf] %v2561
    // Predicated region
    $region46: #{tpu_custom_call.1} parent=1 // pred_check
      _
    $region47: #{tpu_custom_call.1} parent=1 // pred_check_branch
      %2627 = sbr.rel (0) target = $region49
    $region48: #{tpu_custom_call.1} parent=1 // pred_region
      %s2629 = ssub.s32 2048, 2048
      %2630 = vsyncadd [#allocation4], %s2629
      %s2631 = sshll.u32 [#allocation7], 4
      %s2632 = int_to_ptr.vmem [resolvable:$true] %s2631
      %2637 = dma.vmem_to_hbm [thread:$0]  %s2632, 2048, %s9, [#allocation4], 64, 64, 4
    $region49: #{tpu_custom_call.1} parent=1 // pred_fallthru
      _
    // Predicated region
    $region50: #{tpu_custom_call.1} parent=1 // pred_check
      _
    $region51: #{tpu_custom_call.1} parent=1 // pred_check_branch
      %2639 = sbr.rel (0) target = $region53
    $region52: #{tpu_custom_call.1} parent=1 // pred_region
      %2640 = dma.done [#allocation4], 2048
    $region53: #{tpu_custom_call.1} parent=1 // pred_fallthru
      _
    %2641 = vsyncpa [#allocation3], 1
    %2642 = vsyncpa [#allocation6], 1
    %2643 = vsyncpa [#allocation4], 1

</llo_original>
